<compile_context>
chip_gen: v5e
topology: v5e:2x2
jax: 0.10.0
libtpu: 0.0.40
codegen_flags: <defaults>
</compile_context>

<pallas_src>
import functools

import jax
import jax.numpy as jnp
from jax import lax
from jax.experimental import pallas as pl
from jax.experimental.pallas import tpu as pltpu


def head_edge_kernel(pts_ref, hm_ref, mask_ref, pmask_ref,
                     w1_ref, b1_ref, w2_ref, b2_ref,
                     w3_ref, b3_ref, w4_ref, b4_ref,
                     pred_ref, partial_ref,
                     *, batch_block, sp, bf16_intermediates):
    B = batch_block
    M = B * sp * sp
    H1 = w1_ref.shape[1]

    # ---- classify MLP: 256 -> 128 -> 64 -> 32 -> 1 -------------------------
    # Layer 1, factored: (p_i + p_j) @ W1 + b1 == A_i + A_j, with
    # A = p @ W1 + 0.5*b1 (bias folded before the pairwise broadcast).
    pts = pts_ref[...]                                          # (B*sp, C) bf16
    A = jnp.dot(pts, w1_ref[...],
                preferred_element_type=jnp.float32)             # (B*sp, H1) f32
    A = A + 0.5 * b1_ref[...]                                   # bias fold
    if bf16_intermediates:
        A = A.astype(jnp.bfloat16)                              # v6e/v7x: native bf16 VPU
    A = A.reshape(B, sp, H1)
    s = A[:, :, None, :] + A[:, None, :, :]                     # (B, sp, sp, H1)
    h = jnp.maximum(s.reshape(M, H1), 0)                        # ReLU, largest tensor
    h = h.astype(jnp.bfloat16)                                  # no-op if already bf16

    h = jnp.maximum(
        jnp.dot(h, w2_ref[...],
                preferred_element_type=jnp.float32) + b2_ref[...], 0.0)   # (M, 64) f32
    h = jnp.maximum(
        jnp.dot(h.astype(jnp.bfloat16), w3_ref[...],
                preferred_element_type=jnp.float32) + b3_ref[...], 0.0)   # (M, 32) f32

    # Final 32 -> 1 layer: contract the last dims of (1,32) and (M,32) so the
    # logits come out lane-dense (1, M) with no transpose of h and no f32 MXU.
    logits = lax.dot_general(
        w4_ref[...], h.astype(jnp.bfloat16),
        dimension_numbers=(((1,), (1,)), ((), ())),
        preferred_element_type=jnp.float32) + b4_ref[...]       # (1, M) f32

    pred_ref[0] = logits.astype(pred_ref.dtype)

    # ---- BCEWithLogitsLoss (reduction='none') * mask * positiveMask --------
    # Numerically stable: max(x, 0) - x*y + log1p(exp(-|x|)); all f32.
    y = hm_ref[0]
    bce = (jnp.maximum(logits, 0.0) - logits * y
           + jnp.log1p(jnp.exp(-jnp.abs(logits))))
    masked = bce * mask_ref[0] * pmask_ref[0]

    num = jnp.sum(masked)
    den = jnp.sum(pmask_ref[0])

    # Pack both scalar partials into one lane-dense (1, 128) block:
    # lane 0 = numerator, lane 1 = denominator.
    lane = lax.broadcasted_iota(jnp.int32, (1, 128), 1)
    partial_ref[0] = (jnp.where(lane == 0, num, 0.0)
                      + jnp.where(lane == 1, den, 0.0))


def head_edge_forward(points, heatmap, mask, positive_mask, params,
                      batch_block=16, bf16_intermediates=True):
    """points: (N, C, sp) NCW like PyTorch; heatmap/mask/positive_mask: (N, sp, sp).

    Returns (predHeatMap (N, sp, sp) f32, loss scalar f32).
    Set bf16_intermediates=False on v5e (no bf16 VPU)."""
    w1, b1, w2, b2, w3, b3, w4, b4 = params
    N, C, sp = points.shape

    # ---- pick the per-grid-step batch B ------------------------------------
    B = batch_block
    if N >= 2:
        B = min(B, -(-N // 2))          # keep >= 2 grid blocks (both v7x TCs busy)
    B = max(4, ((B + 3) // 4) * 4)      # B mult of 4: B*sp mult of 32, M mult of 256 (sp=8)
    num_blocks = -(-N // B)
    N_pad = num_blocks * B
    pad = N_pad - N
    M = B * sp * sp

    # points: NCW -> NWC -> (N_pad*sp, C) bf16 for the MXU.
    # XLA fuses the transpose + reshape + convert into a single copy fusion.
    pts = jnp.transpose(points, (0, 2, 1))                      # (N, sp, C)
    if pad:
        pts = jnp.pad(pts, ((0, pad), (0, 0), (0, 0)))
    pts2d = pts.reshape(N_pad * sp, C).astype(jnp.bfloat16)

    def flat(x):                                                # -> (num_blocks, 1, M)
        x = x.reshape(N, sp * sp).astype(jnp.float32)
        if pad:
            x = jnp.pad(x, ((0, pad), (0, 0)))                  # padded rows: masks = 0
        return x.reshape(num_blocks, 1, M)

    hm_f, mask_f, pmask_f = flat(heatmap), flat(mask), flat(positive_mask)

    # Weights: bf16 for all MXU operands; biases stay f32 (added to f32 acc).
    w1b, w2b, w3b = (w.astype(jnp.bfloat16) for w in (w1, w2, w3))
    w4_row = jnp.transpose(w4).astype(jnp.bfloat16)             # (1, 32)
    b1f, b2f, b3f, b4f = (b.astype(jnp.float32).reshape(1, -1)
                          for b in (b1, b2, b3, b4))

    # Grid-invariant operands: constant index_map -> pipeline skips re-DMA.
    full2d = lambda a: pl.BlockSpec(a.shape, lambda n: (0, 0))

    grid_spec = pltpu.PrefetchScalarGridSpec(
        num_scalar_prefetch=0,
        grid=(num_blocks,),
        in_specs=[
            pl.BlockSpec((B * sp, C), lambda n: (n, 0)),        # points (flattened)
            pl.BlockSpec((1, 1, M), lambda n: (n, 0, 0)),       # heatMap (flat)
            pl.BlockSpec((1, 1, M), lambda n: (n, 0, 0)),       # mask (flat)
            pl.BlockSpec((1, 1, M), lambda n: (n, 0, 0)),       # positiveMask (flat)
            full2d(w1b), full2d(b1f),
            full2d(w2b), full2d(b2f),
            full2d(w3b), full2d(b3f),
            full2d(w4_row), full2d(b4f),
        ],
        out_specs=[
            pl.BlockSpec((1, 1, M), lambda n: (n, 0, 0)),       # predHeatMap (flat)
            pl.BlockSpec((1, 1, 128), lambda n: (n, 0, 0)),     # packed (num, den) partials
        ],
    )

    kernel = functools.partial(head_edge_kernel, batch_block=B, sp=sp,
                               bf16_intermediates=bf16_intermediates)
    pred_flat, partials = pl.pallas_call(
        kernel,
        grid_spec=grid_spec,
        out_shape=(
            jax.ShapeDtypeStruct((num_blocks, 1, M), jnp.float32),
            jax.ShapeDtypeStruct((num_blocks, 1, 128), jnp.float32),
        ),
        compiler_params=pltpu.CompilerParams(
            dimension_semantics=("parallel",)),   # independent blocks (v7x: 2 TCs)
    )(pts2d, hm_f, mask_f, pmask_f,
      w1b, b1f, w2b, b2f, w3b, b3f, w4_row, b4f)

    pred = pred_flat.reshape(N_pad, sp, sp)[:N]
    # Same semantics as PyTorch: sum(BCE*mask*positiveMask) / sum(positiveMask).
    # (No epsilon guard: matches the reference, which also divides by the raw sum.)
    loss = jnp.sum(partials[:, 0, 0]) / jnp.sum(partials[:, 0, 1])
    return pred, loss


def head_edge_reference(points, heatmap, mask, positive_mask, params):
    """Pure-JAX f32 reference mirroring the PyTorch module."""
    w1, b1, w2, b2, w3, b3, w4, b4 = params
    p = jnp.transpose(points, (0, 2, 1))                        # (N, sp, C)
    X = p[:, :, None, :] + p[:, None, :, :]                     # (N, sp, sp, C)
    h = jnp.maximum(X @ w1 + b1, 0.0)
    h = jnp.maximum(h @ w2 + b2, 0.0)
    h = jnp.maximum(h @ w3 + b3, 0.0)
    logits = (h @ w4 + b4)[..., 0]                              # (N, sp, sp)
    bce = (jnp.maximum(logits, 0.0) - logits * heatmap
           + jnp.log1p(jnp.exp(-jnp.abs(logits))))
    loss = jnp.sum(bce * mask * positive_mask) / jnp.sum(positive_mask)
    return logits, loss


def init_classify_params(key, mlp=(256, 128, 64, 32, 1)):
    params = []
    for i in range(len(mlp) - 1):
        key, kw, kb = jax.random.split(key, 3)
        fan_in = mlp[i]
        scale = 1.0 / jnp.sqrt(jnp.float32(fan_in))
        w = jax.random.uniform(kw, (mlp[i], mlp[i + 1]), jnp.float32, -scale, scale)
        b = jax.random.uniform(kb, (1, mlp[i + 1]), jnp.float32, -scale, scale)
        params += [w, b]
    return tuple(params)


if __name__ == "__main__":
    key = jax.random.PRNGKey(0)
    k_p, k_h, k_m, k_pm, k_w = jax.random.split(key, 5)

    N, C, sp = 32, 256, 8                           # C = mlp[0] = 256
    points = jax.random.normal(k_p, (N, C, sp), jnp.float32)
    heatmap = jax.random.uniform(k_h, (N, sp, sp), jnp.float32)          # targets in [0,1]
    mask = (jax.random.uniform(k_m, (N, sp, sp)) > 0.2).astype(jnp.float32)
    positive_mask = (jax.random.uniform(k_pm, (N, sp, sp)) > 0.5).astype(jnp.float32)
    positive_mask = positive_mask.at[0, 0, 0].set(1.0)   # guarantee nonzero denominator

    params = init_classify_params(k_w)

    fwd = jax.jit(functools.partial(head_edge_forward, params=params,
                                    batch_block=16))
    pred, loss = fwd(points, heatmap, mask, positive_mask)
    jax.block_until_ready((pred, loss))

    assert pred.shape == (N, sp, sp)
    assert loss.shape == ()
    assert bool(jnp.isfinite(loss))

    # Loose correctness check vs. f32 reference (bf16 MXU path => ~1e-2 error).
    pred_ref, loss_ref = jax.jit(functools.partial(head_edge_reference,
                                                   params=params))(
        points, heatmap, mask, positive_mask)
    jax.block_until_ready((pred_ref, loss_ref))
    assert float(jnp.max(jnp.abs(pred - pred_ref))) < 0.35
    assert float(jnp.abs(loss - loss_ref)) < 0.05 * max(1.0, float(jnp.abs(loss_ref)))

    print("KERNEL_OK")
</pallas_src>

<mosaic_0001>
module attributes {stable_mosaic.version = 11 : i64} {
  func.func @head_edge_kernel(%arg0: i32, %arg1: memref<128x256xbf16, #tpu.memory_space<vmem>>, %arg2: memref<1x1x1024xf32, #tpu.memory_space<vmem>>, %arg3: memref<1x1x1024xf32, #tpu.memory_space<vmem>>, %arg4: memref<1x1x1024xf32, #tpu.memory_space<vmem>>, %arg5: memref<256x128xbf16, #tpu.memory_space<vmem>>, %arg6: memref<1x128xf32, #tpu.memory_space<vmem>>, %arg7: memref<128x64xbf16, #tpu.memory_space<vmem>>, %arg8: memref<1x64xf32, #tpu.memory_space<vmem>>, %arg9: memref<64x32xbf16, #tpu.memory_space<vmem>>, %arg10: memref<1x32xf32, #tpu.memory_space<vmem>>, %arg11: memref<1x32xbf16, #tpu.memory_space<vmem>>, %arg12: memref<1x1xf32, #tpu.memory_space<vmem>>, %arg13: memref<1x1x1024xf32, #tpu.memory_space<vmem>>, %arg14: memref<1x1x128xf32, #tpu.memory_space<vmem>>) attributes {dimension_semantics = [#tpu.dimension_semantics<parallel>], iteration_bounds = array<i64: 2>, scalar_prefetch = 0 : i64, scratch_operands = 0 : i64, tpu.core_type = #tpu.core_type<tc>, window_params = [{transform_indices = @transform_0, window_bounds = array<i64: 128, 256>}, {transform_indices = @transform_1, window_bounds = array<i64: 1, 1, 1024>}, {transform_indices = @transform_2, window_bounds = array<i64: 1, 1, 1024>}, {transform_indices = @transform_3, window_bounds = array<i64: 1, 1, 1024>}, {pipeline_mode = #tpu.pipeline_mode<synchronous>, transform_indices = @transform_4, window_bounds = array<i64: 256, 128>}, {pipeline_mode = #tpu.pipeline_mode<synchronous>, transform_indices = @transform_5, window_bounds = array<i64: 1, 128>}, {pipeline_mode = #tpu.pipeline_mode<synchronous>, transform_indices = @transform_6, window_bounds = array<i64: 128, 64>}, {pipeline_mode = #tpu.pipeline_mode<synchronous>, transform_indices = @transform_7, window_bounds = array<i64: 1, 64>}, {pipeline_mode = #tpu.pipeline_mode<synchronous>, transform_indices = @transform_8, window_bounds = array<i64: 64, 32>}, {pipeline_mode = #tpu.pipeline_mode<synchronous>, transform_indices = @transform_9, window_bounds = array<i64: 1, 32>}, {pipeline_mode = #tpu.pipeline_mode<synchronous>, transform_indices = @transform_10, window_bounds = array<i64: 1, 32>}, {pipeline_mode = #tpu.pipeline_mode<synchronous>, transform_indices = @transform_11, window_bounds = array<i64: 1, 1>}, {transform_indices = @transform_12, window_bounds = array<i64: 1, 1, 1024>}, {transform_indices = @transform_13, window_bounds = array<i64: 1, 1, 128>}]} {
    %c0 = arith.constant 0 : index
    %c0_0 = arith.constant 0 : index
    %0 = vector.load %arg1[%c0, %c0_0] : memref<128x256xbf16, #tpu.memory_space<vmem>>, vector<128x256xbf16>
    %c0_1 = arith.constant 0 : index
    %c0_2 = arith.constant 0 : index
    %1 = vector.load %arg5[%c0_1, %c0_2] : memref<256x128xbf16, #tpu.memory_space<vmem>>, vector<256x128xbf16>
    %cst = arith.constant dense<0.000000e+00> : vector<128x128xf32>
    %2 = tpu.matmul %0, %1, %cst {dimension_numbers = #tpu.dot_dimension_numbers<[1], [0], [0], [1], [0, 0, 1, 1], [], []>} : vector<128x256xbf16>, vector<256x128xbf16>, vector<128x128xf32> -> vector<128x128xf32>
    %c0_3 = arith.constant 0 : index
    %c0_4 = arith.constant 0 : index
    %3 = vector.load %arg6[%c0_3, %c0_4] : memref<1x128xf32, #tpu.memory_space<vmem>>, vector<1x128xf32>
    %cst_5 = arith.constant 5.000000e-01 : f32
    %4 = vector.broadcast %cst_5 : f32 to vector<1x128xf32>
    %5 = arith.mulf %4, %3 : vector<1x128xf32>
    %6 = vector.broadcast %5 : vector<1x128xf32> to vector<128x128xf32>
    %7 = arith.addf %2, %6 : vector<128x128xf32>
    %8 = arith.truncf %7 : vector<128x128xf32> to vector<128x128xbf16>
    %9 = vector.shape_cast %8 : vector<128x128xbf16> to vector<16x8x128xbf16>
    %10 = vector.shape_cast %9 : vector<16x8x128xbf16> to vector<16x8x1x128xbf16>
    %11 = vector.shape_cast %9 : vector<16x8x128xbf16> to vector<16x1x8x128xbf16>
    %12 = vector.broadcast %10 : vector<16x8x1x128xbf16> to vector<16x8x8x128xbf16>
    %13 = vector.broadcast %11 : vector<16x1x8x128xbf16> to vector<16x8x8x128xbf16>
    %14 = arith.addf %12, %13 : vector<16x8x8x128xbf16>
    %15 = vector.shape_cast %14 : vector<16x8x8x128xbf16> to vector<1024x128xbf16>
    %cst_6 = arith.constant 0.000000e+00 : bf16
    %16 = vector.broadcast %cst_6 : bf16 to vector<1024x128xbf16>
    %17 = arith.maximumf %15, %16 : vector<1024x128xbf16>
    %c0_7 = arith.constant 0 : index
    %c0_8 = arith.constant 0 : index
    %18 = vector.load %arg7[%c0_7, %c0_8] : memref<128x64xbf16, #tpu.memory_space<vmem>>, vector<128x64xbf16>
    %cst_9 = arith.constant dense<0.000000e+00> : vector<1024x64xf32>
    %19 = tpu.matmul %17, %18, %cst_9 {dimension_numbers = #tpu.dot_dimension_numbers<[1], [0], [0], [1], [0, 0, 1, 1], [], []>} : vector<1024x128xbf16>, vector<128x64xbf16>, vector<1024x64xf32> -> vector<1024x64xf32>
    %c0_10 = arith.constant 0 : index
    %c0_11 = arith.constant 0 : index
    %20 = vector.load %arg8[%c0_10, %c0_11] : memref<1x64xf32, #tpu.memory_space<vmem>>, vector<1x64xf32>
    %21 = vector.broadcast %20 : vector<1x64xf32> to vector<1024x64xf32>
    %22 = arith.addf %19, %21 : vector<1024x64xf32>
    %cst_12 = arith.constant 0.000000e+00 : f32
    %23 = vector.broadcast %cst_12 : f32 to vector<1024x64xf32>
    %24 = arith.maximumf %22, %23 : vector<1024x64xf32>
    %25 = arith.truncf %24 : vector<1024x64xf32> to vector<1024x64xbf16>
    %c0_13 = arith.constant 0 : index
    %c0_14 = arith.constant 0 : index
    %26 = vector.load %arg9[%c0_13, %c0_14] : memref<64x32xbf16, #tpu.memory_space<vmem>>, vector<64x32xbf16>
    %cst_15 = arith.constant dense<0.000000e+00> : vector<1024x32xf32>
    %27 = tpu.matmul %25, %26, %cst_15 {dimension_numbers = #tpu.dot_dimension_numbers<[1], [0], [0], [1], [0, 0, 1, 1], [], []>} : vector<1024x64xbf16>, vector<64x32xbf16>, vector<1024x32xf32> -> vector<1024x32xf32>
    %c0_16 = arith.constant 0 : index
    %c0_17 = arith.constant 0 : index
    %28 = vector.load %arg10[%c0_16, %c0_17] : memref<1x32xf32, #tpu.memory_space<vmem>>, vector<1x32xf32>
    %29 = vector.broadcast %28 : vector<1x32xf32> to vector<1024x32xf32>
    %30 = arith.addf %27, %29 : vector<1024x32xf32>
    %cst_18 = arith.constant 0.000000e+00 : f32
    %31 = vector.broadcast %cst_18 : f32 to vector<1024x32xf32>
    %32 = arith.maximumf %30, %31 : vector<1024x32xf32>
    %c0_19 = arith.constant 0 : index
    %c0_20 = arith.constant 0 : index
    %33 = vector.load %arg11[%c0_19, %c0_20] : memref<1x32xbf16, #tpu.memory_space<vmem>>, vector<1x32xbf16>
    %34 = arith.truncf %32 : vector<1024x32xf32> to vector<1024x32xbf16>
    %cst_21 = arith.constant dense<0.000000e+00> : vector<1x1024xf32>
    %35 = tpu.matmul %33, %34, %cst_21 {dimension_numbers = #tpu.dot_dimension_numbers<[1], [1], [0], [0], [0, 0, 1, 0], [], []>} : vector<1x32xbf16>, vector<1024x32xbf16>, vector<1x1024xf32> -> vector<1x1024xf32>
    %c0_22 = arith.constant 0 : index
    %c0_23 = arith.constant 0 : index
    %36 = vector.load %arg12[%c0_22, %c0_23] : memref<1x1xf32, #tpu.memory_space<vmem>>, vector<1x1xf32>
    %37 = vector.broadcast %36 : vector<1x1xf32> to vector<1x1024xf32>
    %38 = arith.addf %35, %37 : vector<1x1024xf32>
    %c0_24 = arith.constant 0 : index
    %c0_25 = arith.constant 0 : index
    %c0_26 = arith.constant 0 : index
    %39 = vector.load %arg13[%c0_24, %c0_25, %c0_26] : memref<1x1x1024xf32, #tpu.memory_space<vmem>>, vector<1x1x1024xf32>
    %40 = vector.shape_cast %39 : vector<1x1x1024xf32> to vector<1x1024xf32>
    %41 = vector.shape_cast %38 : vector<1x1024xf32> to vector<1x1x1024xf32>
    tpu.vector_store %arg13[%c0_24, %c0_25, %c0_26], %41 {strides = array<i32>} : memref<1x1x1024xf32, #tpu.memory_space<vmem>>, vector<1x1x1024xf32>,
    %c0_27 = arith.constant 0 : index
    %c0_28 = arith.constant 0 : index
    %c0_29 = arith.constant 0 : index
    %42 = vector.load %arg2[%c0_27, %c0_28, %c0_29] : memref<1x1x1024xf32, #tpu.memory_space<vmem>>, vector<1x1x1024xf32>
    %43 = vector.shape_cast %42 : vector<1x1x1024xf32> to vector<1x1024xf32>
    %cst_30 = arith.constant 0.000000e+00 : f32
    %44 = vector.broadcast %cst_30 : f32 to vector<1x1024xf32>
    %45 = arith.maximumf %38, %44 : vector<1x1024xf32>
    %46 = arith.mulf %38, %43 : vector<1x1024xf32>
    %47 = arith.subf %45, %46 : vector<1x1024xf32>
    %48 = math.absf %38 : vector<1x1024xf32>
    %cst_31 = arith.constant 0.000000e+00 : f32
    %49 = vector.broadcast %cst_31 : f32 to vector<1x1024xf32>
    %50 = arith.subf %49, %48 : vector<1x1024xf32>
    %51 = math.exp %50 : vector<1x1024xf32>
    %52 = math.log1p %51 : vector<1x1024xf32>
    %53 = arith.addf %47, %52 : vector<1x1024xf32>
    %c0_32 = arith.constant 0 : index
    %c0_33 = arith.constant 0 : index
    %c0_34 = arith.constant 0 : index
    %54 = vector.load %arg3[%c0_32, %c0_33, %c0_34] : memref<1x1x1024xf32, #tpu.memory_space<vmem>>, vector<1x1x1024xf32>
    %55 = vector.shape_cast %54 : vector<1x1x1024xf32> to vector<1x1024xf32>
    %56 = arith.mulf %53, %55 : vector<1x1024xf32>
    %c0_35 = arith.constant 0 : index
    %c0_36 = arith.constant 0 : index
    %c0_37 = arith.constant 0 : index
    %57 = vector.load %arg4[%c0_35, %c0_36, %c0_37] : memref<1x1x1024xf32, #tpu.memory_space<vmem>>, vector<1x1x1024xf32>
    %58 = vector.shape_cast %57 : vector<1x1x1024xf32> to vector<1x1024xf32>
    %59 = arith.mulf %56, %58 : vector<1x1024xf32>
    %60 = vector.shape_cast %59 : vector<1x1024xf32> to vector<1x1x1024xf32>
    %cst_38 = arith.constant dense<0.000000e+00> : vector<1xf32>
    %61 = vector.multi_reduction <add>, %60, %cst_38 [1, 2] : vector<1x1x1024xf32> to vector<1xf32>
    %62 = vector.shape_cast %61 : vector<1xf32> to vector<1x1x1xf32>
    %63 = vector.extract %62[0, 0, 0] : f32 from vector<1x1x1xf32>
    %c0_39 = arith.constant 0 : index
    %c0_40 = arith.constant 0 : index
    %c0_41 = arith.constant 0 : index
    %64 = vector.load %arg4[%c0_39, %c0_40, %c0_41] : memref<1x1x1024xf32, #tpu.memory_space<vmem>>, vector<1x1x1024xf32>
    %65 = vector.shape_cast %64 : vector<1x1x1024xf32> to vector<1x1024xf32>
    %66 = vector.shape_cast %65 : vector<1x1024xf32> to vector<1x1x1024xf32>
    %cst_42 = arith.constant dense<0.000000e+00> : vector<1xf32>
    %67 = vector.multi_reduction <add>, %66, %cst_42 [1, 2] : vector<1x1x1024xf32> to vector<1xf32>
    %68 = vector.shape_cast %67 : vector<1xf32> to vector<1x1x1xf32>
    %69 = vector.extract %68[0, 0, 0] : f32 from vector<1x1x1xf32>
    %70 = tpu.iota {dimensions = array<i32: 1>} : vector<1x128xi32>
    %c0_i32 = arith.constant 0 : i32
    %71 = vector.broadcast %c0_i32 : i32 to vector<1x128xi32>
    %72 = arith.cmpi eq, %70, %71 : vector<1x128xi32>
    %cst_43 = arith.constant 0.000000e+00 : f32
    %73 = vector.broadcast %63 : f32 to vector<1x128xf32>
    %74 = vector.broadcast %cst_43 : f32 to vector<1x128xf32>
    %75 = arith.select %72, %73, %74 : vector<1x128xi1>, vector<1x128xf32>
    %c1_i32 = arith.constant 1 : i32
    %76 = vector.broadcast %c1_i32 : i32 to vector<1x128xi32>
    %77 = arith.cmpi eq, %70, %76 : vector<1x128xi32>
    %cst_44 = arith.constant 0.000000e+00 : f32
    %78 = vector.broadcast %69 : f32 to vector<1x128xf32>
    %79 = vector.broadcast %cst_44 : f32 to vector<1x128xf32>
    %80 = arith.select %77, %78, %79 : vector<1x128xi1>, vector<1x128xf32>
    %81 = arith.addf %75, %80 : vector<1x128xf32>
    %c0_45 = arith.constant 0 : index
    %c0_46 = arith.constant 0 : index
    %c0_47 = arith.constant 0 : index
    %82 = vector.load %arg14[%c0_45, %c0_46, %c0_47] : memref<1x1x128xf32, #tpu.memory_space<vmem>>, vector<1x1x128xf32>
    %83 = vector.shape_cast %82 : vector<1x1x128xf32> to vector<1x128xf32>
    %84 = vector.shape_cast %81 : vector<1x128xf32> to vector<1x1x128xf32>
    tpu.vector_store %arg14[%c0_45, %c0_46, %c0_47], %84 {strides = array<i32>} : memref<1x1x128xf32, #tpu.memory_space<vmem>>, vector<1x1x128xf32>,
    return
  }
  func.func @transform_0(%arg0: i32) -> (i32, i32) {
    %c0_i32 = arith.constant 0 : i32
    %c0_i32_0 = arith.constant 0 : i32
    return %arg0, %c0_i32 : i32, i32
  }
  func.func @transform_1(%arg0: i32) -> (i32, i32, i32) {
    %c0_i32 = arith.constant 0 : i32
    %c0_i32_0 = arith.constant 0 : i32
    %c0_i32_1 = arith.constant 0 : i32
    return %arg0, %c0_i32, %c0_i32_0 : i32, i32, i32
  }
  func.func @transform_2(%arg0: i32) -> (i32, i32, i32) {
    %c0_i32 = arith.constant 0 : i32
    %c0_i32_0 = arith.constant 0 : i32
    %c0_i32_1 = arith.constant 0 : i32
    return %arg0, %c0_i32, %c0_i32_0 : i32, i32, i32
  }
  func.func @transform_3(%arg0: i32) -> (i32, i32, i32) {
    %c0_i32 = arith.constant 0 : i32
    %c0_i32_0 = arith.constant 0 : i32
    %c0_i32_1 = arith.constant 0 : i32
    return %arg0, %c0_i32, %c0_i32_0 : i32, i32, i32
  }
  func.func @transform_4(%arg0: i32) -> (i32, i32) {
    %c0_i32 = arith.constant 0 : i32
    %c0_i32_0 = arith.constant 0 : i32
    %c0_i32_1 = arith.constant 0 : i32
    return %c0_i32, %c0_i32_0 : i32, i32
  }
  func.func @transform_5(%arg0: i32) -> (i32, i32) {
    %c0_i32 = arith.constant 0 : i32
    %c0_i32_0 = arith.constant 0 : i32
    %c0_i32_1 = arith.constant 0 : i32
    return %c0_i32, %c0_i32_0 : i32, i32
  }
  func.func @transform_6(%arg0: i32) -> (i32, i32) {
    %c0_i32 = arith.constant 0 : i32
    %c0_i32_0 = arith.constant 0 : i32
    %c0_i32_1 = arith.constant 0 : i32
    return %c0_i32, %c0_i32_0 : i32, i32
  }
  func.func @transform_7(%arg0: i32) -> (i32, i32) {
    %c0_i32 = arith.constant 0 : i32
    %c0_i32_0 = arith.constant 0 : i32
    %c0_i32_1 = arith.constant 0 : i32
    return %c0_i32, %c0_i32_0 : i32, i32
  }
  func.func @transform_8(%arg0: i32) -> (i32, i32) {
    %c0_i32 = arith.constant 0 : i32
    %c0_i32_0 = arith.constant 0 : i32
    %c0_i32_1 = arith.constant 0 : i32
    return %c0_i32, %c0_i32_0 : i32, i32
  }
  func.func @transform_9(%arg0: i32) -> (i32, i32) {
    %c0_i32 = arith.constant 0 : i32
    %c0_i32_0 = arith.constant 0 : i32
    %c0_i32_1 = arith.constant 0 : i32
    return %c0_i32, %c0_i32_0 : i32, i32
  }
  func.func @transform_10(%arg0: i32) -> (i32, i32) {
    %c0_i32 = arith.constant 0 : i32
    %c0_i32_0 = arith.constant 0 : i32
    %c0_i32_1 = arith.constant 0 : i32
    return %c0_i32, %c0_i32_0 : i32, i32
  }
  func.func @transform_11(%arg0: i32) -> (i32, i32) {
    %c0_i32 = arith.constant 0 : i32
    %c0_i32_0 = arith.constant 0 : i32
    %c0_i32_1 = arith.constant 0 : i32
    return %c0_i32, %c0_i32_0 : i32, i32
  }
  func.func @transform_12(%arg0: i32) -> (i32, i32, i32) {
    %c0_i32 = arith.constant 0 : i32
    %c0_i32_0 = arith.constant 0 : i32
    %c0_i32_1 = arith.constant 0 : i32
    return %arg0, %c0_i32, %c0_i32_0 : i32, i32, i32
  }
  func.func @transform_13(%arg0: i32) -> (i32, i32, i32) {
    %c0_i32 = arith.constant 0 : i32
    %c0_i32_0 = arith.constant 0 : i32
    %c0_i32_1 = arith.constant 0 : i32
    return %arg0, %c0_i32, %c0_i32_0 : i32, i32, i32
  }
}

</mosaic_0001>

<llo_original>
// kernel: head_edge_forward.1
$region0: #{head_edge_forward.1}
  #allocation0 [shape = 'u32[]', space=smem, size = 0x4, offset = 0x4, fixed_abs, tag = 'smem constant byte address 0x4 - core index']
  #allocation1 [shape = 'u32[72,128]{1,0:T(1,128)}', space=vmem, size = 0x9000, scoped, tag = 'internal scratch']
  #allocation2 [shape = 'f32[1,1]{1,0:T(1,128)S(1)}', space=vmem, size = 0x200, scoped, tag = 'scoped memory for head_edge_forward.1']
  %s0 = inlined_call_operand.vmem [shape: bf16[256,256], index: 0, kind: input, shape index: {}]
  %s1 = inlined_call_operand.vmem [shape: f32[2,1,1024], index: 1, kind: input, shape index: {}]
  %s2 = inlined_call_operand.vmem [shape: f32[2,1,1024], index: 2, kind: input, shape index: {}]
  %s3 = inlined_call_operand.vmem [shape: f32[2,1,1024], index: 3, kind: input, shape index: {}]
  %s4 = inlined_call_operand.vmem [shape: bf16[256,128], index: 4, kind: input, shape index: {}]
  %s5 = inlined_call_operand.vmem [shape: f32[1,128], index: 5, kind: input, shape index: {}]
  %s6 = inlined_call_operand.vmem [shape: bf16[128,64], index: 6, kind: input, shape index: {}]
  %s7 = inlined_call_operand.vmem [shape: f32[1,64], index: 7, kind: input, shape index: {}]
  %s8 = inlined_call_operand.vmem [shape: bf16[64,32], index: 8, kind: input, shape index: {}]
  %s9 = inlined_call_operand.vmem [shape: f32[1,32], index: 9, kind: input, shape index: {}]
  %s10 = inlined_call_operand.vmem [shape: bf16[1,32], index: 10, kind: input, shape index: {}]
  %s11 = inlined_call_operand.<no memory space> [shape: f32[1,1], index: 11, kind: input, shape index: {}]
  %s12 = inlined_call_operand.vmem [shape: f32[2,1,1024], index: 12, kind: output, shape index: {0}]
  %s13 = inlined_call_operand.vmem [shape: f32[2,1,128], index: 13, kind: output, shape index: {1}]
  %14 = xla_tuple %s12, %s13
  %s15 = sld [smem:[#allocation0]]
  $region89: #{head_edge_forward.1} parent=0
    _
  %s17 = ssub.s32 1, %s15
  %s18 = scalar_select 0, %s17, %s15
  %v19 = vstv %s11
  %20 = vst [vmem:[#allocation2] sm:$0x1] %v19
  loop: start=0, step=1, limit=4
  $region2: #{head_edge_forward.1} parent=0 // loop_pre_header
    _
  $region3: #{head_edge_forward.1} parent=0 // loop_header
    %s22 = sphi 0, %s26
    %p23 = scmp.ge.s32.totalorder %s22, 4
    %s32 = sphi 0, %s34
    %s35 = sphi 0, %s32
    %s36 = sphi 0, %s35
    %s52 = sphi 0, %s36
    %s58 = sphi 0, %s60
    %s61 = sphi 0, %s58
    %s62 = sphi 0, %s61
    %s78 = sphi 0, %s62
    %s84 = sphi 0, %s86
    %s87 = sphi 0, %s84
    %s88 = sphi 0, %s87
    %s104 = sphi 0, %s88
    %s110 = sphi 0, %s112
    %s113 = sphi 0, %s110
    %s114 = sphi 0, %s113
    %s130 = sphi 0, %s114
    %s134 = sphi 0, %s134
    %s136 = sphi 0, %s134
    %s137 = sphi 0, %s136
    %s151 = sphi 0, %s137
    %s155 = sphi 0, %s155
    %s157 = sphi 0, %s155
    %s158 = sphi 0, %s157
    %s172 = sphi 0, %s158
    %s176 = sphi 0, %s176
    %s178 = sphi 0, %s176
    %s179 = sphi 0, %s178
    %s193 = sphi 0, %s179
    %s197 = sphi 0, %s197
    %s199 = sphi 0, %s197
    %s200 = sphi 0, %s199
    %s214 = sphi 0, %s200
    %s218 = sphi 0, %s218
    %s220 = sphi 0, %s218
    %s221 = sphi 0, %s220
    %s235 = sphi 0, %s221
    %s239 = sphi 0, %s239
    %s241 = sphi 0, %s239
    %s242 = sphi 0, %s241
    %s256 = sphi 0, %s242
    %s260 = sphi 0, %s260
    %s262 = sphi 0, %s260
    %s263 = sphi 0, %s262
    %s277 = sphi 0, %s263
    %s281 = sphi 0, %s281
    %s283 = sphi 0, %s281
    %s284 = sphi 0, %s283
    %s298 = sphi 0, %s284
    %s304 = sphi 0, %s306
    %s307 = sphi 0, %s304
    %s308 = sphi 0, %s307
    %s324 = sphi 0, %s308
    %s330 = sphi 0, %s332
    %s333 = sphi 0, %s330
    %s334 = sphi 0, %s333
    %s350 = sphi 0, %s334
  $region4: #{head_edge_forward.1} parent=0 // loop_header_branch
    %25 = sbr.rel (%p23) target = $region8
  $region5: #{head_edge_forward.1} parent=0 // loop_body
    %s27 = ssub.s32 %s22, 1
    %s28 = ssub.s32 %s22, 2
    %s29 = sadd.s32 %s22, 1
    %s30 = ssub.s32 %s22, %s29
    %p31 = scmp.eq.s32.totalorder %s30, 0
    %s33 = sadd.s32 %s32, 1
    %s34 = scalar_select %p31, %s32, %s33
    %p37 = pneg %p31
    %p38 = scmp.eq.s32.totalorder %s22, 1
    %p39 = por %p37, %p38
    %p40 = scmp.ne.s32.totalorder %s32, %s35
    %p41 = scmp.eq.s32.totalorder %s22, 0
    %p42 = por %p40, %p41
    %p43 = scmp.ne.s32.totalorder %s32, %s35
    %p44 = scmp.eq.s32.totalorder %s27, 1
    %p45 = por %p43, %p44
    %p46 = scmp.ne.s32.totalorder %s35, %s36
    %p47 = scmp.eq.s32.totalorder %s27, 0
    %p48 = por %p46, %p47
    %p49 = scmp.ne.s32.totalorder %s35, %s36
    %p50 = scmp.eq.s32.totalorder %s28, 1
    %p51 = por %p49, %p50
    %p53 = scmp.ne.s32.totalorder %s36, %s52
    %p54 = scmp.eq.s32.totalorder %s28, 0
    %p55 = por %p53, %p54
    %s56 = ssub.s32 %s22, %s29
    %p57 = scmp.eq.s32.totalorder %s56, 0
    %s59 = sadd.s32 %s58, 1
    %s60 = scalar_select %p57, %s58, %s59
    %p63 = pneg %p57
    %p64 = scmp.eq.s32.totalorder %s22, 1
    %p65 = por %p63, %p64
    %p66 = scmp.ne.s32.totalorder %s58, %s61
    %p67 = scmp.eq.s32.totalorder %s22, 0
    %p68 = por %p66, %p67
    %p69 = scmp.ne.s32.totalorder %s58, %s61
    %p70 = scmp.eq.s32.totalorder %s27, 1
    %p71 = por %p69, %p70
    %p72 = scmp.ne.s32.totalorder %s61, %s62
    %p73 = scmp.eq.s32.totalorder %s27, 0
    %p74 = por %p72, %p73
    %p75 = scmp.ne.s32.totalorder %s61, %s62
    %p76 = scmp.eq.s32.totalorder %s28, 1
    %p77 = por %p75, %p76
    %p79 = scmp.ne.s32.totalorder %s62, %s78
    %p80 = scmp.eq.s32.totalorder %s28, 0
    %p81 = por %p79, %p80
    %s82 = ssub.s32 %s22, %s29
    %p83 = scmp.eq.s32.totalorder %s82, 0
    %s85 = sadd.s32 %s84, 1
    %s86 = scalar_select %p83, %s84, %s85
    %p89 = pneg %p83
    %p90 = scmp.eq.s32.totalorder %s22, 1
    %p91 = por %p89, %p90
    %p92 = scmp.ne.s32.totalorder %s84, %s87
    %p93 = scmp.eq.s32.totalorder %s22, 0
    %p94 = por %p92, %p93
    %p95 = scmp.ne.s32.totalorder %s84, %s87
    %p96 = scmp.eq.s32.totalorder %s27, 1
    %p97 = por %p95, %p96
    %p98 = scmp.ne.s32.totalorder %s87, %s88
    %p99 = scmp.eq.s32.totalorder %s27, 0
    %p100 = por %p98, %p99
    %p101 = scmp.ne.s32.totalorder %s87, %s88
    %p102 = scmp.eq.s32.totalorder %s28, 1
    %p103 = por %p101, %p102
    %p105 = scmp.ne.s32.totalorder %s88, %s104
    %p106 = scmp.eq.s32.totalorder %s28, 0
    %p107 = por %p105, %p106
    %s108 = ssub.s32 %s22, %s29
    %p109 = scmp.eq.s32.totalorder %s108, 0
    %s111 = sadd.s32 %s110, 1
    %s112 = scalar_select %p109, %s110, %s111
    %p115 = pneg %p109
    %p116 = scmp.eq.s32.totalorder %s22, 1
    %p117 = por %p115, %p116
    %p118 = scmp.ne.s32.totalorder %s110, %s113
    %p119 = scmp.eq.s32.totalorder %s22, 0
    %p120 = por %p118, %p119
    %p121 = scmp.ne.s32.totalorder %s110, %s113
    %p122 = scmp.eq.s32.totalorder %s27, 1
    %p123 = por %p121, %p122
    %p124 = scmp.ne.s32.totalorder %s113, %s114
    %p125 = scmp.eq.s32.totalorder %s27, 0
    %p126 = por %p124, %p125
    %p127 = scmp.ne.s32.totalorder %s113, %s114
    %p128 = scmp.eq.s32.totalorder %s28, 1
    %p129 = por %p127, %p128
    %p131 = scmp.ne.s32.totalorder %s114, %s130
    %p132 = scmp.eq.s32.totalorder %s28, 0
    %p133 = por %p131, %p132
    %s135 = sadd.s32 %s134, 1
    %p138 = scmp.eq.s32.totalorder %s22, 1
    %p139 = scmp.ne.s32.totalorder %s134, %s136
    %p140 = scmp.eq.s32.totalorder %s22, 0
    %p141 = por %p139, %p140
    %p142 = scmp.ne.s32.totalorder %s134, %s136
    %p143 = scmp.eq.s32.totalorder %s27, 1
    %p144 = por %p142, %p143
    %p145 = scmp.ne.s32.totalorder %s136, %s137
    %p146 = scmp.eq.s32.totalorder %s27, 0
    %p147 = por %p145, %p146
    %p148 = scmp.ne.s32.totalorder %s136, %s137
    %p149 = scmp.eq.s32.totalorder %s28, 1
    %p150 = por %p148, %p149
    %p152 = scmp.ne.s32.totalorder %s137, %s151
    %p153 = scmp.eq.s32.totalorder %s28, 0
    %p154 = por %p152, %p153
    %s156 = sadd.s32 %s155, 1
    %p159 = scmp.eq.s32.totalorder %s22, 1
    %p160 = scmp.ne.s32.totalorder %s155, %s157
    %p161 = scmp.eq.s32.totalorder %s22, 0
    %p162 = por %p160, %p161
    %p163 = scmp.ne.s32.totalorder %s155, %s157
    %p164 = scmp.eq.s32.totalorder %s27, 1
    %p165 = por %p163, %p164
    %p166 = scmp.ne.s32.totalorder %s157, %s158
    %p167 = scmp.eq.s32.totalorder %s27, 0
    %p168 = por %p166, %p167
    %p169 = scmp.ne.s32.totalorder %s157, %s158
    %p170 = scmp.eq.s32.totalorder %s28, 1
    %p171 = por %p169, %p170
    %p173 = scmp.ne.s32.totalorder %s158, %s172
    %p174 = scmp.eq.s32.totalorder %s28, 0
    %p175 = por %p173, %p174
    %s177 = sadd.s32 %s176, 1
    %p180 = scmp.eq.s32.totalorder %s22, 1
    %p181 = scmp.ne.s32.totalorder %s176, %s178
    %p182 = scmp.eq.s32.totalorder %s22, 0
    %p183 = por %p181, %p182
    %p184 = scmp.ne.s32.totalorder %s176, %s178
    %p185 = scmp.eq.s32.totalorder %s27, 1
    %p186 = por %p184, %p185
    %p187 = scmp.ne.s32.totalorder %s178, %s179
    %p188 = scmp.eq.s32.totalorder %s27, 0
    %p189 = por %p187, %p188
    %p190 = scmp.ne.s32.totalorder %s178, %s179
    %p191 = scmp.eq.s32.totalorder %s28, 1
    %p192 = por %p190, %p191
    %p194 = scmp.ne.s32.totalorder %s179, %s193
    %p195 = scmp.eq.s32.totalorder %s28, 0
    %p196 = por %p194, %p195
    %s198 = sadd.s32 %s197, 1
    %p201 = scmp.eq.s32.totalorder %s22, 1
    %p202 = scmp.ne.s32.totalorder %s197, %s199
    %p203 = scmp.eq.s32.totalorder %s22, 0
    %p204 = por %p202, %p203
    %p205 = scmp.ne.s32.totalorder %s197, %s199
    %p206 = scmp.eq.s32.totalorder %s27, 1
    %p207 = por %p205, %p206
    %p208 = scmp.ne.s32.totalorder %s199, %s200
    %p209 = scmp.eq.s32.totalorder %s27, 0
    %p210 = por %p208, %p209
    %p211 = scmp.ne.s32.totalorder %s199, %s200
    %p212 = scmp.eq.s32.totalorder %s28, 1
    %p213 = por %p211, %p212
    %p215 = scmp.ne.s32.totalorder %s200, %s214
    %p216 = scmp.eq.s32.totalorder %s28, 0
    %p217 = por %p215, %p216
    %s219 = sadd.s32 %s218, 1
    %p222 = scmp.eq.s32.totalorder %s22, 1
    %p223 = scmp.ne.s32.totalorder %s218, %s220
    %p224 = scmp.eq.s32.totalorder %s22, 0
    %p225 = por %p223, %p224
    %p226 = scmp.ne.s32.totalorder %s218, %s220
    %p227 = scmp.eq.s32.totalorder %s27, 1
    %p228 = por %p226, %p227
    %p229 = scmp.ne.s32.totalorder %s220, %s221
    %p230 = scmp.eq.s32.totalorder %s27, 0
    %p231 = por %p229, %p230
    %p232 = scmp.ne.s32.totalorder %s220, %s221
    %p233 = scmp.eq.s32.totalorder %s28, 1
    %p234 = por %p232, %p233
    %p236 = scmp.ne.s32.totalorder %s221, %s235
    %p237 = scmp.eq.s32.totalorder %s28, 0
    %p238 = por %p236, %p237
    %s240 = sadd.s32 %s239, 1
    %p243 = scmp.eq.s32.totalorder %s22, 1
    %p244 = scmp.ne.s32.totalorder %s239, %s241
    %p245 = scmp.eq.s32.totalorder %s22, 0
    %p246 = por %p244, %p245
    %p247 = scmp.ne.s32.totalorder %s239, %s241
    %p248 = scmp.eq.s32.totalorder %s27, 1
    %p249 = por %p247, %p248
    %p250 = scmp.ne.s32.totalorder %s241, %s242
    %p251 = scmp.eq.s32.totalorder %s27, 0
    %p252 = por %p250, %p251
    %p253 = scmp.ne.s32.totalorder %s241, %s242
    %p254 = scmp.eq.s32.totalorder %s28, 1
    %p255 = por %p253, %p254
    %p257 = scmp.ne.s32.totalorder %s242, %s256
    %p258 = scmp.eq.s32.totalorder %s28, 0
    %p259 = por %p257, %p258
    %s261 = sadd.s32 %s260, 1
    %p264 = scmp.eq.s32.totalorder %s22, 1
    %p265 = scmp.ne.s32.totalorder %s260, %s262
    %p266 = scmp.eq.s32.totalorder %s22, 0
    %p267 = por %p265, %p266
    %p268 = scmp.ne.s32.totalorder %s260, %s262
    %p269 = scmp.eq.s32.totalorder %s27, 1
    %p270 = por %p268, %p269
    %p271 = scmp.ne.s32.totalorder %s262, %s263
    %p272 = scmp.eq.s32.totalorder %s27, 0
    %p273 = por %p271, %p272
    %p274 = scmp.ne.s32.totalorder %s262, %s263
    %p275 = scmp.eq.s32.totalorder %s28, 1
    %p276 = por %p274, %p275
    %p278 = scmp.ne.s32.totalorder %s263, %s277
    %p279 = scmp.eq.s32.totalorder %s28, 0
    %p280 = por %p278, %p279
    %s282 = sadd.s32 %s281, 1
    %p285 = scmp.eq.s32.totalorder %s22, 1
    %p286 = scmp.ne.s32.totalorder %s281, %s283
    %p287 = scmp.eq.s32.totalorder %s22, 0
    %p288 = por %p286, %p287
    %p289 = scmp.ne.s32.totalorder %s281, %s283
    %p290 = scmp.eq.s32.totalorder %s27, 1
    %p291 = por %p289, %p290
    %p292 = scmp.ne.s32.totalorder %s283, %s284
    %p293 = scmp.eq.s32.totalorder %s27, 0
    %p294 = por %p292, %p293
    %p295 = scmp.ne.s32.totalorder %s283, %s284
    %p296 = scmp.eq.s32.totalorder %s28, 1
    %p297 = por %p295, %p296
    %p299 = scmp.ne.s32.totalorder %s284, %s298
    %p300 = scmp.eq.s32.totalorder %s28, 0
    %p301 = por %p299, %p300
    %s302 = ssub.s32 %s22, %s29
    %p303 = scmp.eq.s32.totalorder %s302, 0
    %s305 = sadd.s32 %s304, 1
    %s306 = scalar_select %p303, %s304, %s305
    %p309 = pneg %p303
    %p310 = scmp.eq.s32.totalorder %s22, 1
    %p311 = por %p309, %p310
    %p312 = scmp.ne.s32.totalorder %s304, %s307
    %p313 = scmp.eq.s32.totalorder %s22, 0
    %p314 = por %p312, %p313
    %p315 = scmp.ne.s32.totalorder %s304, %s307
    %p316 = scmp.eq.s32.totalorder %s27, 1
    %p317 = por %p315, %p316
    %p318 = scmp.ne.s32.totalorder %s307, %s308
    %p319 = scmp.eq.s32.totalorder %s27, 0
    %p320 = por %p318, %p319
    %p321 = scmp.ne.s32.totalorder %s307, %s308
    %p322 = scmp.eq.s32.totalorder %s28, 1
    %p323 = por %p321, %p322
    %p325 = scmp.ne.s32.totalorder %s308, %s324
    %p326 = scmp.eq.s32.totalorder %s28, 0
    %p327 = por %p325, %p326
    %s328 = ssub.s32 %s22, %s29
    %p329 = scmp.eq.s32.totalorder %s328, 0
    %s331 = sadd.s32 %s330, 1
    %s332 = scalar_select %p329, %s330, %s331
    %p335 = pneg %p329
    %p336 = scmp.eq.s32.totalorder %s22, 1
    %p337 = por %p335, %p336
    %p338 = scmp.ne.s32.totalorder %s330, %s333
    %p339 = scmp.eq.s32.totalorder %s22, 0
    %p340 = por %p338, %p339
    %p341 = scmp.ne.s32.totalorder %s330, %s333
    %p342 = scmp.eq.s32.totalorder %s27, 1
    %p343 = por %p341, %p342
    %p344 = scmp.ne.s32.totalorder %s333, %s334
    %p345 = scmp.eq.s32.totalorder %s27, 0
    %p346 = por %p344, %p345
    %p347 = scmp.ne.s32.totalorder %s333, %s334
    %p348 = scmp.eq.s32.totalorder %s28, 1
    %p349 = por %p347, %p348
    %p351 = scmp.ne.s32.totalorder %s334, %s350
    %p352 = scmp.eq.s32.totalorder %s28, 0
    %p353 = por %p351, %p352
    %p354 = scmp.le.s32.totalorder 1, %s22
    %p355 = scmp.lt.s32.totalorder %s22, 3
    %p356 = pnand %p354, %p355
    %p357 = pneg %p356
    // Predicated region
    $region9: #{head_edge_forward.1} parent=5 // pred_check
      _
    $region10: #{head_edge_forward.1} parent=5 // pred_check_branch
      %359 = sbr.rel (%p356) target = $region12
    $region11: #{head_edge_forward.1} parent=5 // pred_region
      %s360 = ssub.s32 %s22, 1
      // Predicated region
      $region13: #{head_edge_forward.1} parent=11 // pred_check
        %p361 = pneg %p147
      $region14: #{head_edge_forward.1} parent=11 // pred_check_branch
        %363 = sbr.rel (%p361) target = $region16
      $region15: #{head_edge_forward.1} parent=11 // pred_region
        _
      $region16: #{head_edge_forward.1} parent=11 // pred_fallthru
        _
      // Predicated region
      $region17: #{head_edge_forward.1} parent=11 // pred_check
        %p364 = pneg %p168
      $region18: #{head_edge_forward.1} parent=11 // pred_check_branch
        %366 = sbr.rel (%p364) target = $region20
      $region19: #{head_edge_forward.1} parent=11 // pred_region
        _
      $region20: #{head_edge_forward.1} parent=11 // pred_fallthru
        _
      // Predicated region
      $region21: #{head_edge_forward.1} parent=11 // pred_check
        %p367 = pneg %p189
      $region22: #{head_edge_forward.1} parent=11 // pred_check_branch
        %369 = sbr.rel (%p367) target = $region24
      $region23: #{head_edge_forward.1} parent=11 // pred_region
        _
      $region24: #{head_edge_forward.1} parent=11 // pred_fallthru
        _
      // Predicated region
      $region25: #{head_edge_forward.1} parent=11 // pred_check
        %p370 = pneg %p210
      $region26: #{head_edge_forward.1} parent=11 // pred_check_branch
        %372 = sbr.rel (%p370) target = $region28
      $region27: #{head_edge_forward.1} parent=11 // pred_region
        _
      $region28: #{head_edge_forward.1} parent=11 // pred_fallthru
        _
      // Predicated region
      $region29: #{head_edge_forward.1} parent=11 // pred_check
        %p373 = pneg %p231
      $region30: #{head_edge_forward.1} parent=11 // pred_check_branch
        %375 = sbr.rel (%p373) target = $region32
      $region31: #{head_edge_forward.1} parent=11 // pred_region
        _
      $region32: #{head_edge_forward.1} parent=11 // pred_fallthru
        _
      // Predicated region
      $region33: #{head_edge_forward.1} parent=11 // pred_check
        %p376 = pneg %p252
      $region34: #{head_edge_forward.1} parent=11 // pred_check_branch
        %378 = sbr.rel (%p376) target = $region36
      $region35: #{head_edge_forward.1} parent=11 // pred_region
        _
      $region36: #{head_edge_forward.1} parent=11 // pred_fallthru
        _
      // Predicated region
      $region37: #{head_edge_forward.1} parent=11 // pred_check
        %p379 = pneg %p273
      $region38: #{head_edge_forward.1} parent=11 // pred_check_branch
        %381 = sbr.rel (%p379) target = $region40
      $region39: #{head_edge_forward.1} parent=11 // pred_region
        _
      $region40: #{head_edge_forward.1} parent=11 // pred_fallthru
        _
      // Predicated region
      $region41: #{head_edge_forward.1} parent=11 // pred_check
        %p382 = pneg %p294
      $region42: #{head_edge_forward.1} parent=11 // pred_check_branch
        %384 = sbr.rel (%p382) target = $region44
      $region43: #{head_edge_forward.1} parent=11 // pred_region
        _
      $region44: #{head_edge_forward.1} parent=11 // pred_fallthru
        _
    $region12: #{head_edge_forward.1} parent=5 // pred_fallthru
      _
    %p385 = scmp.lt.s32.totalorder %s22, 2
    // Predicated region
    $region45: #{head_edge_forward.1} parent=5 // pred_check
      %p386 = pneg %p385
    $region46: #{head_edge_forward.1} parent=5 // pred_check_branch
      %388 = sbr.rel (%p386) target = $region48
    $region47: #{head_edge_forward.1} parent=5 // pred_region
      // Predicated region
      $region49: #{head_edge_forward.1} parent=47 // pred_check
        %p389 = pneg %p42
      $region50: #{head_edge_forward.1} parent=47 // pred_check_branch
        %391 = sbr.rel (%p389) target = $region52
      $region51: #{head_edge_forward.1} parent=47 // pred_region
        %s392 = smul.u32 16, %s22
        %p393 = scmp.lt.s32.totalorder %s392, 31
        %s394 = scalar_select %p393, %s392, 31
        %s395 = smul.addr %s394, 2
        %s396 = smul.addr %s395, 4
        %s397 = scalar_lea.vmem %s0, %s396
        %s398 = smul.u32 16, %s22
      $region52: #{head_edge_forward.1} parent=47 // pred_fallthru
        _
      // Predicated region
      $region53: #{head_edge_forward.1} parent=47 // pred_check
        %p399 = pneg %p68
      $region54: #{head_edge_forward.1} parent=47 // pred_check_branch
        %401 = sbr.rel (%p399) target = $region56
      $region55: #{head_edge_forward.1} parent=47 // pred_region
        %p402 = scmp.lt.s32.totalorder %s22, 1
        %s403 = scalar_select %p402, %s22, 1
        %s404 = smul.addr %s403, 8
        %s405 = scalar_lea.vmem %s1, %s404
      $region56: #{head_edge_forward.1} parent=47 // pred_fallthru
        _
      // Predicated region
      $region57: #{head_edge_forward.1} parent=47 // pred_check
        %p406 = pneg %p94
      $region58: #{head_edge_forward.1} parent=47 // pred_check_branch
        %408 = sbr.rel (%p406) target = $region60
      $region59: #{head_edge_forward.1} parent=47 // pred_region
        %p409 = scmp.lt.s32.totalorder %s22, 1
        %s410 = scalar_select %p409, %s22, 1
        %s411 = smul.addr %s410, 8
        %s412 = scalar_lea.vmem %s2, %s411
      $region60: #{head_edge_forward.1} parent=47 // pred_fallthru
        _
      // Predicated region
      $region61: #{head_edge_forward.1} parent=47 // pred_check
        %p413 = pneg %p120
      $region62: #{head_edge_forward.1} parent=47 // pred_check_branch
        %415 = sbr.rel (%p413) target = $region64
      $region63: #{head_edge_forward.1} parent=47 // pred_region
        %p416 = scmp.lt.s32.totalorder %s22, 1
        %s417 = scalar_select %p416, %s22, 1
        %s418 = smul.addr %s417, 8
        %s419 = scalar_lea.vmem %s3, %s418
      $region64: #{head_edge_forward.1} parent=47 // pred_fallthru
        _
    $region48: #{head_edge_forward.1} parent=5 // pred_fallthru
      _
    %p420 = scmp.le.s32.totalorder 1, %s22
    %p421 = scmp.lt.s32.totalorder %s22, 3
    %p422 = pnand %p420, %p421
    %p423 = pneg %p422
    // Predicated region
    $region65: #{head_edge_forward.1} parent=5 // pred_check
      _
    $region66: #{head_edge_forward.1} parent=5 // pred_check_branch
      %425 = sbr.rel (%p422) target = $region68
    $region67: #{head_edge_forward.1} parent=5 // pred_region
      %s426 = ssub.s32 %s22, 1
      %s427 = smul.u32 16, %s27
      %p428 = scmp.lt.s32.totalorder %s427, 31
      %s429 = scalar_select %p428, %s427, 31
      %s430 = smul.addr %s429, 2
      %s431 = smul.addr %s430, 4
      %s432 = scalar_lea.vmem %s0, %s431
      %p433 = pneg %p48
      %p434 = pneg %p45
      %p435 = scmp.lt.s32.totalorder %s27, 1
      %s436 = scalar_select %p435, %s27, 1
      %s437 = smul.addr %s436, 8
      %s438 = scalar_lea.vmem %s1, %s437
      %p439 = pneg %p74
      %p440 = pneg %p71
      %p441 = scmp.lt.s32.totalorder %s27, 1
      %s442 = scalar_select %p441, %s27, 1
      %s443 = smul.addr %s442, 8
      %s444 = scalar_lea.vmem %s2, %s443
      %p445 = pneg %p100
      %p446 = pneg %p97
      %p447 = scmp.lt.s32.totalorder %s27, 1
      %s448 = scalar_select %p447, %s27, 1
      %s449 = smul.addr %s448, 8
      %s450 = scalar_lea.vmem %s3, %s449
      %p451 = pneg %p126
      %p452 = pneg %p123
      %p453 = pneg %p147
      %p454 = pneg %p144
      %p455 = pneg %p168
      %p456 = pneg %p165
      %p457 = pneg %p189
      %p458 = pneg %p186
      %p459 = pneg %p210
      %p460 = pneg %p207
      %p461 = pneg %p231
      %p462 = pneg %p228
      %p463 = pneg %p252
      %p464 = pneg %p249
      %p465 = pneg %p273
      %p466 = pneg %p270
      %p467 = pneg %p294
      %p468 = pneg %p291
      %p469 = pneg %p320
      %p470 = pneg %p317
      %p471 = scmp.lt.s32.totalorder %s27, 1
      %s472 = scalar_select %p471, %s27, 1
      %s473 = smul.addr %s472, 8
      %s474 = scalar_lea.vmem %s12, %s473
      %p475 = pneg %p346
      %p476 = pneg %p343
      %p477 = scmp.lt.s32.totalorder %s27, 1
      %s478 = scalar_select %p477, %s27, 1
      %s479 = scalar_lea.vmem %s13, %s478
      %s480 = smul.u32 16, %s27
      %p481 = scmp.lt.s32.totalorder %s480, 31
      %s482 = scalar_select %p481, %s480, 31
      %s483 = smul.addr %s482, 2
      %s484 = smul.addr %s483, 4
      %s485 = scalar_lea.vmem %s0, %s484
      %s486 = smul.u32 16, %s27
      %p487 = scmp.lt.s32.totalorder %s27, 1
      %s488 = scalar_select %p487, %s27, 1
      %s489 = smul.addr %s488, 8
      %s490 = scalar_lea.vmem %s1, %s489
      %p491 = scmp.lt.s32.totalorder %s27, 1
      %s492 = scalar_select %p491, %s27, 1
      %s493 = smul.addr %s492, 8
      %s494 = scalar_lea.vmem %s2, %s493
      %p495 = scmp.lt.s32.totalorder %s27, 1
      %s496 = scalar_select %p495, %s27, 1
      %s497 = smul.addr %s496, 8
      %s498 = scalar_lea.vmem %s3, %s497
      %p499 = scmp.lt.s32.totalorder %s27, 1
      %s500 = scalar_select %p499, %s27, 1
      %s501 = smul.addr %s500, 8
      %s502 = scalar_lea.vmem %s12, %s501
      %p503 = scmp.lt.s32.totalorder %s27, 1
      %s504 = scalar_select %p503, %s27, 1
      %s505 = scalar_lea.vmem %s13, %s504
      %v507 = vld [vmem:[%s485] sm:$0xff]
      %v508 = vld [vmem:[%s485 + $0x8] sm:$0xff]
      %v509 = vld [vmem:[%s485 + $0x10] sm:$0xff]
      %v510 = vld [vmem:[%s485 + $0x18] sm:$0xff]
      %v511 = vld [vmem:[%s485 + $0x20] sm:$0xff]
      %v512 = vld [vmem:[%s485 + $0x28] sm:$0xff]
      %v513 = vld [vmem:[%s485 + $0x30] sm:$0xff]
      %v514 = vld [vmem:[%s485 + $0x38] sm:$0xff]
      %v515 = vld [vmem:[%s485 + $0x40] sm:$0xff]
      %v516 = vld [vmem:[%s485 + $0x48] sm:$0xff]
      %v517 = vld [vmem:[%s485 + $0x50] sm:$0xff]
      %v518 = vld [vmem:[%s485 + $0x58] sm:$0xff]
      %v519 = vld [vmem:[%s485 + $0x60] sm:$0xff]
      %v520 = vld [vmem:[%s485 + $0x68] sm:$0xff]
      %v521 = vld [vmem:[%s485 + $0x70] sm:$0xff]
      %v522 = vld [vmem:[%s485 + $0x78] sm:$0xff]
      %v523 = vld [vmem:[%s4] sm:$0xf]
      %v524 = vld [vmem:[%s4 + $0x4] sm:$0xf]
      %v525 = vld [vmem:[%s4 + $0x8] sm:$0xf]
      %v526 = vld [vmem:[%s4 + $0xc] sm:$0xf]
      %v527 = vld [vmem:[%s4 + $0x10] sm:$0xf]
      %v528 = vld [vmem:[%s4 + $0x14] sm:$0xf]
      %v529 = vld [vmem:[%s4 + $0x18] sm:$0xf]
      %v530 = vld [vmem:[%s4 + $0x1c] sm:$0xf]
      %v531 = vld [vmem:[%s4 + $0x20] sm:$0xf]
      %v532 = vld [vmem:[%s4 + $0x24] sm:$0xf]
      %v533 = vld [vmem:[%s4 + $0x28] sm:$0xf]
      %v534 = vld [vmem:[%s4 + $0x2c] sm:$0xf]
      %v535 = vld [vmem:[%s4 + $0x30] sm:$0xf]
      %v536 = vld [vmem:[%s4 + $0x34] sm:$0xf]
      %v537 = vld [vmem:[%s4 + $0x38] sm:$0xf]
      %v538 = vld [vmem:[%s4 + $0x3c] sm:$0xf]
      %v539 = vld [vmem:[%s4 + $0x40] sm:$0xf]
      %v540 = vld [vmem:[%s4 + $0x44] sm:$0xf]
      %v541 = vld [vmem:[%s4 + $0x48] sm:$0xf]
      %v542 = vld [vmem:[%s4 + $0x4c] sm:$0xf]
      %v543 = vld [vmem:[%s4 + $0x50] sm:$0xf]
      %v544 = vld [vmem:[%s4 + $0x54] sm:$0xf]
      %v545 = vld [vmem:[%s4 + $0x58] sm:$0xf]
      %v546 = vld [vmem:[%s4 + $0x5c] sm:$0xf]
      %v547 = vld [vmem:[%s4 + $0x60] sm:$0xf]
      %v548 = vld [vmem:[%s4 + $0x64] sm:$0xf]
      %v549 = vld [vmem:[%s4 + $0x68] sm:$0xf]
      %v550 = vld [vmem:[%s4 + $0x6c] sm:$0xf]
      %v551 = vld [vmem:[%s4 + $0x70] sm:$0xf]
      %v552 = vld [vmem:[%s4 + $0x74] sm:$0xf]
      %v553 = vld [vmem:[%s4 + $0x78] sm:$0xf]
      %v554 = vld [vmem:[%s4 + $0x7c] sm:$0xf]
      %v555 = vld [vmem:[%s5] sm:$0x1]
      %v556 = vmul.f32 %v555, 0.5
      %v558 = vperm.slane %v556, 0
      %v576 = vunpack.c.l.b16 %v507
      %v577 = vunpack.c.h.b16 %v507
      %v578 = vunpack.c.l.b16 %v508
      %v579 = vunpack.c.h.b16 %v508
      %v580 = vunpack.c.l.b16 %v509
      %v581 = vunpack.c.h.b16 %v509
      %v582 = vunpack.c.l.b16 %v510
      %v583 = vunpack.c.h.b16 %v510
      %v584 = vunpack.c.l.b16 %v511
      %v585 = vunpack.c.h.b16 %v511
      %v586 = vunpack.c.l.b16 %v512
      %v587 = vunpack.c.h.b16 %v512
      %v588 = vunpack.c.l.b16 %v513
      %v589 = vunpack.c.h.b16 %v513
      %v590 = vunpack.c.l.b16 %v514
      %v591 = vunpack.c.h.b16 %v514
      %v592 = vunpack.c.l.b16 %v515
      %v593 = vunpack.c.h.b16 %v515
      %v594 = vunpack.c.l.b16 %v516
      %v595 = vunpack.c.h.b16 %v516
      %v596 = vunpack.c.l.b16 %v517
      %v597 = vunpack.c.h.b16 %v517
      %v598 = vunpack.c.l.b16 %v518
      %v599 = vunpack.c.h.b16 %v518
      %v600 = vunpack.c.l.b16 %v519
      %v601 = vunpack.c.h.b16 %v519
      %v602 = vunpack.c.l.b16 %v520
      %v603 = vunpack.c.h.b16 %v520
      %v604 = vunpack.c.l.b16 %v521
      %v605 = vunpack.c.h.b16 %v521
      %v606 = vunpack.c.l.b16 %v522
      %v607 = vunpack.c.h.b16 %v522
      %v608 = vpack.c.b16 %v578, %v576
      %v609 = vpack.c.b16 %v579, %v577
      %v610 = vpack.c.b16 %v582, %v580
      %v611 = vpack.c.b16 %v583, %v581
      %v612 = vpack.c.b16 %v586, %v584
      %v613 = vpack.c.b16 %v587, %v585
      %v614 = vpack.c.b16 %v590, %v588
      %v615 = vpack.c.b16 %v591, %v589
      %v616 = vpack.c.b16 %v594, %v592
      %v617 = vpack.c.b16 %v595, %v593
      %v618 = vpack.c.b16 %v598, %v596
      %v619 = vpack.c.b16 %v599, %v597
      %v620 = vpack.c.b16 %v602, %v600
      %v621 = vpack.c.b16 %v603, %v601
      %v622 = vpack.c.b16 %v606, %v604
      %v623 = vpack.c.b16 %v607, %v605
      %v672 = vunpack.c.l.b16 %v523
      %v673 = vunpack.c.l.b16 %v524
      %v674 = vunpack.c.l.b16 %v525
      %v675 = vunpack.c.l.b16 %v526
      %v676 = vunpack.c.l.b16 %v527
      %v677 = vunpack.c.l.b16 %v528
      %v678 = vunpack.c.l.b16 %v529
      %v679 = vunpack.c.l.b16 %v530
      %v680 = vunpack.c.l.b16 %v531
      %v681 = vunpack.c.l.b16 %v532
      %v682 = vunpack.c.l.b16 %v533
      %v683 = vunpack.c.l.b16 %v534
      %v684 = vunpack.c.l.b16 %v535
      %v685 = vunpack.c.l.b16 %v536
      %v686 = vunpack.c.l.b16 %v537
      %v687 = vunpack.c.l.b16 %v538
      %v688 = vunpack.c.l.b16 %v539
      %v689 = vunpack.c.l.b16 %v540
      %v690 = vunpack.c.l.b16 %v541
      %v691 = vunpack.c.l.b16 %v542
      %v692 = vunpack.c.l.b16 %v543
      %v693 = vunpack.c.l.b16 %v544
      %v694 = vunpack.c.l.b16 %v545
      %v695 = vunpack.c.l.b16 %v546
      %v696 = vunpack.c.l.b16 %v547
      %v697 = vunpack.c.l.b16 %v548
      %v698 = vunpack.c.l.b16 %v549
      %v699 = vunpack.c.l.b16 %v550
      %v700 = vunpack.c.l.b16 %v551
      %v701 = vunpack.c.l.b16 %v552
      %v702 = vunpack.c.l.b16 %v553
      %v703 = vunpack.c.l.b16 %v554
      %v704 = vpack.c.b16 %v673, %v672
      %v705 = vpack.c.b16 %v675, %v674
      %v706 = vpack.c.b16 %v677, %v676
      %v707 = vpack.c.b16 %v679, %v678
      %v708 = vpack.c.b16 %v681, %v680
      %v709 = vpack.c.b16 %v683, %v682
      %v710 = vpack.c.b16 %v685, %v684
      %v711 = vpack.c.b16 %v687, %v686
      %v712 = vpack.c.b16 %v689, %v688
      %v713 = vpack.c.b16 %v691, %v690
      %v714 = vpack.c.b16 %v693, %v692
      %v715 = vpack.c.b16 %v695, %v694
      %v716 = vpack.c.b16 %v697, %v696
      %v717 = vpack.c.b16 %v699, %v698
      %v718 = vpack.c.b16 %v701, %v700
      %v719 = vpack.c.b16 %v703, %v702
      %736 = vmatpush.bf16.msra.mxu0 %v711
      %737 = vmatpush.bf16.msra.mxu0 %v710
      %738 = vmatpush.bf16.msra.mxu0 %v709
      %739 = vmatpush.bf16.msra.mxu0 %v708
      %740 = vmatpush.bf16.msra.mxu0 %v707
      %741 = vmatpush.bf16.msra.mxu0 %v706
      %742 = vmatpush.bf16.msra.mxu0 %v705
      %743 = vmatpush.bf16.msra.mxu0 %v704
      %744 = vmatmul.bf16.gmra.mxu0 %v608
      %v745 = vpop.f32.mrf.mxu0
      %v746 = vadd.f32 %v558, %v745
      %v747 = vpop.f32.mrf.mxu0
      %v748 = vadd.f32 %v558, %v747
      %749 = vmatmul.bf16.gmra.mxu0 %v610
      %v750 = vpop.f32.mrf.mxu0
      %v751 = vadd.f32 %v558, %v750
      %v752 = vpop.f32.mrf.mxu0
      %v753 = vadd.f32 %v558, %v752
      %754 = vmatmul.bf16.gmra.mxu0 %v612
      %v755 = vpop.f32.mrf.mxu0
      %v756 = vadd.f32 %v558, %v755
      %v757 = vpop.f32.mrf.mxu0
      %v758 = vadd.f32 %v558, %v757
      %759 = vmatmul.bf16.gmra.mxu0 %v614
      %v760 = vpop.f32.mrf.mxu0
      %v761 = vadd.f32 %v558, %v760
      %v762 = vpop.f32.mrf.mxu0
      %v763 = vadd.f32 %v558, %v762
      %764 = vmatmul.bf16.gmra.mxu0 %v616
      %v765 = vpop.f32.mrf.mxu0
      %v766 = vadd.f32 %v558, %v765
      %v767 = vpop.f32.mrf.mxu0
      %v768 = vadd.f32 %v558, %v767
      %769 = vmatmul.bf16.gmra.mxu0 %v618
      %v770 = vpop.f32.mrf.mxu0
      %v771 = vadd.f32 %v558, %v770
      %v772 = vpop.f32.mrf.mxu0
      %v773 = vadd.f32 %v558, %v772
      %774 = vmatmul.bf16.gmra.mxu0 %v620
      %v775 = vpop.f32.mrf.mxu0
      %v776 = vadd.f32 %v558, %v775
      %v777 = vpop.f32.mrf.mxu0
      %v778 = vadd.f32 %v558, %v777
      %779 = vmatmul.bf16.gmra.mxu0 %v622
      %v780 = vpop.f32.mrf.mxu0
      %v781 = vadd.f32 %v558, %v780
      %v782 = vpop.f32.mrf.mxu0
      %v783 = vadd.f32 %v558, %v782
      %784 = vdwg.mxu0
      %785 = vmatpush.bf16.msra.mxu0 %v719
      %786 = vmatpush.bf16.msra.mxu0 %v718
      %787 = vmatpush.bf16.msra.mxu0 %v717
      %788 = vmatpush.bf16.msra.mxu0 %v716
      %789 = vmatpush.bf16.msra.mxu0 %v715
      %790 = vmatpush.bf16.msra.mxu0 %v714
      %791 = vmatpush.bf16.msra.mxu0 %v713
      %792 = vmatpush.bf16.msra.mxu0 %v712
      %793 = vmatmul.bf16.gmra.mxu0 %v609
      %v794 = vpop.f32.mrf.mxu0
      %v795 = vadd.f32 %v746, %v794
      %v796 = vpop.f32.mrf.mxu0
      %v797 = vadd.f32 %v748, %v796
      %798 = vmatmul.bf16.gmra.mxu0 %v611
      %v799 = vpop.f32.mrf.mxu0
      %v800 = vadd.f32 %v751, %v799
      %v801 = vpop.f32.mrf.mxu0
      %v802 = vadd.f32 %v753, %v801
      %803 = vmatmul.bf16.gmra.mxu0 %v613
      %v804 = vpop.f32.mrf.mxu0
      %v805 = vadd.f32 %v756, %v804
      %v806 = vpop.f32.mrf.mxu0
      %v807 = vadd.f32 %v758, %v806
      %808 = vmatmul.bf16.gmra.mxu0 %v615
      %v809 = vpop.f32.mrf.mxu0
      %v810 = vadd.f32 %v761, %v809
      %v811 = vpop.f32.mrf.mxu0
      %v812 = vadd.f32 %v763, %v811
      %813 = vmatmul.bf16.gmra.mxu0 %v617
      %v814 = vpop.f32.mrf.mxu0
      %v815 = vadd.f32 %v766, %v814
      %v816 = vpop.f32.mrf.mxu0
      %v817 = vadd.f32 %v768, %v816
      %818 = vmatmul.bf16.gmra.mxu0 %v619
      %v819 = vpop.f32.mrf.mxu0
      %v820 = vadd.f32 %v771, %v819
      %v821 = vpop.f32.mrf.mxu0
      %v822 = vadd.f32 %v773, %v821
      %823 = vmatmul.bf16.gmra.mxu0 %v621
      %v824 = vpop.f32.mrf.mxu0
      %v825 = vadd.f32 %v776, %v824
      %v826 = vpop.f32.mrf.mxu0
      %v827 = vadd.f32 %v778, %v826
      %828 = vmatmul.bf16.gmra.mxu0 %v623
      %v829 = vpop.f32.mrf.mxu0
      %v830 = vadd.f32 %v781, %v829
      %v831 = vpop.f32.mrf.mxu0
      %v832 = vadd.f32 %v783, %v831
      %833 = vdwg.mxu0
      %v834 = vpack.c.bf16 %v795, %v795
      %v835 = vpack.c.bf16 %v797, %v797
      %v836 = vpack.c.bf16 %v800, %v800
      %v837 = vpack.c.bf16 %v802, %v802
      %v838 = vpack.c.bf16 %v805, %v805
      %v839 = vpack.c.bf16 %v807, %v807
      %v840 = vpack.c.bf16 %v810, %v810
      %v841 = vpack.c.bf16 %v812, %v812
      %v842 = vpack.c.bf16 %v815, %v815
      %v843 = vpack.c.bf16 %v817, %v817
      %v844 = vpack.c.bf16 %v820, %v820
      %v845 = vpack.c.bf16 %v822, %v822
      %v846 = vpack.c.bf16 %v825, %v825
      %v847 = vpack.c.bf16 %v827, %v827
      %v848 = vpack.c.bf16 %v830, %v830
      %v849 = vpack.c.bf16 %v832, %v832
      %v866 = vrot.slane %v834, 3
      %v867 = vrot.slane %v835, 3
      %v868 = vrot.slane %v836, 3
      %v869 = vrot.slane %v837, 3
      %v870 = vrot.slane %v838, 3
      %v871 = vrot.slane %v839, 3
      %v872 = vrot.slane %v840, 3
      %v873 = vrot.slane %v841, 3
      %v874 = vrot.slane %v842, 3
      %v875 = vrot.slane %v843, 3
      %v876 = vrot.slane %v844, 3
      %v877 = vrot.slane %v845, 3
      %v878 = vrot.slane %v846, 3
      %v879 = vrot.slane %v847, 3
      %v880 = vrot.slane %v848, 3
      %v881 = vrot.slane %v849, 3
      %vm882 = vcmask 1040384
      %v885 = vsel %vm882, %v834, %v866
      %vm887 = vcmask 1041409
      %v888 = vsel %vm887, %v834, %v866
      %v890 = vrot.slane %v888, 1
      %vm891 = vcmask 1042434
      %v892 = vsel %vm891, %v834, %v866
      %v894 = vrot.slane %v892, 2
      %vm895 = vcmask 1043459
      %v896 = vsel %vm895, %v834, %v866
      %v898 = vrot.slane %v896, 3
      %v901 = vsel %vm882, %v835, %v867
      %v903 = vsel %vm887, %v835, %v867
      %v905 = vrot.slane %v903, 1
      %v906 = vsel %vm891, %v835, %v867
      %v908 = vrot.slane %v906, 2
      %v909 = vsel %vm895, %v835, %v867
      %v911 = vrot.slane %v909, 3
      %v914 = vsel %vm882, %v836, %v868
      %v916 = vsel %vm887, %v836, %v868
      %v918 = vrot.slane %v916, 1
      %v919 = vsel %vm891, %v836, %v868
      %v921 = vrot.slane %v919, 2
      %v922 = vsel %vm895, %v836, %v868
      %v924 = vrot.slane %v922, 3
      %v927 = vsel %vm882, %v837, %v869
      %v929 = vsel %vm887, %v837, %v869
      %v931 = vrot.slane %v929, 1
      %v932 = vsel %vm891, %v837, %v869
      %v934 = vrot.slane %v932, 2
      %v935 = vsel %vm895, %v837, %v869
      %v937 = vrot.slane %v935, 3
      %v940 = vsel %vm882, %v838, %v870
      %v942 = vsel %vm887, %v838, %v870
      %v944 = vrot.slane %v942, 1
      %v945 = vsel %vm891, %v838, %v870
      %v947 = vrot.slane %v945, 2
      %v948 = vsel %vm895, %v838, %v870
      %v950 = vrot.slane %v948, 3
      %v953 = vsel %vm882, %v839, %v871
      %v955 = vsel %vm887, %v839, %v871
      %v957 = vrot.slane %v955, 1
      %v958 = vsel %vm891, %v839, %v871
      %v960 = vrot.slane %v958, 2
      %v961 = vsel %vm895, %v839, %v871
      %v963 = vrot.slane %v961, 3
      %v966 = vsel %vm882, %v840, %v872
      %v968 = vsel %vm887, %v840, %v872
      %v970 = vrot.slane %v968, 1
      %v971 = vsel %vm891, %v840, %v872
      %v973 = vrot.slane %v971, 2
      %v974 = vsel %vm895, %v840, %v872
      %v976 = vrot.slane %v974, 3
      %v979 = vsel %vm882, %v841, %v873
      %v981 = vsel %vm887, %v841, %v873
      %v983 = vrot.slane %v981, 1
      %v984 = vsel %vm891, %v841, %v873
      %v986 = vrot.slane %v984, 2
      %v987 = vsel %vm895, %v841, %v873
      %v989 = vrot.slane %v987, 3
      %v992 = vsel %vm882, %v842, %v874
      %v994 = vsel %vm887, %v842, %v874
      %v996 = vrot.slane %v994, 1
      %v997 = vsel %vm891, %v842, %v874
      %v999 = vrot.slane %v997, 2
      %v1000 = vsel %vm895, %v842, %v874
      %v1002 = vrot.slane %v1000, 3
      %v1005 = vsel %vm882, %v843, %v875
      %v1007 = vsel %vm887, %v843, %v875
      %v1009 = vrot.slane %v1007, 1
      %v1010 = vsel %vm891, %v843, %v875
      %v1012 = vrot.slane %v1010, 2
      %v1013 = vsel %vm895, %v843, %v875
      %v1015 = vrot.slane %v1013, 3
      %v1018 = vsel %vm882, %v844, %v876
      %v1020 = vsel %vm887, %v844, %v876
      %v1022 = vrot.slane %v1020, 1
      %v1023 = vsel %vm891, %v844, %v876
      %v1025 = vrot.slane %v1023, 2
      %v1026 = vsel %vm895, %v844, %v876
      %v1028 = vrot.slane %v1026, 3
      %v1031 = vsel %vm882, %v845, %v877
      %v1033 = vsel %vm887, %v845, %v877
      %v1035 = vrot.slane %v1033, 1
      %v1036 = vsel %vm891, %v845, %v877
      %v1038 = vrot.slane %v1036, 2
      %v1039 = vsel %vm895, %v845, %v877
      %v1041 = vrot.slane %v1039, 3
      %v1044 = vsel %vm882, %v846, %v878
      %v1046 = vsel %vm887, %v846, %v878
      %v1048 = vrot.slane %v1046, 1
      %v1049 = vsel %vm891, %v846, %v878
      %v1051 = vrot.slane %v1049, 2
      %v1052 = vsel %vm895, %v846, %v878
      %v1054 = vrot.slane %v1052, 3
      %v1057 = vsel %vm882, %v847, %v879
      %v1059 = vsel %vm887, %v847, %v879
      %v1061 = vrot.slane %v1059, 1
      %v1062 = vsel %vm891, %v847, %v879
      %v1064 = vrot.slane %v1062, 2
      %v1065 = vsel %vm895, %v847, %v879
      %v1067 = vrot.slane %v1065, 3
      %v1070 = vsel %vm882, %v848, %v880
      %v1072 = vsel %vm887, %v848, %v880
      %v1074 = vrot.slane %v1072, 1
      %v1075 = vsel %vm891, %v848, %v880
      %v1077 = vrot.slane %v1075, 2
      %v1078 = vsel %vm895, %v848, %v880
      %v1080 = vrot.slane %v1078, 3
      %v1083 = vsel %vm882, %v849, %v881
      %v1085 = vsel %vm887, %v849, %v881
      %v1087 = vrot.slane %v1085, 1
      %v1088 = vsel %vm891, %v849, %v881
      %v1090 = vrot.slane %v1088, 2
      %v1091 = vsel %vm895, %v849, %v881
      %v1093 = vrot.slane %v1091, 3
      %v1094 = vunpack.i.l.s16 %v885
      %v1095 = vunpack.i.h.s16 %v885
      %v1096 = vunpack.i.l.s16 %v890
      %v1097 = vunpack.i.h.s16 %v890
      %v1098 = vunpack.i.l.s16 %v894
      %v1099 = vunpack.i.h.s16 %v894
      %v1100 = vunpack.i.l.s16 %v898
      %v1101 = vunpack.i.h.s16 %v898
      %v1102 = vunpack.i.l.s16 %v901
      %v1103 = vunpack.i.h.s16 %v901
      %v1104 = vunpack.i.l.s16 %v905
      %v1105 = vunpack.i.h.s16 %v905
      %v1106 = vunpack.i.l.s16 %v908
      %v1107 = vunpack.i.h.s16 %v908
      %v1108 = vunpack.i.l.s16 %v911
      %v1109 = vunpack.i.h.s16 %v911
      %v1110 = vunpack.i.l.s16 %v914
      %v1111 = vunpack.i.h.s16 %v914
      %v1112 = vunpack.i.l.s16 %v918
      %v1113 = vunpack.i.h.s16 %v918
      %v1114 = vunpack.i.l.s16 %v921
      %v1115 = vunpack.i.h.s16 %v921
      %v1116 = vunpack.i.l.s16 %v924
      %v1117 = vunpack.i.h.s16 %v924
      %v1118 = vunpack.i.l.s16 %v927
      %v1119 = vunpack.i.h.s16 %v927
      %v1120 = vunpack.i.l.s16 %v931
      %v1121 = vunpack.i.h.s16 %v931
      %v1122 = vunpack.i.l.s16 %v934
      %v1123 = vunpack.i.h.s16 %v934
      %v1124 = vunpack.i.l.s16 %v937
      %v1125 = vunpack.i.h.s16 %v937
      %v1126 = vunpack.i.l.s16 %v940
      %v1127 = vunpack.i.h.s16 %v940
      %v1128 = vunpack.i.l.s16 %v944
      %v1129 = vunpack.i.h.s16 %v944
      %v1130 = vunpack.i.l.s16 %v947
      %v1131 = vunpack.i.h.s16 %v947
      %v1132 = vunpack.i.l.s16 %v950
      %v1133 = vunpack.i.h.s16 %v950
      %v1134 = vunpack.i.l.s16 %v953
      %v1135 = vunpack.i.h.s16 %v953
      %v1136 = vunpack.i.l.s16 %v957
      %v1137 = vunpack.i.h.s16 %v957
      %v1138 = vunpack.i.l.s16 %v960
      %v1139 = vunpack.i.h.s16 %v960
      %v1140 = vunpack.i.l.s16 %v963
      %v1141 = vunpack.i.h.s16 %v963
      %v1142 = vunpack.i.l.s16 %v966
      %v1143 = vunpack.i.h.s16 %v966
      %v1144 = vunpack.i.l.s16 %v970
      %v1145 = vunpack.i.h.s16 %v970
      %v1146 = vunpack.i.l.s16 %v973
      %v1147 = vunpack.i.h.s16 %v973
      %v1148 = vunpack.i.l.s16 %v976
      %v1149 = vunpack.i.h.s16 %v976
      %v1150 = vunpack.i.l.s16 %v979
      %v1151 = vunpack.i.h.s16 %v979
      %v1152 = vunpack.i.l.s16 %v983
      %v1153 = vunpack.i.h.s16 %v983
      %v1154 = vunpack.i.l.s16 %v986
      %v1155 = vunpack.i.h.s16 %v986
      %v1156 = vunpack.i.l.s16 %v989
      %v1157 = vunpack.i.h.s16 %v989
      %v1158 = vunpack.i.l.s16 %v992
      %v1159 = vunpack.i.h.s16 %v992
      %v1160 = vunpack.i.l.s16 %v996
      %v1161 = vunpack.i.h.s16 %v996
      %v1162 = vunpack.i.l.s16 %v999
      %v1163 = vunpack.i.h.s16 %v999
      %v1164 = vunpack.i.l.s16 %v1002
      %v1165 = vunpack.i.h.s16 %v1002
      %v1166 = vunpack.i.l.s16 %v1005
      %v1167 = vunpack.i.h.s16 %v1005
      %v1168 = vunpack.i.l.s16 %v1009
      %v1169 = vunpack.i.h.s16 %v1009
      %v1170 = vunpack.i.l.s16 %v1012
      %v1171 = vunpack.i.h.s16 %v1012
      %v1172 = vunpack.i.l.s16 %v1015
      %v1173 = vunpack.i.h.s16 %v1015
      %v1174 = vunpack.i.l.s16 %v1018
      %v1175 = vunpack.i.h.s16 %v1018
      %v1176 = vunpack.i.l.s16 %v1022
      %v1177 = vunpack.i.h.s16 %v1022
      %v1178 = vunpack.i.l.s16 %v1025
      %v1179 = vunpack.i.h.s16 %v1025
      %v1180 = vunpack.i.l.s16 %v1028
      %v1181 = vunpack.i.h.s16 %v1028
      %v1182 = vunpack.i.l.s16 %v1031
      %v1183 = vunpack.i.h.s16 %v1031
      %v1184 = vunpack.i.l.s16 %v1035
      %v1185 = vunpack.i.h.s16 %v1035
      %v1186 = vunpack.i.l.s16 %v1038
      %v1187 = vunpack.i.h.s16 %v1038
      %v1188 = vunpack.i.l.s16 %v1041
      %v1189 = vunpack.i.h.s16 %v1041
      %v1190 = vunpack.i.l.s16 %v1044
      %v1191 = vunpack.i.h.s16 %v1044
      %v1192 = vunpack.i.l.s16 %v1048
      %v1193 = vunpack.i.h.s16 %v1048
      %v1194 = vunpack.i.l.s16 %v1051
      %v1195 = vunpack.i.h.s16 %v1051
      %v1196 = vunpack.i.l.s16 %v1054
      %v1197 = vunpack.i.h.s16 %v1054
      %v1198 = vunpack.i.l.s16 %v1057
      %v1199 = vunpack.i.h.s16 %v1057
      %v1200 = vunpack.i.l.s16 %v1061
      %v1201 = vunpack.i.h.s16 %v1061
      %v1202 = vunpack.i.l.s16 %v1064
      %v1203 = vunpack.i.h.s16 %v1064
      %v1204 = vunpack.i.l.s16 %v1067
      %v1205 = vunpack.i.h.s16 %v1067
      %v1206 = vunpack.i.l.s16 %v1070
      %v1207 = vunpack.i.h.s16 %v1070
      %v1208 = vunpack.i.l.s16 %v1074
      %v1209 = vunpack.i.h.s16 %v1074
      %v1210 = vunpack.i.l.s16 %v1077
      %v1211 = vunpack.i.h.s16 %v1077
      %v1212 = vunpack.i.l.s16 %v1080
      %v1213 = vunpack.i.h.s16 %v1080
      %v1214 = vunpack.i.l.s16 %v1083
      %v1215 = vunpack.i.h.s16 %v1083
      %v1216 = vunpack.i.l.s16 %v1087
      %v1217 = vunpack.i.h.s16 %v1087
      %v1218 = vunpack.i.l.s16 %v1090
      %v1219 = vunpack.i.h.s16 %v1090
      %v1220 = vunpack.i.l.s16 %v1093
      %v1221 = vunpack.i.h.s16 %v1093
      %v1222 = vpack.i.b16 %v1094, %v1094
      %v1223 = vpack.i.b16 %v1095, %v1095
      %v1224 = vpack.i.b16 %v1096, %v1096
      %v1225 = vpack.i.b16 %v1097, %v1097
      %v1226 = vpack.i.b16 %v1098, %v1098
      %v1227 = vpack.i.b16 %v1099, %v1099
      %v1228 = vpack.i.b16 %v1100, %v1100
      %v1229 = vpack.i.b16 %v1101, %v1101
      %v1230 = vpack.i.b16 %v1102, %v1102
      %v1231 = vpack.i.b16 %v1103, %v1103
      %v1232 = vpack.i.b16 %v1104, %v1104
      %v1233 = vpack.i.b16 %v1105, %v1105
      %v1234 = vpack.i.b16 %v1106, %v1106
      %v1235 = vpack.i.b16 %v1107, %v1107
      %v1236 = vpack.i.b16 %v1108, %v1108
      %v1237 = vpack.i.b16 %v1109, %v1109
      %v1238 = vpack.i.b16 %v1110, %v1110
      %v1239 = vpack.i.b16 %v1111, %v1111
      %v1240 = vpack.i.b16 %v1112, %v1112
      %v1241 = vpack.i.b16 %v1113, %v1113
      %v1242 = vpack.i.b16 %v1114, %v1114
      %v1243 = vpack.i.b16 %v1115, %v1115
      %v1244 = vpack.i.b16 %v1116, %v1116
      %v1245 = vpack.i.b16 %v1117, %v1117
      %v1246 = vpack.i.b16 %v1118, %v1118
      %v1247 = vpack.i.b16 %v1119, %v1119
      %v1248 = vpack.i.b16 %v1120, %v1120
      %v1249 = vpack.i.b16 %v1121, %v1121
      %v1250 = vpack.i.b16 %v1122, %v1122
      %v1251 = vpack.i.b16 %v1123, %v1123
      %v1252 = vpack.i.b16 %v1124, %v1124
      %v1253 = vpack.i.b16 %v1125, %v1125
      %v1254 = vpack.i.b16 %v1126, %v1126
      %v1255 = vpack.i.b16 %v1127, %v1127
      %v1256 = vpack.i.b16 %v1128, %v1128
      %v1257 = vpack.i.b16 %v1129, %v1129
      %v1258 = vpack.i.b16 %v1130, %v1130
      %v1259 = vpack.i.b16 %v1131, %v1131
      %v1260 = vpack.i.b16 %v1132, %v1132
      %v1261 = vpack.i.b16 %v1133, %v1133
      %v1262 = vpack.i.b16 %v1134, %v1134
      %v1263 = vpack.i.b16 %v1135, %v1135
      %v1264 = vpack.i.b16 %v1136, %v1136
      %v1265 = vpack.i.b16 %v1137, %v1137
      %v1266 = vpack.i.b16 %v1138, %v1138
      %v1267 = vpack.i.b16 %v1139, %v1139
      %v1268 = vpack.i.b16 %v1140, %v1140
      %v1269 = vpack.i.b16 %v1141, %v1141
      %v1270 = vpack.i.b16 %v1142, %v1142
      %v1271 = vpack.i.b16 %v1143, %v1143
      %v1272 = vpack.i.b16 %v1144, %v1144
      %v1273 = vpack.i.b16 %v1145, %v1145
      %v1274 = vpack.i.b16 %v1146, %v1146
      %v1275 = vpack.i.b16 %v1147, %v1147
      %v1276 = vpack.i.b16 %v1148, %v1148
      %v1277 = vpack.i.b16 %v1149, %v1149
      %v1278 = vpack.i.b16 %v1150, %v1150
      %v1279 = vpack.i.b16 %v1151, %v1151
      %v1280 = vpack.i.b16 %v1152, %v1152
      %v1281 = vpack.i.b16 %v1153, %v1153
      %v1282 = vpack.i.b16 %v1154, %v1154
      %v1283 = vpack.i.b16 %v1155, %v1155
      %v1284 = vpack.i.b16 %v1156, %v1156
      %v1285 = vpack.i.b16 %v1157, %v1157
      %v1286 = vpack.i.b16 %v1158, %v1158
      %v1287 = vpack.i.b16 %v1159, %v1159
      %v1288 = vpack.i.b16 %v1160, %v1160
      %v1289 = vpack.i.b16 %v1161, %v1161
      %v1290 = vpack.i.b16 %v1162, %v1162
      %v1291 = vpack.i.b16 %v1163, %v1163
      %v1292 = vpack.i.b16 %v1164, %v1164
      %v1293 = vpack.i.b16 %v1165, %v1165
      %v1294 = vpack.i.b16 %v1166, %v1166
      %v1295 = vpack.i.b16 %v1167, %v1167
      %v1296 = vpack.i.b16 %v1168, %v1168
      %v1297 = vpack.i.b16 %v1169, %v1169
      %v1298 = vpack.i.b16 %v1170, %v1170
      %v1299 = vpack.i.b16 %v1171, %v1171
      %v1300 = vpack.i.b16 %v1172, %v1172
      %v1301 = vpack.i.b16 %v1173, %v1173
      %v1302 = vpack.i.b16 %v1174, %v1174
      %v1303 = vpack.i.b16 %v1175, %v1175
      %v1304 = vpack.i.b16 %v1176, %v1176
      %v1305 = vpack.i.b16 %v1177, %v1177
      %v1306 = vpack.i.b16 %v1178, %v1178
      %v1307 = vpack.i.b16 %v1179, %v1179
      %v1308 = vpack.i.b16 %v1180, %v1180
      %v1309 = vpack.i.b16 %v1181, %v1181
      %v1310 = vpack.i.b16 %v1182, %v1182
      %v1311 = vpack.i.b16 %v1183, %v1183
      %v1312 = vpack.i.b16 %v1184, %v1184
      %v1313 = vpack.i.b16 %v1185, %v1185
      %v1314 = vpack.i.b16 %v1186, %v1186
      %v1315 = vpack.i.b16 %v1187, %v1187
      %v1316 = vpack.i.b16 %v1188, %v1188
      %v1317 = vpack.i.b16 %v1189, %v1189
      %v1318 = vpack.i.b16 %v1190, %v1190
      %v1319 = vpack.i.b16 %v1191, %v1191
      %v1320 = vpack.i.b16 %v1192, %v1192
      %v1321 = vpack.i.b16 %v1193, %v1193
      %v1322 = vpack.i.b16 %v1194, %v1194
      %v1323 = vpack.i.b16 %v1195, %v1195
      %v1324 = vpack.i.b16 %v1196, %v1196
      %v1325 = vpack.i.b16 %v1197, %v1197
      %v1326 = vpack.i.b16 %v1198, %v1198
      %v1327 = vpack.i.b16 %v1199, %v1199
      %v1328 = vpack.i.b16 %v1200, %v1200
      %v1329 = vpack.i.b16 %v1201, %v1201
      %v1330 = vpack.i.b16 %v1202, %v1202
      %v1331 = vpack.i.b16 %v1203, %v1203
      %v1332 = vpack.i.b16 %v1204, %v1204
      %v1333 = vpack.i.b16 %v1205, %v1205
      %v1334 = vpack.i.b16 %v1206, %v1206
      %v1335 = vpack.i.b16 %v1207, %v1207
      %v1336 = vpack.i.b16 %v1208, %v1208
      %v1337 = vpack.i.b16 %v1209, %v1209
      %v1338 = vpack.i.b16 %v1210, %v1210
      %v1339 = vpack.i.b16 %v1211, %v1211
      %v1340 = vpack.i.b16 %v1212, %v1212
      %v1341 = vpack.i.b16 %v1213, %v1213
      %v1342 = vpack.i.b16 %v1214, %v1214
      %v1343 = vpack.i.b16 %v1215, %v1215
      %v1344 = vpack.i.b16 %v1216, %v1216
      %v1345 = vpack.i.b16 %v1217, %v1217
      %v1346 = vpack.i.b16 %v1218, %v1218
      %v1347 = vpack.i.b16 %v1219, %v1219
      %v1348 = vpack.i.b16 %v1220, %v1220
      %v1349 = vpack.i.b16 %v1221, %v1221
      %v1350 = vperm.slane %v1222, 0
      %v1351 = vperm.slane %v1223, 0
      %v1352 = vperm.slane %v1224, 0
      %v1353 = vperm.slane %v1225, 0
      %v1354 = vperm.slane %v1226, 0
      %v1355 = vperm.slane %v1227, 0
      %v1356 = vperm.slane %v1228, 0
      %v1357 = vperm.slane %v1229, 0
      %v1358 = vperm.slane %v1230, 0
      %v1359 = vperm.slane %v1231, 0
      %v1360 = vperm.slane %v1232, 0
      %v1361 = vperm.slane %v1233, 0
      %v1362 = vperm.slane %v1234, 0
      %v1363 = vperm.slane %v1235, 0
      %v1364 = vperm.slane %v1236, 0
      %v1365 = vperm.slane %v1237, 0
      %v1366 = vperm.slane %v1238, 0
      %v1367 = vperm.slane %v1239, 0
      %v1368 = vperm.slane %v1240, 0
      %v1369 = vperm.slane %v1241, 0
      %v1370 = vperm.slane %v1242, 0
      %v1371 = vperm.slane %v1243, 0
      %v1372 = vperm.slane %v1244, 0
      %v1373 = vperm.slane %v1245, 0
      %v1374 = vperm.slane %v1246, 0
      %v1375 = vperm.slane %v1247, 0
      %v1376 = vperm.slane %v1248, 0
      %v1377 = vperm.slane %v1249, 0
      %v1378 = vperm.slane %v1250, 0
      %v1379 = vperm.slane %v1251, 0
      %v1380 = vperm.slane %v1252, 0
      %v1381 = vperm.slane %v1253, 0
      %v1382 = vperm.slane %v1254, 0
      %v1383 = vperm.slane %v1255, 0
      %v1384 = vperm.slane %v1256, 0
      %v1385 = vperm.slane %v1257, 0
      %v1386 = vperm.slane %v1258, 0
      %v1387 = vperm.slane %v1259, 0
      %v1388 = vperm.slane %v1260, 0
      %v1389 = vperm.slane %v1261, 0
      %v1390 = vperm.slane %v1262, 0
      %v1391 = vperm.slane %v1263, 0
      %v1392 = vperm.slane %v1264, 0
      %v1393 = vperm.slane %v1265, 0
      %v1394 = vperm.slane %v1266, 0
      %v1395 = vperm.slane %v1267, 0
      %v1396 = vperm.slane %v1268, 0
      %v1397 = vperm.slane %v1269, 0
      %v1398 = vperm.slane %v1270, 0
      %v1399 = vperm.slane %v1271, 0
      %v1400 = vperm.slane %v1272, 0
      %v1401 = vperm.slane %v1273, 0
      %v1402 = vperm.slane %v1274, 0
      %v1403 = vperm.slane %v1275, 0
      %v1404 = vperm.slane %v1276, 0
      %v1405 = vperm.slane %v1277, 0
      %v1406 = vperm.slane %v1278, 0
      %v1407 = vperm.slane %v1279, 0
      %v1408 = vperm.slane %v1280, 0
      %v1409 = vperm.slane %v1281, 0
      %v1410 = vperm.slane %v1282, 0
      %v1411 = vperm.slane %v1283, 0
      %v1412 = vperm.slane %v1284, 0
      %v1413 = vperm.slane %v1285, 0
      %v1414 = vperm.slane %v1286, 0
      %v1415 = vperm.slane %v1287, 0
      %v1416 = vperm.slane %v1288, 0
      %v1417 = vperm.slane %v1289, 0
      %v1418 = vperm.slane %v1290, 0
      %v1419 = vperm.slane %v1291, 0
      %v1420 = vperm.slane %v1292, 0
      %v1421 = vperm.slane %v1293, 0
      %v1422 = vperm.slane %v1294, 0
      %v1423 = vperm.slane %v1295, 0
      %v1424 = vperm.slane %v1296, 0
      %v1425 = vperm.slane %v1297, 0
      %v1426 = vperm.slane %v1298, 0
      %v1427 = vperm.slane %v1299, 0
      %v1428 = vperm.slane %v1300, 0
      %v1429 = vperm.slane %v1301, 0
      %v1430 = vperm.slane %v1302, 0
      %v1431 = vperm.slane %v1303, 0
      %v1432 = vperm.slane %v1304, 0
      %v1433 = vperm.slane %v1305, 0
      %v1434 = vperm.slane %v1306, 0
      %v1435 = vperm.slane %v1307, 0
      %v1436 = vperm.slane %v1308, 0
      %v1437 = vperm.slane %v1309, 0
      %v1438 = vperm.slane %v1310, 0
      %v1439 = vperm.slane %v1311, 0
      %v1440 = vperm.slane %v1312, 0
      %v1441 = vperm.slane %v1313, 0
      %v1442 = vperm.slane %v1314, 0
      %v1443 = vperm.slane %v1315, 0
      %v1444 = vperm.slane %v1316, 0
      %v1445 = vperm.slane %v1317, 0
      %v1446 = vperm.slane %v1318, 0
      %v1447 = vperm.slane %v1319, 0
      %v1448 = vperm.slane %v1320, 0
      %v1449 = vperm.slane %v1321, 0
      %v1450 = vperm.slane %v1322, 0
      %v1451 = vperm.slane %v1323, 0
      %v1452 = vperm.slane %v1324, 0
      %v1453 = vperm.slane %v1325, 0
      %v1454 = vperm.slane %v1326, 0
      %v1455 = vperm.slane %v1327, 0
      %v1456 = vperm.slane %v1328, 0
      %v1457 = vperm.slane %v1329, 0
      %v1458 = vperm.slane %v1330, 0
      %v1459 = vperm.slane %v1331, 0
      %v1460 = vperm.slane %v1332, 0
      %v1461 = vperm.slane %v1333, 0
      %v1462 = vperm.slane %v1334, 0
      %v1463 = vperm.slane %v1335, 0
      %v1464 = vperm.slane %v1336, 0
      %v1465 = vperm.slane %v1337, 0
      %v1466 = vperm.slane %v1338, 0
      %v1467 = vperm.slane %v1339, 0
      %v1468 = vperm.slane %v1340, 0
      %v1469 = vperm.slane %v1341, 0
      %v1470 = vperm.slane %v1342, 0
      %v1471 = vperm.slane %v1343, 0
      %v1472 = vperm.slane %v1344, 0
      %v1473 = vperm.slane %v1345, 0
      %v1474 = vperm.slane %v1346, 0
      %v1475 = vperm.slane %v1347, 0
      %v1476 = vperm.slane %v1348, 0
      %v1477 = vperm.slane %v1349, 0
      %v1479 = vpack.i.b16 %v1350, %v1350
      %v1481 = vperm.slane %v1479, 0
      %v1483 = vpack.i.b16 %v1351, %v1351
      %v1485 = vperm.slane %v1483, 0
      %v1487 = vpack.i.b16 %v1352, %v1352
      %v1489 = vperm.slane %v1487, 0
      %v1491 = vpack.i.b16 %v1353, %v1353
      %v1493 = vperm.slane %v1491, 0
      %v1495 = vpack.i.b16 %v1354, %v1354
      %v1497 = vperm.slane %v1495, 0
      %v1499 = vpack.i.b16 %v1355, %v1355
      %v1501 = vperm.slane %v1499, 0
      %v1503 = vpack.i.b16 %v1356, %v1356
      %v1505 = vperm.slane %v1503, 0
      %v1507 = vpack.i.b16 %v1357, %v1357
      %v1509 = vperm.slane %v1507, 0
      %v1511 = vpack.i.b16 %v1358, %v1358
      %v1513 = vperm.slane %v1511, 0
      %v1515 = vpack.i.b16 %v1359, %v1359
      %v1517 = vperm.slane %v1515, 0
      %v1519 = vpack.i.b16 %v1360, %v1360
      %v1521 = vperm.slane %v1519, 0
      %v1523 = vpack.i.b16 %v1361, %v1361
      %v1525 = vperm.slane %v1523, 0
      %v1527 = vpack.i.b16 %v1362, %v1362
      %v1529 = vperm.slane %v1527, 0
      %v1531 = vpack.i.b16 %v1363, %v1363
      %v1533 = vperm.slane %v1531, 0
      %v1535 = vpack.i.b16 %v1364, %v1364
      %v1537 = vperm.slane %v1535, 0
      %v1539 = vpack.i.b16 %v1365, %v1365
      %v1541 = vperm.slane %v1539, 0
      %v1543 = vpack.i.b16 %v1366, %v1366
      %v1545 = vperm.slane %v1543, 0
      %v1547 = vpack.i.b16 %v1367, %v1367
      %v1549 = vperm.slane %v1547, 0
      %v1551 = vpack.i.b16 %v1368, %v1368
      %v1553 = vperm.slane %v1551, 0
      %v1555 = vpack.i.b16 %v1369, %v1369
      %v1557 = vperm.slane %v1555, 0
      %v1559 = vpack.i.b16 %v1370, %v1370
      %v1561 = vperm.slane %v1559, 0
      %v1563 = vpack.i.b16 %v1371, %v1371
      %v1565 = vperm.slane %v1563, 0
      %v1567 = vpack.i.b16 %v1372, %v1372
      %v1569 = vperm.slane %v1567, 0
      %v1571 = vpack.i.b16 %v1373, %v1373
      %v1573 = vperm.slane %v1571, 0
      %v1575 = vpack.i.b16 %v1374, %v1374
      %v1577 = vperm.slane %v1575, 0
      %v1579 = vpack.i.b16 %v1375, %v1375
      %v1581 = vperm.slane %v1579, 0
      %v1583 = vpack.i.b16 %v1376, %v1376
      %v1585 = vperm.slane %v1583, 0
      %v1587 = vpack.i.b16 %v1377, %v1377
      %v1589 = vperm.slane %v1587, 0
      %v1591 = vpack.i.b16 %v1378, %v1378
      %v1593 = vperm.slane %v1591, 0
      %v1595 = vpack.i.b16 %v1379, %v1379
      %v1597 = vperm.slane %v1595, 0
      %v1599 = vpack.i.b16 %v1380, %v1380
      %v1601 = vperm.slane %v1599, 0
      %v1603 = vpack.i.b16 %v1381, %v1381
      %v1605 = vperm.slane %v1603, 0
      %v1607 = vpack.i.b16 %v1382, %v1382
      %v1609 = vperm.slane %v1607, 0
      %v1611 = vpack.i.b16 %v1383, %v1383
      %v1613 = vperm.slane %v1611, 0
      %v1615 = vpack.i.b16 %v1384, %v1384
      %v1617 = vperm.slane %v1615, 0
      %v1619 = vpack.i.b16 %v1385, %v1385
      %v1621 = vperm.slane %v1619, 0
      %v1623 = vpack.i.b16 %v1386, %v1386
      %v1625 = vperm.slane %v1623, 0
      %v1627 = vpack.i.b16 %v1387, %v1387
      %v1629 = vperm.slane %v1627, 0
      %v1631 = vpack.i.b16 %v1388, %v1388
      %v1633 = vperm.slane %v1631, 0
      %v1635 = vpack.i.b16 %v1389, %v1389
      %v1637 = vperm.slane %v1635, 0
      %v1639 = vpack.i.b16 %v1390, %v1390
      %v1641 = vperm.slane %v1639, 0
      %v1643 = vpack.i.b16 %v1391, %v1391
      %v1645 = vperm.slane %v1643, 0
      %v1647 = vpack.i.b16 %v1392, %v1392
      %v1649 = vperm.slane %v1647, 0
      %v1651 = vpack.i.b16 %v1393, %v1393
      %v1653 = vperm.slane %v1651, 0
      %v1655 = vpack.i.b16 %v1394, %v1394
      %v1657 = vperm.slane %v1655, 0
      %v1659 = vpack.i.b16 %v1395, %v1395
      %v1661 = vperm.slane %v1659, 0
      %v1663 = vpack.i.b16 %v1396, %v1396
      %v1665 = vperm.slane %v1663, 0
      %v1667 = vpack.i.b16 %v1397, %v1397
      %v1669 = vperm.slane %v1667, 0
      %v1671 = vpack.i.b16 %v1398, %v1398
      %v1673 = vperm.slane %v1671, 0
      %v1675 = vpack.i.b16 %v1399, %v1399
      %v1677 = vperm.slane %v1675, 0
      %v1679 = vpack.i.b16 %v1400, %v1400
      %v1681 = vperm.slane %v1679, 0
      %v1683 = vpack.i.b16 %v1401, %v1401
      %v1685 = vperm.slane %v1683, 0
      %v1687 = vpack.i.b16 %v1402, %v1402
      %v1689 = vperm.slane %v1687, 0
      %v1691 = vpack.i.b16 %v1403, %v1403
      %v1693 = vperm.slane %v1691, 0
      %v1695 = vpack.i.b16 %v1404, %v1404
      %v1697 = vperm.slane %v1695, 0
      %v1699 = vpack.i.b16 %v1405, %v1405
      %v1701 = vperm.slane %v1699, 0
      %v1703 = vpack.i.b16 %v1406, %v1406
      %v1705 = vperm.slane %v1703, 0
      %v1707 = vpack.i.b16 %v1407, %v1407
      %v1709 = vperm.slane %v1707, 0
      %v1711 = vpack.i.b16 %v1408, %v1408
      %v1713 = vperm.slane %v1711, 0
      %v1715 = vpack.i.b16 %v1409, %v1409
      %v1717 = vperm.slane %v1715, 0
      %v1719 = vpack.i.b16 %v1410, %v1410
      %v1721 = vperm.slane %v1719, 0
      %v1723 = vpack.i.b16 %v1411, %v1411
      %v1725 = vperm.slane %v1723, 0
      %v1727 = vpack.i.b16 %v1412, %v1412
      %v1729 = vperm.slane %v1727, 0
      %v1731 = vpack.i.b16 %v1413, %v1413
      %v1733 = vperm.slane %v1731, 0
      %v1735 = vpack.i.b16 %v1414, %v1414
      %v1737 = vperm.slane %v1735, 0
      %v1739 = vpack.i.b16 %v1415, %v1415
      %v1741 = vperm.slane %v1739, 0
      %v1743 = vpack.i.b16 %v1416, %v1416
      %v1745 = vperm.slane %v1743, 0
      %v1747 = vpack.i.b16 %v1417, %v1417
      %v1749 = vperm.slane %v1747, 0
      %v1751 = vpack.i.b16 %v1418, %v1418
      %v1753 = vperm.slane %v1751, 0
      %v1755 = vpack.i.b16 %v1419, %v1419
      %v1757 = vperm.slane %v1755, 0
      %v1759 = vpack.i.b16 %v1420, %v1420
      %v1761 = vperm.slane %v1759, 0
      %v1763 = vpack.i.b16 %v1421, %v1421
      %v1765 = vperm.slane %v1763, 0
      %v1767 = vpack.i.b16 %v1422, %v1422
      %v1769 = vperm.slane %v1767, 0
      %v1771 = vpack.i.b16 %v1423, %v1423
      %v1773 = vperm.slane %v1771, 0
      %v1775 = vpack.i.b16 %v1424, %v1424
      %v1777 = vperm.slane %v1775, 0
      %v1779 = vpack.i.b16 %v1425, %v1425
      %v1781 = vperm.slane %v1779, 0
      %v1783 = vpack.i.b16 %v1426, %v1426
      %v1785 = vperm.slane %v1783, 0
      %v1787 = vpack.i.b16 %v1427, %v1427
      %v1789 = vperm.slane %v1787, 0
      %v1791 = vpack.i.b16 %v1428, %v1428
      %v1793 = vperm.slane %v1791, 0
      %v1795 = vpack.i.b16 %v1429, %v1429
      %v1797 = vperm.slane %v1795, 0
      %v1799 = vpack.i.b16 %v1430, %v1430
      %v1801 = vperm.slane %v1799, 0
      %v1803 = vpack.i.b16 %v1431, %v1431
      %v1805 = vperm.slane %v1803, 0
      %v1807 = vpack.i.b16 %v1432, %v1432
      %v1809 = vperm.slane %v1807, 0
      %v1811 = vpack.i.b16 %v1433, %v1433
      %v1813 = vperm.slane %v1811, 0
      %v1815 = vpack.i.b16 %v1434, %v1434
      %v1817 = vperm.slane %v1815, 0
      %v1819 = vpack.i.b16 %v1435, %v1435
      %v1821 = vperm.slane %v1819, 0
      %v1823 = vpack.i.b16 %v1436, %v1436
      %v1825 = vperm.slane %v1823, 0
      %v1827 = vpack.i.b16 %v1437, %v1437
      %v1829 = vperm.slane %v1827, 0
      %v1831 = vpack.i.b16 %v1438, %v1438
      %v1833 = vperm.slane %v1831, 0
      %v1835 = vpack.i.b16 %v1439, %v1439
      %v1837 = vperm.slane %v1835, 0
      %v1839 = vpack.i.b16 %v1440, %v1440
      %v1841 = vperm.slane %v1839, 0
      %v1843 = vpack.i.b16 %v1441, %v1441
      %v1845 = vperm.slane %v1843, 0
      %v1847 = vpack.i.b16 %v1442, %v1442
      %v1849 = vperm.slane %v1847, 0
      %v1851 = vpack.i.b16 %v1443, %v1443
      %v1853 = vperm.slane %v1851, 0
      %v1855 = vpack.i.b16 %v1444, %v1444
      %v1857 = vperm.slane %v1855, 0
      %v1859 = vpack.i.b16 %v1445, %v1445
      %v1861 = vperm.slane %v1859, 0
      %v1863 = vpack.i.b16 %v1446, %v1446
      %v1865 = vperm.slane %v1863, 0
      %v1867 = vpack.i.b16 %v1447, %v1447
      %v1869 = vperm.slane %v1867, 0
      %v1871 = vpack.i.b16 %v1448, %v1448
      %v1873 = vperm.slane %v1871, 0
      %v1875 = vpack.i.b16 %v1449, %v1449
      %v1877 = vperm.slane %v1875, 0
      %v1879 = vpack.i.b16 %v1450, %v1450
      %v1881 = vperm.slane %v1879, 0
      %v1883 = vpack.i.b16 %v1451, %v1451
      %v1885 = vperm.slane %v1883, 0
      %v1887 = vpack.i.b16 %v1452, %v1452
      %v1889 = vperm.slane %v1887, 0
      %v1891 = vpack.i.b16 %v1453, %v1453
      %v1893 = vperm.slane %v1891, 0
      %v1895 = vpack.i.b16 %v1454, %v1454
      %v1897 = vperm.slane %v1895, 0
      %v1899 = vpack.i.b16 %v1455, %v1455
      %v1901 = vperm.slane %v1899, 0
      %v1903 = vpack.i.b16 %v1456, %v1456
      %v1905 = vperm.slane %v1903, 0
      %v1907 = vpack.i.b16 %v1457, %v1457
      %v1909 = vperm.slane %v1907, 0
      %v1911 = vpack.i.b16 %v1458, %v1458
      %v1913 = vperm.slane %v1911, 0
      %v1915 = vpack.i.b16 %v1459, %v1459
      %v1917 = vperm.slane %v1915, 0
      %v1919 = vpack.i.b16 %v1460, %v1460
      %v1921 = vperm.slane %v1919, 0
      %v1923 = vpack.i.b16 %v1461, %v1461
      %v1925 = vperm.slane %v1923, 0
      %v1927 = vpack.i.b16 %v1462, %v1462
      %v1929 = vperm.slane %v1927, 0
      %v1931 = vpack.i.b16 %v1463, %v1463
      %v1933 = vperm.slane %v1931, 0
      %v1935 = vpack.i.b16 %v1464, %v1464
      %v1937 = vperm.slane %v1935, 0
      %v1939 = vpack.i.b16 %v1465, %v1465
      %v1941 = vperm.slane %v1939, 0
      %v1943 = vpack.i.b16 %v1466, %v1466
      %v1945 = vperm.slane %v1943, 0
      %v1947 = vpack.i.b16 %v1467, %v1467
      %v1949 = vperm.slane %v1947, 0
      %v1951 = vpack.i.b16 %v1468, %v1468
      %v1953 = vperm.slane %v1951, 0
      %v1955 = vpack.i.b16 %v1469, %v1469
      %v1957 = vperm.slane %v1955, 0
      %v1959 = vpack.i.b16 %v1470, %v1470
      %v1961 = vperm.slane %v1959, 0
      %v1963 = vpack.i.b16 %v1471, %v1471
      %v1965 = vperm.slane %v1963, 0
      %v1967 = vpack.i.b16 %v1472, %v1472
      %v1969 = vperm.slane %v1967, 0
      %v1971 = vpack.i.b16 %v1473, %v1473
      %v1973 = vperm.slane %v1971, 0
      %v1975 = vpack.i.b16 %v1474, %v1474
      %v1977 = vperm.slane %v1975, 0
      %v1979 = vpack.i.b16 %v1475, %v1475
      %v1981 = vperm.slane %v1979, 0
      %v1983 = vpack.i.b16 %v1476, %v1476
      %v1985 = vperm.slane %v1983, 0
      %v1987 = vpack.i.b16 %v1477, %v1477
      %v1989 = vperm.slane %v1987, 0
      %v1990 = vunpack.c.l.bf16 %v1481
      %v1991 = vunpack.c.l.bf16 %v1485
      %v1992 = vunpack.c.l.bf16 %v1489
      %v1993 = vunpack.c.l.bf16 %v1493
      %v1994 = vunpack.c.l.bf16 %v1497
      %v1995 = vunpack.c.l.bf16 %v1501
      %v1996 = vunpack.c.l.bf16 %v1505
      %v1997 = vunpack.c.l.bf16 %v1509
      %v1998 = vunpack.c.l.bf16 %v1513
      %v1999 = vunpack.c.l.bf16 %v1517
      %v2000 = vunpack.c.l.bf16 %v1521
      %v2001 = vunpack.c.l.bf16 %v1525
      %v2002 = vunpack.c.l.bf16 %v1529
      %v2003 = vunpack.c.l.bf16 %v1533
      %v2004 = vunpack.c.l.bf16 %v1537
      %v2005 = vunpack.c.l.bf16 %v1541
      %v2006 = vunpack.c.l.bf16 %v1545
      %v2007 = vunpack.c.l.bf16 %v1549
      %v2008 = vunpack.c.l.bf16 %v1553
      %v2009 = vunpack.c.l.bf16 %v1557
      %v2010 = vunpack.c.l.bf16 %v1561
      %v2011 = vunpack.c.l.bf16 %v1565
      %v2012 = vunpack.c.l.bf16 %v1569
      %v2013 = vunpack.c.l.bf16 %v1573
      %v2014 = vunpack.c.l.bf16 %v1577
      %v2015 = vunpack.c.l.bf16 %v1581
      %v2016 = vunpack.c.l.bf16 %v1585
      %v2017 = vunpack.c.l.bf16 %v1589
      %v2018 = vunpack.c.l.bf16 %v1593
      %v2019 = vunpack.c.l.bf16 %v1597
      %v2020 = vunpack.c.l.bf16 %v1601
      %v2021 = vunpack.c.l.bf16 %v1605
      %v2022 = vunpack.c.l.bf16 %v1609
      %v2023 = vunpack.c.l.bf16 %v1613
      %v2024 = vunpack.c.l.bf16 %v1617
      %v2025 = vunpack.c.l.bf16 %v1621
      %v2026 = vunpack.c.l.bf16 %v1625
      %v2027 = vunpack.c.l.bf16 %v1629
      %v2028 = vunpack.c.l.bf16 %v1633
      %v2029 = vunpack.c.l.bf16 %v1637
      %v2030 = vunpack.c.l.bf16 %v1641
      %v2031 = vunpack.c.l.bf16 %v1645
      %v2032 = vunpack.c.l.bf16 %v1649
      %v2033 = vunpack.c.l.bf16 %v1653
      %v2034 = vunpack.c.l.bf16 %v1657
      %v2035 = vunpack.c.l.bf16 %v1661
      %v2036 = vunpack.c.l.bf16 %v1665
      %v2037 = vunpack.c.l.bf16 %v1669
      %v2038 = vunpack.c.l.bf16 %v1673
      %v2039 = vunpack.c.l.bf16 %v1677
      %v2040 = vunpack.c.l.bf16 %v1681
      %v2041 = vunpack.c.l.bf16 %v1685
      %v2042 = vunpack.c.l.bf16 %v1689
      %v2043 = vunpack.c.l.bf16 %v1693
      %v2044 = vunpack.c.l.bf16 %v1697
      %v2045 = vunpack.c.l.bf16 %v1701
      %v2046 = vunpack.c.l.bf16 %v1705
      %v2047 = vunpack.c.l.bf16 %v1709
      %v2048 = vunpack.c.l.bf16 %v1713
      %v2049 = vunpack.c.l.bf16 %v1717
      %v2050 = vunpack.c.l.bf16 %v1721
      %v2051 = vunpack.c.l.bf16 %v1725
      %v2052 = vunpack.c.l.bf16 %v1729
      %v2053 = vunpack.c.l.bf16 %v1733
      %v2054 = vunpack.c.l.bf16 %v1737
      %v2055 = vunpack.c.l.bf16 %v1741
      %v2056 = vunpack.c.l.bf16 %v1745
      %v2057 = vunpack.c.l.bf16 %v1749
      %v2058 = vunpack.c.l.bf16 %v1753
      %v2059 = vunpack.c.l.bf16 %v1757
      %v2060 = vunpack.c.l.bf16 %v1761
      %v2061 = vunpack.c.l.bf16 %v1765
      %v2062 = vunpack.c.l.bf16 %v1769
      %v2063 = vunpack.c.l.bf16 %v1773
      %v2064 = vunpack.c.l.bf16 %v1777
      %v2065 = vunpack.c.l.bf16 %v1781
      %v2066 = vunpack.c.l.bf16 %v1785
      %v2067 = vunpack.c.l.bf16 %v1789
      %v2068 = vunpack.c.l.bf16 %v1793
      %v2069 = vunpack.c.l.bf16 %v1797
      %v2070 = vunpack.c.l.bf16 %v1801
      %v2071 = vunpack.c.l.bf16 %v1805
      %v2072 = vunpack.c.l.bf16 %v1809
      %v2073 = vunpack.c.l.bf16 %v1813
      %v2074 = vunpack.c.l.bf16 %v1817
      %v2075 = vunpack.c.l.bf16 %v1821
      %v2076 = vunpack.c.l.bf16 %v1825
      %v2077 = vunpack.c.l.bf16 %v1829
      %v2078 = vunpack.c.l.bf16 %v1833
      %v2079 = vunpack.c.l.bf16 %v1837
      %v2080 = vunpack.c.l.bf16 %v1841
      %v2081 = vunpack.c.l.bf16 %v1845
      %v2082 = vunpack.c.l.bf16 %v1849
      %v2083 = vunpack.c.l.bf16 %v1853
      %v2084 = vunpack.c.l.bf16 %v1857
      %v2085 = vunpack.c.l.bf16 %v1861
      %v2086 = vunpack.c.l.bf16 %v1865
      %v2087 = vunpack.c.l.bf16 %v1869
      %v2088 = vunpack.c.l.bf16 %v1873
      %v2089 = vunpack.c.l.bf16 %v1877
      %v2090 = vunpack.c.l.bf16 %v1881
      %v2091 = vunpack.c.l.bf16 %v1885
      %v2092 = vunpack.c.l.bf16 %v1889
      %v2093 = vunpack.c.l.bf16 %v1893
      %v2094 = vunpack.c.l.bf16 %v1897
      %v2095 = vunpack.c.l.bf16 %v1901
      %v2096 = vunpack.c.l.bf16 %v1905
      %v2097 = vunpack.c.l.bf16 %v1909
      %v2098 = vunpack.c.l.bf16 %v1913
      %v2099 = vunpack.c.l.bf16 %v1917
      %v2100 = vunpack.c.l.bf16 %v1921
      %v2101 = vunpack.c.l.bf16 %v1925
      %v2102 = vunpack.c.l.bf16 %v1929
      %v2103 = vunpack.c.l.bf16 %v1933
      %v2104 = vunpack.c.l.bf16 %v1937
      %v2105 = vunpack.c.l.bf16 %v1941
      %v2106 = vunpack.c.l.bf16 %v1945
      %v2107 = vunpack.c.l.bf16 %v1949
      %v2108 = vunpack.c.l.bf16 %v1953
      %v2109 = vunpack.c.l.bf16 %v1957
      %v2110 = vunpack.c.l.bf16 %v1961
      %v2111 = vunpack.c.l.bf16 %v1965
      %v2112 = vunpack.c.l.bf16 %v1969
      %v2113 = vunpack.c.l.bf16 %v1973
      %v2114 = vunpack.c.l.bf16 %v1977
      %v2115 = vunpack.c.l.bf16 %v1981
      %v2116 = vunpack.c.l.bf16 %v1985
      %v2117 = vunpack.c.l.bf16 %v1989
      %v2118 = vunpack.c.l.bf16 %v834
      %v2119 = vunpack.c.l.bf16 %v835
      %v2120 = vunpack.c.l.bf16 %v836
      %v2121 = vunpack.c.l.bf16 %v837
      %v2122 = vunpack.c.l.bf16 %v838
      %v2123 = vunpack.c.l.bf16 %v839
      %v2124 = vunpack.c.l.bf16 %v840
      %v2125 = vunpack.c.l.bf16 %v841
      %v2126 = vunpack.c.l.bf16 %v842
      %v2127 = vunpack.c.l.bf16 %v843
      %v2128 = vunpack.c.l.bf16 %v844
      %v2129 = vunpack.c.l.bf16 %v845
      %v2130 = vunpack.c.l.bf16 %v846
      %v2131 = vunpack.c.l.bf16 %v847
      %v2132 = vunpack.c.l.bf16 %v848
      %v2133 = vunpack.c.l.bf16 %v849
      %v2134 = vadd.f32 %v1990, %v2118
      %v2135 = vadd.f32 %v1991, %v2118
      %v2136 = vadd.f32 %v1992, %v2118
      %v2137 = vadd.f32 %v1993, %v2118
      %v2138 = vadd.f32 %v1994, %v2118
      %v2139 = vadd.f32 %v1995, %v2118
      %v2140 = vadd.f32 %v1996, %v2118
      %v2141 = vadd.f32 %v1997, %v2118
      %v2142 = vadd.f32 %v1998, %v2119
      %v2143 = vadd.f32 %v1999, %v2119
      %v2144 = vadd.f32 %v2000, %v2119
      %v2145 = vadd.f32 %v2001, %v2119
      %v2146 = vadd.f32 %v2002, %v2119
      %v2147 = vadd.f32 %v2003, %v2119
      %v2148 = vadd.f32 %v2004, %v2119
      %v2149 = vadd.f32 %v2005, %v2119
      %v2150 = vadd.f32 %v2006, %v2120
      %v2151 = vadd.f32 %v2007, %v2120
      %v2152 = vadd.f32 %v2008, %v2120
      %v2153 = vadd.f32 %v2009, %v2120
      %v2154 = vadd.f32 %v2010, %v2120
      %v2155 = vadd.f32 %v2011, %v2120
      %v2156 = vadd.f32 %v2012, %v2120
      %v2157 = vadd.f32 %v2013, %v2120
      %v2158 = vadd.f32 %v2014, %v2121
      %v2159 = vadd.f32 %v2015, %v2121
      %v2160 = vadd.f32 %v2016, %v2121
      %v2161 = vadd.f32 %v2017, %v2121
      %v2162 = vadd.f32 %v2018, %v2121
      %v2163 = vadd.f32 %v2019, %v2121
      %v2164 = vadd.f32 %v2020, %v2121
      %v2165 = vadd.f32 %v2021, %v2121
      %v2166 = vadd.f32 %v2022, %v2122
      %v2167 = vadd.f32 %v2023, %v2122
      %v2168 = vadd.f32 %v2024, %v2122
      %v2169 = vadd.f32 %v2025, %v2122
      %v2170 = vadd.f32 %v2026, %v2122
      %v2171 = vadd.f32 %v2027, %v2122
      %v2172 = vadd.f32 %v2028, %v2122
      %v2173 = vadd.f32 %v2029, %v2122
      %v2174 = vadd.f32 %v2030, %v2123
      %v2175 = vadd.f32 %v2031, %v2123
      %v2176 = vadd.f32 %v2032, %v2123
      %v2177 = vadd.f32 %v2033, %v2123
      %v2178 = vadd.f32 %v2034, %v2123
      %v2179 = vadd.f32 %v2035, %v2123
      %v2180 = vadd.f32 %v2036, %v2123
      %v2181 = vadd.f32 %v2037, %v2123
      %v2182 = vadd.f32 %v2038, %v2124
      %v2183 = vadd.f32 %v2039, %v2124
      %v2184 = vadd.f32 %v2040, %v2124
      %v2185 = vadd.f32 %v2041, %v2124
      %v2186 = vadd.f32 %v2042, %v2124
      %v2187 = vadd.f32 %v2043, %v2124
      %v2188 = vadd.f32 %v2044, %v2124
      %v2189 = vadd.f32 %v2045, %v2124
      %v2190 = vadd.f32 %v2046, %v2125
      %v2191 = vadd.f32 %v2047, %v2125
      %v2192 = vadd.f32 %v2048, %v2125
      %v2193 = vadd.f32 %v2049, %v2125
      %v2194 = vadd.f32 %v2050, %v2125
      %v2195 = vadd.f32 %v2051, %v2125
      %v2196 = vadd.f32 %v2052, %v2125
      %v2197 = vadd.f32 %v2053, %v2125
      %v2198 = vadd.f32 %v2054, %v2126
      %v2199 = vadd.f32 %v2055, %v2126
      %v2200 = vadd.f32 %v2056, %v2126
      %v2201 = vadd.f32 %v2057, %v2126
      %v2202 = vadd.f32 %v2058, %v2126
      %v2203 = vadd.f32 %v2059, %v2126
      %v2204 = vadd.f32 %v2060, %v2126
      %v2205 = vadd.f32 %v2061, %v2126
      %v2206 = vadd.f32 %v2062, %v2127
      %v2207 = vadd.f32 %v2063, %v2127
      %v2208 = vadd.f32 %v2064, %v2127
      %v2209 = vadd.f32 %v2065, %v2127
      %v2210 = vadd.f32 %v2066, %v2127
      %v2211 = vadd.f32 %v2067, %v2127
      %v2212 = vadd.f32 %v2068, %v2127
      %v2213 = vadd.f32 %v2069, %v2127
      %v2214 = vadd.f32 %v2070, %v2128
      %v2215 = vadd.f32 %v2071, %v2128
      %v2216 = vadd.f32 %v2072, %v2128
      %v2217 = vadd.f32 %v2073, %v2128
      %v2218 = vadd.f32 %v2074, %v2128
      %v2219 = vadd.f32 %v2075, %v2128
      %v2220 = vadd.f32 %v2076, %v2128
      %v2221 = vadd.f32 %v2077, %v2128
      %v2222 = vadd.f32 %v2078, %v2129
      %v2223 = vadd.f32 %v2079, %v2129
      %v2224 = vadd.f32 %v2080, %v2129
      %v2225 = vadd.f32 %v2081, %v2129
      %v2226 = vadd.f32 %v2082, %v2129
      %v2227 = vadd.f32 %v2083, %v2129
      %v2228 = vadd.f32 %v2084, %v2129
      %v2229 = vadd.f32 %v2085, %v2129
      %v2230 = vadd.f32 %v2086, %v2130
      %v2231 = vadd.f32 %v2087, %v2130
      %v2232 = vadd.f32 %v2088, %v2130
      %v2233 = vadd.f32 %v2089, %v2130
      %v2234 = vadd.f32 %v2090, %v2130
      %v2235 = vadd.f32 %v2091, %v2130
      %v2236 = vadd.f32 %v2092, %v2130
      %v2237 = vadd.f32 %v2093, %v2130
      %v2238 = vadd.f32 %v2094, %v2131
      %v2239 = vadd.f32 %v2095, %v2131
      %v2240 = vadd.f32 %v2096, %v2131
      %v2241 = vadd.f32 %v2097, %v2131
      %v2242 = vadd.f32 %v2098, %v2131
      %v2243 = vadd.f32 %v2099, %v2131
      %v2244 = vadd.f32 %v2100, %v2131
      %v2245 = vadd.f32 %v2101, %v2131
      %v2246 = vadd.f32 %v2102, %v2132
      %v2247 = vadd.f32 %v2103, %v2132
      %v2248 = vadd.f32 %v2104, %v2132
      %v2249 = vadd.f32 %v2105, %v2132
      %v2250 = vadd.f32 %v2106, %v2132
      %v2251 = vadd.f32 %v2107, %v2132
      %v2252 = vadd.f32 %v2108, %v2132
      %v2253 = vadd.f32 %v2109, %v2132
      %v2254 = vadd.f32 %v2110, %v2133
      %v2255 = vadd.f32 %v2111, %v2133
      %v2256 = vadd.f32 %v2112, %v2133
      %v2257 = vadd.f32 %v2113, %v2133
      %v2258 = vadd.f32 %v2114, %v2133
      %v2259 = vadd.f32 %v2115, %v2133
      %v2260 = vadd.f32 %v2116, %v2133
      %v2261 = vadd.f32 %v2117, %v2133
      %v2262 = vpack.c.bf16 %v2134, %v2134
      %v2263 = vpack.c.bf16 %v2135, %v2135
      %v2264 = vpack.c.bf16 %v2136, %v2136
      %v2265 = vpack.c.bf16 %v2137, %v2137
      %v2266 = vpack.c.bf16 %v2138, %v2138
      %v2267 = vpack.c.bf16 %v2139, %v2139
      %v2268 = vpack.c.bf16 %v2140, %v2140
      %v2269 = vpack.c.bf16 %v2141, %v2141
      %v2270 = vpack.c.bf16 %v2142, %v2142
      %v2271 = vpack.c.bf16 %v2143, %v2143
      %v2272 = vpack.c.bf16 %v2144, %v2144
      %v2273 = vpack.c.bf16 %v2145, %v2145
      %v2274 = vpack.c.bf16 %v2146, %v2146
      %v2275 = vpack.c.bf16 %v2147, %v2147
      %v2276 = vpack.c.bf16 %v2148, %v2148
      %v2277 = vpack.c.bf16 %v2149, %v2149
      %v2278 = vpack.c.bf16 %v2150, %v2150
      %v2279 = vpack.c.bf16 %v2151, %v2151
      %v2280 = vpack.c.bf16 %v2152, %v2152
      %v2281 = vpack.c.bf16 %v2153, %v2153
      %v2282 = vpack.c.bf16 %v2154, %v2154
      %v2283 = vpack.c.bf16 %v2155, %v2155
      %v2284 = vpack.c.bf16 %v2156, %v2156
      %v2285 = vpack.c.bf16 %v2157, %v2157
      %v2286 = vpack.c.bf16 %v2158, %v2158
      %v2287 = vpack.c.bf16 %v2159, %v2159
      %v2288 = vpack.c.bf16 %v2160, %v2160
      %v2289 = vpack.c.bf16 %v2161, %v2161
      %v2290 = vpack.c.bf16 %v2162, %v2162
      %v2291 = vpack.c.bf16 %v2163, %v2163
      %v2292 = vpack.c.bf16 %v2164, %v2164
      %v2293 = vpack.c.bf16 %v2165, %v2165
      %v2294 = vpack.c.bf16 %v2166, %v2166
      %v2295 = vpack.c.bf16 %v2167, %v2167
      %v2296 = vpack.c.bf16 %v2168, %v2168
      %v2297 = vpack.c.bf16 %v2169, %v2169
      %v2298 = vpack.c.bf16 %v2170, %v2170
      %v2299 = vpack.c.bf16 %v2171, %v2171
      %v2300 = vpack.c.bf16 %v2172, %v2172
      %v2301 = vpack.c.bf16 %v2173, %v2173
      %v2302 = vpack.c.bf16 %v2174, %v2174
      %v2303 = vpack.c.bf16 %v2175, %v2175
      %v2304 = vpack.c.bf16 %v2176, %v2176
      %v2305 = vpack.c.bf16 %v2177, %v2177
      %v2306 = vpack.c.bf16 %v2178, %v2178
      %v2307 = vpack.c.bf16 %v2179, %v2179
      %v2308 = vpack.c.bf16 %v2180, %v2180
      %v2309 = vpack.c.bf16 %v2181, %v2181
      %v2310 = vpack.c.bf16 %v2182, %v2182
      %v2311 = vpack.c.bf16 %v2183, %v2183
      %v2312 = vpack.c.bf16 %v2184, %v2184
      %v2313 = vpack.c.bf16 %v2185, %v2185
      %v2314 = vpack.c.bf16 %v2186, %v2186
      %v2315 = vpack.c.bf16 %v2187, %v2187
      %v2316 = vpack.c.bf16 %v2188, %v2188
      %v2317 = vpack.c.bf16 %v2189, %v2189
      %v2318 = vpack.c.bf16 %v2190, %v2190
      %v2319 = vpack.c.bf16 %v2191, %v2191
      %v2320 = vpack.c.bf16 %v2192, %v2192
      %v2321 = vpack.c.bf16 %v2193, %v2193
      %v2322 = vpack.c.bf16 %v2194, %v2194
      %v2323 = vpack.c.bf16 %v2195, %v2195
      %v2324 = vpack.c.bf16 %v2196, %v2196
      %v2325 = vpack.c.bf16 %v2197, %v2197
      %v2326 = vpack.c.bf16 %v2198, %v2198
      %v2327 = vpack.c.bf16 %v2199, %v2199
      %v2328 = vpack.c.bf16 %v2200, %v2200
      %v2329 = vpack.c.bf16 %v2201, %v2201
      %v2330 = vpack.c.bf16 %v2202, %v2202
      %v2331 = vpack.c.bf16 %v2203, %v2203
      %v2332 = vpack.c.bf16 %v2204, %v2204
      %v2333 = vpack.c.bf16 %v2205, %v2205
      %v2334 = vpack.c.bf16 %v2206, %v2206
      %v2335 = vpack.c.bf16 %v2207, %v2207
      %v2336 = vpack.c.bf16 %v2208, %v2208
      %v2337 = vpack.c.bf16 %v2209, %v2209
      %v2338 = vpack.c.bf16 %v2210, %v2210
      %v2339 = vpack.c.bf16 %v2211, %v2211
      %v2340 = vpack.c.bf16 %v2212, %v2212
      %v2341 = vpack.c.bf16 %v2213, %v2213
      %v2342 = vpack.c.bf16 %v2214, %v2214
      %v2343 = vpack.c.bf16 %v2215, %v2215
      %v2344 = vpack.c.bf16 %v2216, %v2216
      %v2345 = vpack.c.bf16 %v2217, %v2217
      %v2346 = vpack.c.bf16 %v2218, %v2218
      %v2347 = vpack.c.bf16 %v2219, %v2219
      %v2348 = vpack.c.bf16 %v2220, %v2220
      %v2349 = vpack.c.bf16 %v2221, %v2221
      %v2350 = vpack.c.bf16 %v2222, %v2222
      %v2351 = vpack.c.bf16 %v2223, %v2223
      %v2352 = vpack.c.bf16 %v2224, %v2224
      %v2353 = vpack.c.bf16 %v2225, %v2225
      %v2354 = vpack.c.bf16 %v2226, %v2226
      %v2355 = vpack.c.bf16 %v2227, %v2227
      %v2356 = vpack.c.bf16 %v2228, %v2228
      %v2357 = vpack.c.bf16 %v2229, %v2229
      %v2358 = vpack.c.bf16 %v2230, %v2230
      %v2359 = vpack.c.bf16 %v2231, %v2231
      %v2360 = vpack.c.bf16 %v2232, %v2232
      %v2361 = vpack.c.bf16 %v2233, %v2233
      %v2362 = vpack.c.bf16 %v2234, %v2234
      %v2363 = vpack.c.bf16 %v2235, %v2235
      %v2364 = vpack.c.bf16 %v2236, %v2236
      %v2365 = vpack.c.bf16 %v2237, %v2237
      %v2366 = vpack.c.bf16 %v2238, %v2238
      %v2367 = vpack.c.bf16 %v2239, %v2239
      %v2368 = vpack.c.bf16 %v2240, %v2240
      %v2369 = vpack.c.bf16 %v2241, %v2241
      %v2370 = vpack.c.bf16 %v2242, %v2242
      %v2371 = vpack.c.bf16 %v2243, %v2243
      %v2372 = vpack.c.bf16 %v2244, %v2244
      %v2373 = vpack.c.bf16 %v2245, %v2245
      %v2374 = vpack.c.bf16 %v2246, %v2246
      %v2375 = vpack.c.bf16 %v2247, %v2247
      %v2376 = vpack.c.bf16 %v2248, %v2248
      %v2377 = vpack.c.bf16 %v2249, %v2249
      %v2378 = vpack.c.bf16 %v2250, %v2250
      %v2379 = vpack.c.bf16 %v2251, %v2251
      %v2380 = vpack.c.bf16 %v2252, %v2252
      %v2381 = vpack.c.bf16 %v2253, %v2253
      %v2382 = vpack.c.bf16 %v2254, %v2254
      %v2383 = vpack.c.bf16 %v2255, %v2255
      %v2384 = vpack.c.bf16 %v2256, %v2256
      %v2385 = vpack.c.bf16 %v2257, %v2257
      %v2386 = vpack.c.bf16 %v2258, %v2258
      %v2387 = vpack.c.bf16 %v2259, %v2259
      %v2388 = vpack.c.bf16 %v2260, %v2260
      %v2389 = vpack.c.bf16 %v2261, %v2261
      %v2390 = vunpack.c.l.bf16 %v2262
      %v2391 = vunpack.c.l.bf16 %v2263
      %v2392 = vunpack.c.l.bf16 %v2264
      %v2393 = vunpack.c.l.bf16 %v2265
      %v2394 = vunpack.c.l.bf16 %v2266
      %v2395 = vunpack.c.l.bf16 %v2267
      %v2396 = vunpack.c.l.bf16 %v2268
      %v2397 = vunpack.c.l.bf16 %v2269
      %v2398 = vunpack.c.l.bf16 %v2270
      %v2399 = vunpack.c.l.bf16 %v2271
      %v2400 = vunpack.c.l.bf16 %v2272
      %v2401 = vunpack.c.l.bf16 %v2273
      %v2402 = vunpack.c.l.bf16 %v2274
      %v2403 = vunpack.c.l.bf16 %v2275
      %v2404 = vunpack.c.l.bf16 %v2276
      %v2405 = vunpack.c.l.bf16 %v2277
      %v2406 = vunpack.c.l.bf16 %v2278
      %v2407 = vunpack.c.l.bf16 %v2279
      %v2408 = vunpack.c.l.bf16 %v2280
      %v2409 = vunpack.c.l.bf16 %v2281
      %v2410 = vunpack.c.l.bf16 %v2282
      %v2411 = vunpack.c.l.bf16 %v2283
      %v2412 = vunpack.c.l.bf16 %v2284
      %v2413 = vunpack.c.l.bf16 %v2285
      %v2414 = vunpack.c.l.bf16 %v2286
      %v2415 = vunpack.c.l.bf16 %v2287
      %v2416 = vunpack.c.l.bf16 %v2288
      %v2417 = vunpack.c.l.bf16 %v2289
      %v2418 = vunpack.c.l.bf16 %v2290
      %v2419 = vunpack.c.l.bf16 %v2291
      %v2420 = vunpack.c.l.bf16 %v2292
      %v2421 = vunpack.c.l.bf16 %v2293
      %v2422 = vunpack.c.l.bf16 %v2294
      %v2423 = vunpack.c.l.bf16 %v2295
      %v2424 = vunpack.c.l.bf16 %v2296
      %v2425 = vunpack.c.l.bf16 %v2297
      %v2426 = vunpack.c.l.bf16 %v2298
      %v2427 = vunpack.c.l.bf16 %v2299
      %v2428 = vunpack.c.l.bf16 %v2300
      %v2429 = vunpack.c.l.bf16 %v2301
      %v2430 = vunpack.c.l.bf16 %v2302
      %v2431 = vunpack.c.l.bf16 %v2303
      %v2432 = vunpack.c.l.bf16 %v2304
      %v2433 = vunpack.c.l.bf16 %v2305
      %v2434 = vunpack.c.l.bf16 %v2306
      %v2435 = vunpack.c.l.bf16 %v2307
      %v2436 = vunpack.c.l.bf16 %v2308
      %v2437 = vunpack.c.l.bf16 %v2309
      %v2438 = vunpack.c.l.bf16 %v2310
      %v2439 = vunpack.c.l.bf16 %v2311
      %v2440 = vunpack.c.l.bf16 %v2312
      %v2441 = vunpack.c.l.bf16 %v2313
      %v2442 = vunpack.c.l.bf16 %v2314
      %v2443 = vunpack.c.l.bf16 %v2315
      %v2444 = vunpack.c.l.bf16 %v2316
      %v2445 = vunpack.c.l.bf16 %v2317
      %v2446 = vunpack.c.l.bf16 %v2318
      %v2447 = vunpack.c.l.bf16 %v2319
      %v2448 = vunpack.c.l.bf16 %v2320
      %v2449 = vunpack.c.l.bf16 %v2321
      %v2450 = vunpack.c.l.bf16 %v2322
      %v2451 = vunpack.c.l.bf16 %v2323
      %v2452 = vunpack.c.l.bf16 %v2324
      %v2453 = vunpack.c.l.bf16 %v2325
      %v2454 = vunpack.c.l.bf16 %v2326
      %v2455 = vunpack.c.l.bf16 %v2327
      %v2456 = vunpack.c.l.bf16 %v2328
      %v2457 = vunpack.c.l.bf16 %v2329
      %v2458 = vunpack.c.l.bf16 %v2330
      %v2459 = vunpack.c.l.bf16 %v2331
      %v2460 = vunpack.c.l.bf16 %v2332
      %v2461 = vunpack.c.l.bf16 %v2333
      %v2462 = vunpack.c.l.bf16 %v2334
      %v2463 = vunpack.c.l.bf16 %v2335
      %v2464 = vunpack.c.l.bf16 %v2336
      %v2465 = vunpack.c.l.bf16 %v2337
      %v2466 = vunpack.c.l.bf16 %v2338
      %v2467 = vunpack.c.l.bf16 %v2339
      %v2468 = vunpack.c.l.bf16 %v2340
      %v2469 = vunpack.c.l.bf16 %v2341
      %v2470 = vunpack.c.l.bf16 %v2342
      %v2471 = vunpack.c.l.bf16 %v2343
      %v2472 = vunpack.c.l.bf16 %v2344
      %v2473 = vunpack.c.l.bf16 %v2345
      %v2474 = vunpack.c.l.bf16 %v2346
      %v2475 = vunpack.c.l.bf16 %v2347
      %v2476 = vunpack.c.l.bf16 %v2348
      %v2477 = vunpack.c.l.bf16 %v2349
      %v2478 = vunpack.c.l.bf16 %v2350
      %v2479 = vunpack.c.l.bf16 %v2351
      %v2480 = vunpack.c.l.bf16 %v2352
      %v2481 = vunpack.c.l.bf16 %v2353
      %v2482 = vunpack.c.l.bf16 %v2354
      %v2483 = vunpack.c.l.bf16 %v2355
      %v2484 = vunpack.c.l.bf16 %v2356
      %v2485 = vunpack.c.l.bf16 %v2357
      %v2486 = vunpack.c.l.bf16 %v2358
      %v2487 = vunpack.c.l.bf16 %v2359
      %v2488 = vunpack.c.l.bf16 %v2360
      %v2489 = vunpack.c.l.bf16 %v2361
      %v2490 = vunpack.c.l.bf16 %v2362
      %v2491 = vunpack.c.l.bf16 %v2363
      %v2492 = vunpack.c.l.bf16 %v2364
      %v2493 = vunpack.c.l.bf16 %v2365
      %v2494 = vunpack.c.l.bf16 %v2366
      %v2495 = vunpack.c.l.bf16 %v2367
      %v2496 = vunpack.c.l.bf16 %v2368
      %v2497 = vunpack.c.l.bf16 %v2369
      %v2498 = vunpack.c.l.bf16 %v2370
      %v2499 = vunpack.c.l.bf16 %v2371
      %v2500 = vunpack.c.l.bf16 %v2372
      %v2501 = vunpack.c.l.bf16 %v2373
      %v2502 = vunpack.c.l.bf16 %v2374
      %v2503 = vunpack.c.l.bf16 %v2375
      %v2504 = vunpack.c.l.bf16 %v2376
      %v2505 = vunpack.c.l.bf16 %v2377
      %v2506 = vunpack.c.l.bf16 %v2378
      %v2507 = vunpack.c.l.bf16 %v2379
      %v2508 = vunpack.c.l.bf16 %v2380
      %v2509 = vunpack.c.l.bf16 %v2381
      %v2510 = vunpack.c.l.bf16 %v2382
      %v2511 = vunpack.c.l.bf16 %v2383
      %v2512 = vunpack.c.l.bf16 %v2384
      %v2513 = vunpack.c.l.bf16 %v2385
      %v2514 = vunpack.c.l.bf16 %v2386
      %v2515 = vunpack.c.l.bf16 %v2387
      %v2516 = vunpack.c.l.bf16 %v2388
      %v2517 = vunpack.c.l.bf16 %v2389
      %v2518 = vmax.f32 %v2390, 0.0
      %v2519 = vmax.f32 %v2391, 0.0
      %v2520 = vmax.f32 %v2392, 0.0
      %v2521 = vmax.f32 %v2393, 0.0
      %v2522 = vmax.f32 %v2394, 0.0
      %v2523 = vmax.f32 %v2395, 0.0
      %v2524 = vmax.f32 %v2396, 0.0
      %v2525 = vmax.f32 %v2397, 0.0
      %v2526 = vmax.f32 %v2398, 0.0
      %v2527 = vmax.f32 %v2399, 0.0
      %v2528 = vmax.f32 %v2400, 0.0
      %v2529 = vmax.f32 %v2401, 0.0
      %v2530 = vmax.f32 %v2402, 0.0
      %v2531 = vmax.f32 %v2403, 0.0
      %v2532 = vmax.f32 %v2404, 0.0
      %v2533 = vmax.f32 %v2405, 0.0
      %v2534 = vmax.f32 %v2406, 0.0
      %v2535 = vmax.f32 %v2407, 0.0
      %v2536 = vmax.f32 %v2408, 0.0
      %v2537 = vmax.f32 %v2409, 0.0
      %v2538 = vmax.f32 %v2410, 0.0
      %v2539 = vmax.f32 %v2411, 0.0
      %v2540 = vmax.f32 %v2412, 0.0
      %v2541 = vmax.f32 %v2413, 0.0
      %v2542 = vmax.f32 %v2414, 0.0
      %v2543 = vmax.f32 %v2415, 0.0
      %v2544 = vmax.f32 %v2416, 0.0
      %v2545 = vmax.f32 %v2417, 0.0
      %v2546 = vmax.f32 %v2418, 0.0
      %v2547 = vmax.f32 %v2419, 0.0
      %v2548 = vmax.f32 %v2420, 0.0
      %v2549 = vmax.f32 %v2421, 0.0
      %v2550 = vmax.f32 %v2422, 0.0
      %v2551 = vmax.f32 %v2423, 0.0
      %v2552 = vmax.f32 %v2424, 0.0
      %v2553 = vmax.f32 %v2425, 0.0
      %v2554 = vmax.f32 %v2426, 0.0
      %v2555 = vmax.f32 %v2427, 0.0
      %v2556 = vmax.f32 %v2428, 0.0
      %v2557 = vmax.f32 %v2429, 0.0
      %v2558 = vmax.f32 %v2430, 0.0
      %v2559 = vmax.f32 %v2431, 0.0
      %v2560 = vmax.f32 %v2432, 0.0
      %v2561 = vmax.f32 %v2433, 0.0
      %v2562 = vmax.f32 %v2434, 0.0
      %v2563 = vmax.f32 %v2435, 0.0
      %v2564 = vmax.f32 %v2436, 0.0
      %v2565 = vmax.f32 %v2437, 0.0
      %v2566 = vmax.f32 %v2438, 0.0
      %v2567 = vmax.f32 %v2439, 0.0
      %v2568 = vmax.f32 %v2440, 0.0
      %v2569 = vmax.f32 %v2441, 0.0
      %v2570 = vmax.f32 %v2442, 0.0
      %v2571 = vmax.f32 %v2443, 0.0
      %v2572 = vmax.f32 %v2444, 0.0
      %v2573 = vmax.f32 %v2445, 0.0
      %v2574 = vmax.f32 %v2446, 0.0
      %v2575 = vmax.f32 %v2447, 0.0
      %v2576 = vmax.f32 %v2448, 0.0
      %v2577 = vmax.f32 %v2449, 0.0
      %v2578 = vmax.f32 %v2450, 0.0
      %v2579 = vmax.f32 %v2451, 0.0
      %v2580 = vmax.f32 %v2452, 0.0
      %v2581 = vmax.f32 %v2453, 0.0
      %v2582 = vmax.f32 %v2454, 0.0
      %v2583 = vmax.f32 %v2455, 0.0
      %v2584 = vmax.f32 %v2456, 0.0
      %v2585 = vmax.f32 %v2457, 0.0
      %v2586 = vmax.f32 %v2458, 0.0
      %v2587 = vmax.f32 %v2459, 0.0
      %v2588 = vmax.f32 %v2460, 0.0
      %v2589 = vmax.f32 %v2461, 0.0
      %v2590 = vmax.f32 %v2462, 0.0
      %v2591 = vmax.f32 %v2463, 0.0
      %v2592 = vmax.f32 %v2464, 0.0
      %v2593 = vmax.f32 %v2465, 0.0
      %v2594 = vmax.f32 %v2466, 0.0
      %v2595 = vmax.f32 %v2467, 0.0
      %v2596 = vmax.f32 %v2468, 0.0
      %v2597 = vmax.f32 %v2469, 0.0
      %v2598 = vmax.f32 %v2470, 0.0
      %v2599 = vmax.f32 %v2471, 0.0
      %v2600 = vmax.f32 %v2472, 0.0
      %v2601 = vmax.f32 %v2473, 0.0
      %v2602 = vmax.f32 %v2474, 0.0
      %v2603 = vmax.f32 %v2475, 0.0
      %v2604 = vmax.f32 %v2476, 0.0
      %v2605 = vmax.f32 %v2477, 0.0
      %v2606 = vmax.f32 %v2478, 0.0
      %v2607 = vmax.f32 %v2479, 0.0
      %v2608 = vmax.f32 %v2480, 0.0
      %v2609 = vmax.f32 %v2481, 0.0
      %v2610 = vmax.f32 %v2482, 0.0
      %v2611 = vmax.f32 %v2483, 0.0
      %v2612 = vmax.f32 %v2484, 0.0
      %v2613 = vmax.f32 %v2485, 0.0
      %v2614 = vmax.f32 %v2486, 0.0
      %v2615 = vmax.f32 %v2487, 0.0
      %v2616 = vmax.f32 %v2488, 0.0
      %v2617 = vmax.f32 %v2489, 0.0
      %v2618 = vmax.f32 %v2490, 0.0
      %v2619 = vmax.f32 %v2491, 0.0
      %v2620 = vmax.f32 %v2492, 0.0
      %v2621 = vmax.f32 %v2493, 0.0
      %v2622 = vmax.f32 %v2494, 0.0
      %v2623 = vmax.f32 %v2495, 0.0
      %v2624 = vmax.f32 %v2496, 0.0
      %v2625 = vmax.f32 %v2497, 0.0
      %v2626 = vmax.f32 %v2498, 0.0
      %v2627 = vmax.f32 %v2499, 0.0
      %v2628 = vmax.f32 %v2500, 0.0
      %v2629 = vmax.f32 %v2501, 0.0
      %v2630 = vmax.f32 %v2502, 0.0
      %v2631 = vmax.f32 %v2503, 0.0
      %v2632 = vmax.f32 %v2504, 0.0
      %v2633 = vmax.f32 %v2505, 0.0
      %v2634 = vmax.f32 %v2506, 0.0
      %v2635 = vmax.f32 %v2507, 0.0
      %v2636 = vmax.f32 %v2508, 0.0
      %v2637 = vmax.f32 %v2509, 0.0
      %v2638 = vmax.f32 %v2510, 0.0
      %v2639 = vmax.f32 %v2511, 0.0
      %v2640 = vmax.f32 %v2512, 0.0
      %v2641 = vmax.f32 %v2513, 0.0
      %v2642 = vmax.f32 %v2514, 0.0
      %v2643 = vmax.f32 %v2515, 0.0
      %v2644 = vmax.f32 %v2516, 0.0
      %v2645 = vmax.f32 %v2517, 0.0
      %v2646 = vpack.c.bf16 %v2519, %v2518
      %v2647 = vpack.c.bf16 %v2521, %v2520
      %v2648 = vpack.c.bf16 %v2523, %v2522
      %v2649 = vpack.c.bf16 %v2525, %v2524
      %v2650 = vpack.c.bf16 %v2527, %v2526
      %v2651 = vpack.c.bf16 %v2529, %v2528
      %v2652 = vpack.c.bf16 %v2531, %v2530
      %v2653 = vpack.c.bf16 %v2533, %v2532
      %v2654 = vpack.c.bf16 %v2535, %v2534
      %v2655 = vpack.c.bf16 %v2537, %v2536
      %v2656 = vpack.c.bf16 %v2539, %v2538
      %v2657 = vpack.c.bf16 %v2541, %v2540
      %v2658 = vpack.c.bf16 %v2543, %v2542
      %v2659 = vpack.c.bf16 %v2545, %v2544
      %v2660 = vpack.c.bf16 %v2547, %v2546
      %v2661 = vpack.c.bf16 %v2549, %v2548
      %v2662 = vpack.c.bf16 %v2551, %v2550
      %v2663 = vpack.c.bf16 %v2553, %v2552
      %v2664 = vpack.c.bf16 %v2555, %v2554
      %v2665 = vpack.c.bf16 %v2557, %v2556
      %v2666 = vpack.c.bf16 %v2559, %v2558
      %v2667 = vpack.c.bf16 %v2561, %v2560
      %v2668 = vpack.c.bf16 %v2563, %v2562
      %v2669 = vpack.c.bf16 %v2565, %v2564
      %v2670 = vpack.c.bf16 %v2567, %v2566
      %v2671 = vpack.c.bf16 %v2569, %v2568
      %v2672 = vpack.c.bf16 %v2571, %v2570
      %v2673 = vpack.c.bf16 %v2573, %v2572
      %v2674 = vpack.c.bf16 %v2575, %v2574
      %v2675 = vpack.c.bf16 %v2577, %v2576
      %v2676 = vpack.c.bf16 %v2579, %v2578
      %v2677 = vpack.c.bf16 %v2581, %v2580
      %v2678 = vpack.c.bf16 %v2583, %v2582
      %v2679 = vpack.c.bf16 %v2585, %v2584
      %v2680 = vpack.c.bf16 %v2587, %v2586
      %v2681 = vpack.c.bf16 %v2589, %v2588
      %v2682 = vpack.c.bf16 %v2591, %v2590
      %v2683 = vpack.c.bf16 %v2593, %v2592
      %v2684 = vpack.c.bf16 %v2595, %v2594
      %v2685 = vpack.c.bf16 %v2597, %v2596
      %v2686 = vpack.c.bf16 %v2599, %v2598
      %v2687 = vpack.c.bf16 %v2601, %v2600
      %v2688 = vpack.c.bf16 %v2603, %v2602
      %v2689 = vpack.c.bf16 %v2605, %v2604
      %v2690 = vpack.c.bf16 %v2607, %v2606
      %v2691 = vpack.c.bf16 %v2609, %v2608
      %v2692 = vpack.c.bf16 %v2611, %v2610
      %v2693 = vpack.c.bf16 %v2613, %v2612
      %v2694 = vpack.c.bf16 %v2615, %v2614
      %v2695 = vpack.c.bf16 %v2617, %v2616
      %v2696 = vpack.c.bf16 %v2619, %v2618
      %v2697 = vpack.c.bf16 %v2621, %v2620
      %v2698 = vpack.c.bf16 %v2623, %v2622
      %v2699 = vpack.c.bf16 %v2625, %v2624
      %v2700 = vpack.c.bf16 %v2627, %v2626
      %v2701 = vpack.c.bf16 %v2629, %v2628
      %v2702 = vpack.c.bf16 %v2631, %v2630
      %v2703 = vpack.c.bf16 %v2633, %v2632
      %v2704 = vpack.c.bf16 %v2635, %v2634
      %v2705 = vpack.c.bf16 %v2637, %v2636
      %v2706 = vpack.c.bf16 %v2639, %v2638
      %v2707 = vpack.c.bf16 %v2641, %v2640
      %v2708 = vpack.c.bf16 %v2643, %v2642
      %v2709 = vpack.c.bf16 %v2645, %v2644
      %v2710 = vld [vmem:[%s6] sm:$0xf]
      %v2711 = vld [vmem:[%s6 + $0x4] sm:$0xf]
      %v2712 = vld [vmem:[%s6 + $0x8] sm:$0xf]
      %v2713 = vld [vmem:[%s6 + $0xc] sm:$0xf]
      %v2714 = vld [vmem:[%s6 + $0x10] sm:$0xf]
      %v2715 = vld [vmem:[%s6 + $0x14] sm:$0xf]
      %v2716 = vld [vmem:[%s6 + $0x18] sm:$0xf]
      %v2717 = vld [vmem:[%s6 + $0x1c] sm:$0xf]
      %v2718 = vld [vmem:[%s6 + $0x20] sm:$0xf]
      %v2719 = vld [vmem:[%s6 + $0x24] sm:$0xf]
      %v2720 = vld [vmem:[%s6 + $0x28] sm:$0xf]
      %v2721 = vld [vmem:[%s6 + $0x2c] sm:$0xf]
      %v2722 = vld [vmem:[%s6 + $0x30] sm:$0xf]
      %v2723 = vld [vmem:[%s6 + $0x34] sm:$0xf]
      %v2724 = vld [vmem:[%s6 + $0x38] sm:$0xf]
      %v2725 = vld [vmem:[%s6 + $0x3c] sm:$0xf]
      %v2726 = vld [vmem:[%s7] sm:$0x1]
      %v2728 = vperm.slane %v2726, 0
      %v2746 = vunpack.c.l.b16 %v2710
      %v2747 = vunpack.c.l.b16 %v2711
      %v2748 = vunpack.c.l.b16 %v2712
      %v2749 = vunpack.c.l.b16 %v2713
      %v2750 = vunpack.c.l.b16 %v2714
      %v2751 = vunpack.c.l.b16 %v2715
      %v2752 = vunpack.c.l.b16 %v2716
      %v2753 = vunpack.c.l.b16 %v2717
      %v2754 = vunpack.c.l.b16 %v2718
      %v2755 = vunpack.c.l.b16 %v2719
      %v2756 = vunpack.c.l.b16 %v2720
      %v2757 = vunpack.c.l.b16 %v2721
      %v2758 = vunpack.c.l.b16 %v2722
      %v2759 = vunpack.c.l.b16 %v2723
      %v2760 = vunpack.c.l.b16 %v2724
      %v2761 = vunpack.c.l.b16 %v2725
      %v2762 = vpack.c.b16 %v2747, %v2746
      %v2763 = vpack.c.b16 %v2749, %v2748
      %v2764 = vpack.c.b16 %v2751, %v2750
      %v2765 = vpack.c.b16 %v2753, %v2752
      %v2766 = vpack.c.b16 %v2755, %v2754
      %v2767 = vpack.c.b16 %v2757, %v2756
      %v2768 = vpack.c.b16 %v2759, %v2758
      %v2769 = vpack.c.b16 %v2761, %v2760
      %2778 = vmatpush.bf16.msra.mxu0 %v2769
      %2779 = vmatpush.bf16.msra.mxu0 %v2768
      %2780 = vmatpush.bf16.msra.mxu0 %v2767
      %2781 = vmatpush.bf16.msra.mxu0 %v2766
      %2782 = vmatpush.bf16.msra.mxu0 %v2765
      %2783 = vmatpush.bf16.msra.mxu0 %v2764
      %2784 = vmatpush.bf16.msra.mxu0 %v2763
      %2785 = vmatpush.bf16.msra.mxu0 %v2762
      %2786 = vmatmul.bf16.gmra.mxu0 %v2646
      %v2787 = vpop.f32.mrf.mxu0
      %v2788 = vadd.f32 %v2728, %v2787
      %v2789 = vpop.f32.mrf.mxu0
      %v2790 = vadd.f32 %v2728, %v2789
      %2791 = vmatmul.bf16.gmra.mxu0 %v2647
      %v2792 = vpop.f32.mrf.mxu0
      %v2793 = vadd.f32 %v2728, %v2792
      %v2794 = vpop.f32.mrf.mxu0
      %v2795 = vadd.f32 %v2728, %v2794
      %2796 = vmatmul.bf16.gmra.mxu0 %v2648
      %v2797 = vpop.f32.mrf.mxu0
      %v2798 = vadd.f32 %v2728, %v2797
      %v2799 = vpop.f32.mrf.mxu0
      %v2800 = vadd.f32 %v2728, %v2799
      %2801 = vmatmul.bf16.gmra.mxu0 %v2649
      %v2802 = vpop.f32.mrf.mxu0
      %v2803 = vadd.f32 %v2728, %v2802
      %v2804 = vpop.f32.mrf.mxu0
      %v2805 = vadd.f32 %v2728, %v2804
      %2806 = vmatmul.bf16.gmra.mxu0 %v2650
      %v2807 = vpop.f32.mrf.mxu0
      %v2808 = vadd.f32 %v2728, %v2807
      %v2809 = vpop.f32.mrf.mxu0
      %v2810 = vadd.f32 %v2728, %v2809
      %2811 = vmatmul.bf16.gmra.mxu0 %v2651
      %v2812 = vpop.f32.mrf.mxu0
      %v2813 = vadd.f32 %v2728, %v2812
      %v2814 = vpop.f32.mrf.mxu0
      %v2815 = vadd.f32 %v2728, %v2814
      %2816 = vmatmul.bf16.gmra.mxu0 %v2652
      %v2817 = vpop.f32.mrf.mxu0
      %v2818 = vadd.f32 %v2728, %v2817
      %v2819 = vpop.f32.mrf.mxu0
      %v2820 = vadd.f32 %v2728, %v2819
      %2821 = vmatmul.bf16.gmra.mxu0 %v2653
      %v2822 = vpop.f32.mrf.mxu0
      %v2823 = vadd.f32 %v2728, %v2822
      %v2824 = vpop.f32.mrf.mxu0
      %v2825 = vadd.f32 %v2728, %v2824
      %2826 = vmatmul.bf16.gmra.mxu0 %v2654
      %v2827 = vpop.f32.mrf.mxu0
      %v2828 = vadd.f32 %v2728, %v2827
      %v2829 = vpop.f32.mrf.mxu0
      %v2830 = vadd.f32 %v2728, %v2829
      %2831 = vmatmul.bf16.gmra.mxu0 %v2655
      %v2832 = vpop.f32.mrf.mxu0
      %v2833 = vadd.f32 %v2728, %v2832
      %v2834 = vpop.f32.mrf.mxu0
      %v2835 = vadd.f32 %v2728, %v2834
      %2836 = vmatmul.bf16.gmra.mxu0 %v2656
      %v2837 = vpop.f32.mrf.mxu0
      %v2838 = vadd.f32 %v2728, %v2837
      %v2839 = vpop.f32.mrf.mxu0
      %v2840 = vadd.f32 %v2728, %v2839
      %2841 = vmatmul.bf16.gmra.mxu0 %v2657
      %v2842 = vpop.f32.mrf.mxu0
      %v2843 = vadd.f32 %v2728, %v2842
      %v2844 = vpop.f32.mrf.mxu0
      %v2845 = vadd.f32 %v2728, %v2844
      %2846 = vmatmul.bf16.gmra.mxu0 %v2658
      %v2847 = vpop.f32.mrf.mxu0
      %v2848 = vadd.f32 %v2728, %v2847
      %v2849 = vpop.f32.mrf.mxu0
      %v2850 = vadd.f32 %v2728, %v2849
      %2851 = vmatmul.bf16.gmra.mxu0 %v2659
      %v2852 = vpop.f32.mrf.mxu0
      %v2853 = vadd.f32 %v2728, %v2852
      %v2854 = vpop.f32.mrf.mxu0
      %v2855 = vadd.f32 %v2728, %v2854
      %2856 = vmatmul.bf16.gmra.mxu0 %v2660
      %v2857 = vpop.f32.mrf.mxu0
      %v2858 = vadd.f32 %v2728, %v2857
      %v2859 = vpop.f32.mrf.mxu0
      %v2860 = vadd.f32 %v2728, %v2859
      %2861 = vmatmul.bf16.gmra.mxu0 %v2661
      %v2862 = vpop.f32.mrf.mxu0
      %v2863 = vadd.f32 %v2728, %v2862
      %v2864 = vpop.f32.mrf.mxu0
      %v2865 = vadd.f32 %v2728, %v2864
      %2866 = vmatmul.bf16.gmra.mxu0 %v2662
      %v2867 = vpop.f32.mrf.mxu0
      %v2868 = vadd.f32 %v2728, %v2867
      %v2869 = vpop.f32.mrf.mxu0
      %v2870 = vadd.f32 %v2728, %v2869
      %2871 = vmatmul.bf16.gmra.mxu0 %v2663
      %v2872 = vpop.f32.mrf.mxu0
      %v2873 = vadd.f32 %v2728, %v2872
      %v2874 = vpop.f32.mrf.mxu0
      %v2875 = vadd.f32 %v2728, %v2874
      %2876 = vmatmul.bf16.gmra.mxu0 %v2664
      %v2877 = vpop.f32.mrf.mxu0
      %v2878 = vadd.f32 %v2728, %v2877
      %v2879 = vpop.f32.mrf.mxu0
      %v2880 = vadd.f32 %v2728, %v2879
      %2881 = vmatmul.bf16.gmra.mxu0 %v2665
      %v2882 = vpop.f32.mrf.mxu0
      %v2883 = vadd.f32 %v2728, %v2882
      %v2884 = vpop.f32.mrf.mxu0
      %v2885 = vadd.f32 %v2728, %v2884
      %2886 = vmatmul.bf16.gmra.mxu0 %v2666
      %v2887 = vpop.f32.mrf.mxu0
      %v2888 = vadd.f32 %v2728, %v2887
      %v2889 = vpop.f32.mrf.mxu0
      %v2890 = vadd.f32 %v2728, %v2889
      %2891 = vmatmul.bf16.gmra.mxu0 %v2667
      %v2892 = vpop.f32.mrf.mxu0
      %v2893 = vadd.f32 %v2728, %v2892
      %v2894 = vpop.f32.mrf.mxu0
      %v2895 = vadd.f32 %v2728, %v2894
      %2896 = vmatmul.bf16.gmra.mxu0 %v2668
      %v2897 = vpop.f32.mrf.mxu0
      %v2898 = vadd.f32 %v2728, %v2897
      %v2899 = vpop.f32.mrf.mxu0
      %v2900 = vadd.f32 %v2728, %v2899
      %2901 = vmatmul.bf16.gmra.mxu0 %v2669
      %v2902 = vpop.f32.mrf.mxu0
      %v2903 = vadd.f32 %v2728, %v2902
      %v2904 = vpop.f32.mrf.mxu0
      %v2905 = vadd.f32 %v2728, %v2904
      %2906 = vmatmul.bf16.gmra.mxu0 %v2670
      %v2907 = vpop.f32.mrf.mxu0
      %v2908 = vadd.f32 %v2728, %v2907
      %v2909 = vpop.f32.mrf.mxu0
      %v2910 = vadd.f32 %v2728, %v2909
      %2911 = vmatmul.bf16.gmra.mxu0 %v2671
      %v2912 = vpop.f32.mrf.mxu0
      %v2913 = vadd.f32 %v2728, %v2912
      %v2914 = vpop.f32.mrf.mxu0
      %v2915 = vadd.f32 %v2728, %v2914
      %2916 = vmatmul.bf16.gmra.mxu0 %v2672
      %v2917 = vpop.f32.mrf.mxu0
      %v2918 = vadd.f32 %v2728, %v2917
      %v2919 = vpop.f32.mrf.mxu0
      %v2920 = vadd.f32 %v2728, %v2919
      %2921 = vmatmul.bf16.gmra.mxu0 %v2673
      %v2922 = vpop.f32.mrf.mxu0
      %v2923 = vadd.f32 %v2728, %v2922
      %v2924 = vpop.f32.mrf.mxu0
      %v2925 = vadd.f32 %v2728, %v2924
      %2926 = vmatmul.bf16.gmra.mxu0 %v2674
      %v2927 = vpop.f32.mrf.mxu0
      %v2928 = vadd.f32 %v2728, %v2927
      %v2929 = vpop.f32.mrf.mxu0
      %v2930 = vadd.f32 %v2728, %v2929
      %2931 = vmatmul.bf16.gmra.mxu0 %v2675
      %v2932 = vpop.f32.mrf.mxu0
      %v2933 = vadd.f32 %v2728, %v2932
      %v2934 = vpop.f32.mrf.mxu0
      %v2935 = vadd.f32 %v2728, %v2934
      %2936 = vmatmul.bf16.gmra.mxu0 %v2676
      %v2937 = vpop.f32.mrf.mxu0
      %v2938 = vadd.f32 %v2728, %v2937
      %v2939 = vpop.f32.mrf.mxu0
      %v2940 = vadd.f32 %v2728, %v2939
      %2941 = vmatmul.bf16.gmra.mxu0 %v2677
      %v2942 = vpop.f32.mrf.mxu0
      %v2943 = vadd.f32 %v2728, %v2942
      %v2944 = vpop.f32.mrf.mxu0
      %v2945 = vadd.f32 %v2728, %v2944
      %2946 = vmatmul.bf16.gmra.mxu0 %v2678
      %v2947 = vpop.f32.mrf.mxu0
      %v2948 = vadd.f32 %v2728, %v2947
      %v2949 = vpop.f32.mrf.mxu0
      %v2950 = vadd.f32 %v2728, %v2949
      %2951 = vmatmul.bf16.gmra.mxu0 %v2679
      %v2952 = vpop.f32.mrf.mxu0
      %v2953 = vadd.f32 %v2728, %v2952
      %v2954 = vpop.f32.mrf.mxu0
      %v2955 = vadd.f32 %v2728, %v2954
      %2956 = vmatmul.bf16.gmra.mxu0 %v2680
      %v2957 = vpop.f32.mrf.mxu0
      %v2958 = vadd.f32 %v2728, %v2957
      %v2959 = vpop.f32.mrf.mxu0
      %v2960 = vadd.f32 %v2728, %v2959
      %2961 = vmatmul.bf16.gmra.mxu0 %v2681
      %v2962 = vpop.f32.mrf.mxu0
      %v2963 = vadd.f32 %v2728, %v2962
      %v2964 = vpop.f32.mrf.mxu0
      %v2965 = vadd.f32 %v2728, %v2964
      %2966 = vmatmul.bf16.gmra.mxu0 %v2682
      %v2967 = vpop.f32.mrf.mxu0
      %v2968 = vadd.f32 %v2728, %v2967
      %v2969 = vpop.f32.mrf.mxu0
      %v2970 = vadd.f32 %v2728, %v2969
      %2971 = vmatmul.bf16.gmra.mxu0 %v2683
      %v2972 = vpop.f32.mrf.mxu0
      %v2973 = vadd.f32 %v2728, %v2972
      %v2974 = vpop.f32.mrf.mxu0
      %v2975 = vadd.f32 %v2728, %v2974
      %2976 = vmatmul.bf16.gmra.mxu0 %v2684
      %v2977 = vpop.f32.mrf.mxu0
      %v2978 = vadd.f32 %v2728, %v2977
      %v2979 = vpop.f32.mrf.mxu0
      %v2980 = vadd.f32 %v2728, %v2979
      %2981 = vmatmul.bf16.gmra.mxu0 %v2685
      %v2982 = vpop.f32.mrf.mxu0
      %v2983 = vadd.f32 %v2728, %v2982
      %v2984 = vpop.f32.mrf.mxu0
      %v2985 = vadd.f32 %v2728, %v2984
      %2986 = vmatmul.bf16.gmra.mxu0 %v2686
      %v2987 = vpop.f32.mrf.mxu0
      %v2988 = vadd.f32 %v2728, %v2987
      %v2989 = vpop.f32.mrf.mxu0
      %v2990 = vadd.f32 %v2728, %v2989
      %2991 = vmatmul.bf16.gmra.mxu0 %v2687
      %v2992 = vpop.f32.mrf.mxu0
      %v2993 = vadd.f32 %v2728, %v2992
      %v2994 = vpop.f32.mrf.mxu0
      %v2995 = vadd.f32 %v2728, %v2994
      %2996 = vmatmul.bf16.gmra.mxu0 %v2688
      %v2997 = vpop.f32.mrf.mxu0
      %v2998 = vadd.f32 %v2728, %v2997
      %v2999 = vpop.f32.mrf.mxu0
      %v3000 = vadd.f32 %v2728, %v2999
      %3001 = vmatmul.bf16.gmra.mxu0 %v2689
      %v3002 = vpop.f32.mrf.mxu0
      %v3003 = vadd.f32 %v2728, %v3002
      %v3004 = vpop.f32.mrf.mxu0
      %v3005 = vadd.f32 %v2728, %v3004
      %3006 = vmatmul.bf16.gmra.mxu0 %v2690
      %v3007 = vpop.f32.mrf.mxu0
      %v3008 = vadd.f32 %v2728, %v3007
      %v3009 = vpop.f32.mrf.mxu0
      %v3010 = vadd.f32 %v2728, %v3009
      %3011 = vmatmul.bf16.gmra.mxu0 %v2691
      %v3012 = vpop.f32.mrf.mxu0
      %v3013 = vadd.f32 %v2728, %v3012
      %v3014 = vpop.f32.mrf.mxu0
      %v3015 = vadd.f32 %v2728, %v3014
      %3016 = vmatmul.bf16.gmra.mxu0 %v2692
      %v3017 = vpop.f32.mrf.mxu0
      %v3018 = vadd.f32 %v2728, %v3017
      %v3019 = vpop.f32.mrf.mxu0
      %v3020 = vadd.f32 %v2728, %v3019
      %3021 = vmatmul.bf16.gmra.mxu0 %v2693
      %v3022 = vpop.f32.mrf.mxu0
      %v3023 = vadd.f32 %v2728, %v3022
      %v3024 = vpop.f32.mrf.mxu0
      %v3025 = vadd.f32 %v2728, %v3024
      %3026 = vmatmul.bf16.gmra.mxu0 %v2694
      %v3027 = vpop.f32.mrf.mxu0
      %v3028 = vadd.f32 %v2728, %v3027
      %v3029 = vpop.f32.mrf.mxu0
      %v3030 = vadd.f32 %v2728, %v3029
      %3031 = vmatmul.bf16.gmra.mxu0 %v2695
      %v3032 = vpop.f32.mrf.mxu0
      %v3033 = vadd.f32 %v2728, %v3032
      %v3034 = vpop.f32.mrf.mxu0
      %v3035 = vadd.f32 %v2728, %v3034
      %3036 = vmatmul.bf16.gmra.mxu0 %v2696
      %v3037 = vpop.f32.mrf.mxu0
      %v3038 = vadd.f32 %v2728, %v3037
      %v3039 = vpop.f32.mrf.mxu0
      %v3040 = vadd.f32 %v2728, %v3039
      %3041 = vmatmul.bf16.gmra.mxu0 %v2697
      %v3042 = vpop.f32.mrf.mxu0
      %v3043 = vadd.f32 %v2728, %v3042
      %v3044 = vpop.f32.mrf.mxu0
      %v3045 = vadd.f32 %v2728, %v3044
      %3046 = vmatmul.bf16.gmra.mxu0 %v2698
      %v3047 = vpop.f32.mrf.mxu0
      %v3048 = vadd.f32 %v2728, %v3047
      %v3049 = vpop.f32.mrf.mxu0
      %v3050 = vadd.f32 %v2728, %v3049
      %3051 = vmatmul.bf16.gmra.mxu0 %v2699
      %v3052 = vpop.f32.mrf.mxu0
      %v3053 = vadd.f32 %v2728, %v3052
      %v3054 = vpop.f32.mrf.mxu0
      %v3055 = vadd.f32 %v2728, %v3054
      %3056 = vmatmul.bf16.gmra.mxu0 %v2700
      %v3057 = vpop.f32.mrf.mxu0
      %v3058 = vadd.f32 %v2728, %v3057
      %v3059 = vpop.f32.mrf.mxu0
      %v3060 = vadd.f32 %v2728, %v3059
      %3061 = vmatmul.bf16.gmra.mxu0 %v2701
      %v3062 = vpop.f32.mrf.mxu0
      %v3063 = vadd.f32 %v2728, %v3062
      %v3064 = vpop.f32.mrf.mxu0
      %v3065 = vadd.f32 %v2728, %v3064
      %3066 = vmatmul.bf16.gmra.mxu0 %v2702
      %v3067 = vpop.f32.mrf.mxu0
      %v3068 = vadd.f32 %v2728, %v3067
      %v3069 = vpop.f32.mrf.mxu0
      %v3070 = vadd.f32 %v2728, %v3069
      %3071 = vmatmul.bf16.gmra.mxu0 %v2703
      %v3072 = vpop.f32.mrf.mxu0
      %v3073 = vadd.f32 %v2728, %v3072
      %v3074 = vpop.f32.mrf.mxu0
      %v3075 = vadd.f32 %v2728, %v3074
      %3076 = vmatmul.bf16.gmra.mxu0 %v2704
      %v3077 = vpop.f32.mrf.mxu0
      %v3078 = vadd.f32 %v2728, %v3077
      %v3079 = vpop.f32.mrf.mxu0
      %v3080 = vadd.f32 %v2728, %v3079
      %3081 = vmatmul.bf16.gmra.mxu0 %v2705
      %v3082 = vpop.f32.mrf.mxu0
      %v3083 = vadd.f32 %v2728, %v3082
      %v3084 = vpop.f32.mrf.mxu0
      %v3085 = vadd.f32 %v2728, %v3084
      %3086 = vmatmul.bf16.gmra.mxu0 %v2706
      %v3087 = vpop.f32.mrf.mxu0
      %v3088 = vadd.f32 %v2728, %v3087
      %v3089 = vpop.f32.mrf.mxu0
      %v3090 = vadd.f32 %v2728, %v3089
      %3091 = vmatmul.bf16.gmra.mxu0 %v2707
      %v3092 = vpop.f32.mrf.mxu0
      %v3093 = vadd.f32 %v2728, %v3092
      %v3094 = vpop.f32.mrf.mxu0
      %v3095 = vadd.f32 %v2728, %v3094
      %3096 = vmatmul.bf16.gmra.mxu0 %v2708
      %v3097 = vpop.f32.mrf.mxu0
      %v3098 = vadd.f32 %v2728, %v3097
      %v3099 = vpop.f32.mrf.mxu0
      %v3100 = vadd.f32 %v2728, %v3099
      %3101 = vmatmul.bf16.gmra.mxu0 %v2709
      %v3102 = vpop.f32.mrf.mxu0
      %v3103 = vadd.f32 %v2728, %v3102
      %v3104 = vpop.f32.mrf.mxu0
      %v3105 = vadd.f32 %v2728, %v3104
      %3106 = vdwg.mxu0
      %v3107 = vmax.f32 %v2788, 0.0
      %v3108 = vmax.f32 %v2790, 0.0
      %v3109 = vmax.f32 %v2793, 0.0
      %v3110 = vmax.f32 %v2795, 0.0
      %v3111 = vmax.f32 %v2798, 0.0
      %v3112 = vmax.f32 %v2800, 0.0
      %v3113 = vmax.f32 %v2803, 0.0
      %v3114 = vmax.f32 %v2805, 0.0
      %v3115 = vmax.f32 %v2808, 0.0
      %v3116 = vmax.f32 %v2810, 0.0
      %v3117 = vmax.f32 %v2813, 0.0
      %v3118 = vmax.f32 %v2815, 0.0
      %v3119 = vmax.f32 %v2818, 0.0
      %v3120 = vmax.f32 %v2820, 0.0
      %v3121 = vmax.f32 %v2823, 0.0
      %v3122 = vmax.f32 %v2825, 0.0
      %v3123 = vmax.f32 %v2828, 0.0
      %v3124 = vmax.f32 %v2830, 0.0
      %v3125 = vmax.f32 %v2833, 0.0
      %v3126 = vmax.f32 %v2835, 0.0
      %v3127 = vmax.f32 %v2838, 0.0
      %v3128 = vmax.f32 %v2840, 0.0
      %v3129 = vmax.f32 %v2843, 0.0
      %v3130 = vmax.f32 %v2845, 0.0
      %v3131 = vmax.f32 %v2848, 0.0
      %v3132 = vmax.f32 %v2850, 0.0
      %v3133 = vmax.f32 %v2853, 0.0
      %v3134 = vmax.f32 %v2855, 0.0
      %v3135 = vmax.f32 %v2858, 0.0
      %v3136 = vmax.f32 %v2860, 0.0
      %v3137 = vmax.f32 %v2863, 0.0
      %v3138 = vmax.f32 %v2865, 0.0
      %v3139 = vmax.f32 %v2868, 0.0
      %v3140 = vmax.f32 %v2870, 0.0
      %v3141 = vmax.f32 %v2873, 0.0
      %v3142 = vmax.f32 %v2875, 0.0
      %v3143 = vmax.f32 %v2878, 0.0
      %v3144 = vmax.f32 %v2880, 0.0
      %v3145 = vmax.f32 %v2883, 0.0
      %v3146 = vmax.f32 %v2885, 0.0
      %v3147 = vmax.f32 %v2888, 0.0
      %v3148 = vmax.f32 %v2890, 0.0
      %v3149 = vmax.f32 %v2893, 0.0
      %v3150 = vmax.f32 %v2895, 0.0
      %v3151 = vmax.f32 %v2898, 0.0
      %v3152 = vmax.f32 %v2900, 0.0
      %v3153 = vmax.f32 %v2903, 0.0
      %v3154 = vmax.f32 %v2905, 0.0
      %v3155 = vmax.f32 %v2908, 0.0
      %v3156 = vmax.f32 %v2910, 0.0
      %v3157 = vmax.f32 %v2913, 0.0
      %v3158 = vmax.f32 %v2915, 0.0
      %v3159 = vmax.f32 %v2918, 0.0
      %v3160 = vmax.f32 %v2920, 0.0
      %v3161 = vmax.f32 %v2923, 0.0
      %v3162 = vmax.f32 %v2925, 0.0
      %v3163 = vmax.f32 %v2928, 0.0
      %v3164 = vmax.f32 %v2930, 0.0
      %v3165 = vmax.f32 %v2933, 0.0
      %v3166 = vmax.f32 %v2935, 0.0
      %v3167 = vmax.f32 %v2938, 0.0
      %v3168 = vmax.f32 %v2940, 0.0
      %v3169 = vmax.f32 %v2943, 0.0
      %v3170 = vmax.f32 %v2945, 0.0
      %v3171 = vmax.f32 %v2948, 0.0
      %v3172 = vmax.f32 %v2950, 0.0
      %v3173 = vmax.f32 %v2953, 0.0
      %v3174 = vmax.f32 %v2955, 0.0
      %v3175 = vmax.f32 %v2958, 0.0
      %v3176 = vmax.f32 %v2960, 0.0
      %v3177 = vmax.f32 %v2963, 0.0
      %v3178 = vmax.f32 %v2965, 0.0
      %v3179 = vmax.f32 %v2968, 0.0
      %v3180 = vmax.f32 %v2970, 0.0
      %v3181 = vmax.f32 %v2973, 0.0
      %v3182 = vmax.f32 %v2975, 0.0
      %v3183 = vmax.f32 %v2978, 0.0
      %v3184 = vmax.f32 %v2980, 0.0
      %v3185 = vmax.f32 %v2983, 0.0
      %v3186 = vmax.f32 %v2985, 0.0
      %v3187 = vmax.f32 %v2988, 0.0
      %v3188 = vmax.f32 %v2990, 0.0
      %v3189 = vmax.f32 %v2993, 0.0
      %v3190 = vmax.f32 %v2995, 0.0
      %v3191 = vmax.f32 %v2998, 0.0
      %v3192 = vmax.f32 %v3000, 0.0
      %v3193 = vmax.f32 %v3003, 0.0
      %v3194 = vmax.f32 %v3005, 0.0
      %v3195 = vmax.f32 %v3008, 0.0
      %v3196 = vmax.f32 %v3010, 0.0
      %v3197 = vmax.f32 %v3013, 0.0
      %v3198 = vmax.f32 %v3015, 0.0
      %v3199 = vmax.f32 %v3018, 0.0
      %v3200 = vmax.f32 %v3020, 0.0
      %v3201 = vmax.f32 %v3023, 0.0
      %v3202 = vmax.f32 %v3025, 0.0
      %v3203 = vmax.f32 %v3028, 0.0
      %v3204 = vmax.f32 %v3030, 0.0
      %v3205 = vmax.f32 %v3033, 0.0
      %v3206 = vmax.f32 %v3035, 0.0
      %v3207 = vmax.f32 %v3038, 0.0
      %v3208 = vmax.f32 %v3040, 0.0
      %v3209 = vmax.f32 %v3043, 0.0
      %v3210 = vmax.f32 %v3045, 0.0
      %v3211 = vmax.f32 %v3048, 0.0
      %v3212 = vmax.f32 %v3050, 0.0
      %v3213 = vmax.f32 %v3053, 0.0
      %v3214 = vmax.f32 %v3055, 0.0
      %v3215 = vmax.f32 %v3058, 0.0
      %v3216 = vmax.f32 %v3060, 0.0
      %v3217 = vmax.f32 %v3063, 0.0
      %v3218 = vmax.f32 %v3065, 0.0
      %v3219 = vmax.f32 %v3068, 0.0
      %v3220 = vmax.f32 %v3070, 0.0
      %v3221 = vmax.f32 %v3073, 0.0
      %v3222 = vmax.f32 %v3075, 0.0
      %v3223 = vmax.f32 %v3078, 0.0
      %v3224 = vmax.f32 %v3080, 0.0
      %v3225 = vmax.f32 %v3083, 0.0
      %v3226 = vmax.f32 %v3085, 0.0
      %v3227 = vmax.f32 %v3088, 0.0
      %v3228 = vmax.f32 %v3090, 0.0
      %v3229 = vmax.f32 %v3093, 0.0
      %v3230 = vmax.f32 %v3095, 0.0
      %v3231 = vmax.f32 %v3098, 0.0
      %v3232 = vmax.f32 %v3100, 0.0
      %v3233 = vmax.f32 %v3103, 0.0
      %v3234 = vmax.f32 %v3105, 0.0
      %v3235 = vpack.c.bf16 %v3108, %v3107
      %v3236 = vpack.c.bf16 %v3110, %v3109
      %v3237 = vpack.c.bf16 %v3112, %v3111
      %v3238 = vpack.c.bf16 %v3114, %v3113
      %v3239 = vpack.c.bf16 %v3116, %v3115
      %v3240 = vpack.c.bf16 %v3118, %v3117
      %v3241 = vpack.c.bf16 %v3120, %v3119
      %v3242 = vpack.c.bf16 %v3122, %v3121
      %v3243 = vpack.c.bf16 %v3124, %v3123
      %v3244 = vpack.c.bf16 %v3126, %v3125
      %v3245 = vpack.c.bf16 %v3128, %v3127
      %v3246 = vpack.c.bf16 %v3130, %v3129
      %v3247 = vpack.c.bf16 %v3132, %v3131
      %v3248 = vpack.c.bf16 %v3134, %v3133
      %v3249 = vpack.c.bf16 %v3136, %v3135
      %v3250 = vpack.c.bf16 %v3138, %v3137
      %v3251 = vpack.c.bf16 %v3140, %v3139
      %v3252 = vpack.c.bf16 %v3142, %v3141
      %v3253 = vpack.c.bf16 %v3144, %v3143
      %v3254 = vpack.c.bf16 %v3146, %v3145
      %v3255 = vpack.c.bf16 %v3148, %v3147
      %v3256 = vpack.c.bf16 %v3150, %v3149
      %v3257 = vpack.c.bf16 %v3152, %v3151
      %v3258 = vpack.c.bf16 %v3154, %v3153
      %v3259 = vpack.c.bf16 %v3156, %v3155
      %v3260 = vpack.c.bf16 %v3158, %v3157
      %v3261 = vpack.c.bf16 %v3160, %v3159
      %v3262 = vpack.c.bf16 %v3162, %v3161
      %v3263 = vpack.c.bf16 %v3164, %v3163
      %v3264 = vpack.c.bf16 %v3166, %v3165
      %v3265 = vpack.c.bf16 %v3168, %v3167
      %v3266 = vpack.c.bf16 %v3170, %v3169
      %v3267 = vpack.c.bf16 %v3172, %v3171
      %v3268 = vpack.c.bf16 %v3174, %v3173
      %v3269 = vpack.c.bf16 %v3176, %v3175
      %v3270 = vpack.c.bf16 %v3178, %v3177
      %v3271 = vpack.c.bf16 %v3180, %v3179
      %v3272 = vpack.c.bf16 %v3182, %v3181
      %v3273 = vpack.c.bf16 %v3184, %v3183
      %v3274 = vpack.c.bf16 %v3186, %v3185
      %v3275 = vpack.c.bf16 %v3188, %v3187
      %v3276 = vpack.c.bf16 %v3190, %v3189
      %v3277 = vpack.c.bf16 %v3192, %v3191
      %v3278 = vpack.c.bf16 %v3194, %v3193
      %v3279 = vpack.c.bf16 %v3196, %v3195
      %v3280 = vpack.c.bf16 %v3198, %v3197
      %v3281 = vpack.c.bf16 %v3200, %v3199
      %v3282 = vpack.c.bf16 %v3202, %v3201
      %v3283 = vpack.c.bf16 %v3204, %v3203
      %v3284 = vpack.c.bf16 %v3206, %v3205
      %v3285 = vpack.c.bf16 %v3208, %v3207
      %v3286 = vpack.c.bf16 %v3210, %v3209
      %v3287 = vpack.c.bf16 %v3212, %v3211
      %v3288 = vpack.c.bf16 %v3214, %v3213
      %v3289 = vpack.c.bf16 %v3216, %v3215
      %v3290 = vpack.c.bf16 %v3218, %v3217
      %v3291 = vpack.c.bf16 %v3220, %v3219
      %v3292 = vpack.c.bf16 %v3222, %v3221
      %v3293 = vpack.c.bf16 %v3224, %v3223
      %v3294 = vpack.c.bf16 %v3226, %v3225
      %v3295 = vpack.c.bf16 %v3228, %v3227
      %v3296 = vpack.c.bf16 %v3230, %v3229
      %v3297 = vpack.c.bf16 %v3232, %v3231
      %v3298 = vpack.c.bf16 %v3234, %v3233
      %v3299 = vld [vmem:[%s8] sm:$0xf]
      %v3300 = vld [vmem:[%s8 + $0x4] sm:$0xf]
      %v3301 = vld [vmem:[%s8 + $0x8] sm:$0xf]
      %v3302 = vld [vmem:[%s8 + $0xc] sm:$0xf]
      %v3303 = vld [vmem:[%s8 + $0x10] sm:$0xf]
      %v3304 = vld [vmem:[%s8 + $0x14] sm:$0xf]
      %v3305 = vld [vmem:[%s8 + $0x18] sm:$0xf]
      %v3306 = vld [vmem:[%s8 + $0x1c] sm:$0xf]
      %v3307 = vld [vmem:[%s9] sm:$0x1]
      %v3309 = vperm.slane %v3307, 0
      %v3319 = vunpack.c.l.b16 %v3299
      %v3320 = vunpack.c.l.b16 %v3300
      %v3321 = vunpack.c.l.b16 %v3301
      %v3322 = vunpack.c.l.b16 %v3302
      %v3323 = vunpack.c.l.b16 %v3303
      %v3324 = vunpack.c.l.b16 %v3304
      %v3325 = vunpack.c.l.b16 %v3305
      %v3326 = vunpack.c.l.b16 %v3306
      %v3327 = vpack.c.b16 %v3320, %v3319
      %v3328 = vpack.c.b16 %v3322, %v3321
      %v3329 = vpack.c.b16 %v3324, %v3323
      %v3330 = vpack.c.b16 %v3326, %v3325
      %vm3335 = vcmask 523264
      %v3337 = vsel %vm3335, %v3235, 0
      %v3340 = vsel %vm3335, %v3236, 0
      %v3343 = vsel %vm3335, %v3237, 0
      %v3346 = vsel %vm3335, %v3238, 0
      %v3349 = vsel %vm3335, %v3239, 0
      %v3352 = vsel %vm3335, %v3240, 0
      %v3355 = vsel %vm3335, %v3241, 0
      %v3358 = vsel %vm3335, %v3242, 0
      %v3361 = vsel %vm3335, %v3243, 0
      %v3364 = vsel %vm3335, %v3244, 0
      %v3367 = vsel %vm3335, %v3245, 0
      %v3370 = vsel %vm3335, %v3246, 0
      %v3373 = vsel %vm3335, %v3247, 0
      %v3376 = vsel %vm3335, %v3248, 0
      %v3379 = vsel %vm3335, %v3249, 0
      %v3382 = vsel %vm3335, %v3250, 0
      %v3385 = vsel %vm3335, %v3251, 0
      %v3388 = vsel %vm3335, %v3252, 0
      %v3391 = vsel %vm3335, %v3253, 0
      %v3394 = vsel %vm3335, %v3254, 0
      %v3397 = vsel %vm3335, %v3255, 0
      %v3400 = vsel %vm3335, %v3256, 0
      %v3403 = vsel %vm3335, %v3257, 0
      %v3406 = vsel %vm3335, %v3258, 0
      %v3409 = vsel %vm3335, %v3259, 0
      %v3412 = vsel %vm3335, %v3260, 0
      %v3415 = vsel %vm3335, %v3261, 0
      %v3418 = vsel %vm3335, %v3262, 0
      %v3421 = vsel %vm3335, %v3263, 0
      %v3424 = vsel %vm3335, %v3264, 0
      %v3427 = vsel %vm3335, %v3265, 0
      %v3430 = vsel %vm3335, %v3266, 0
      %v3433 = vsel %vm3335, %v3267, 0
      %v3436 = vsel %vm3335, %v3268, 0
      %v3439 = vsel %vm3335, %v3269, 0
      %v3442 = vsel %vm3335, %v3270, 0
      %v3445 = vsel %vm3335, %v3271, 0
      %v3448 = vsel %vm3335, %v3272, 0
      %v3451 = vsel %vm3335, %v3273, 0
      %v3454 = vsel %vm3335, %v3274, 0
      %v3457 = vsel %vm3335, %v3275, 0
      %v3460 = vsel %vm3335, %v3276, 0
      %v3463 = vsel %vm3335, %v3277, 0
      %v3466 = vsel %vm3335, %v3278, 0
      %v3469 = vsel %vm3335, %v3279, 0
      %v3472 = vsel %vm3335, %v3280, 0
      %v3475 = vsel %vm3335, %v3281, 0
      %v3478 = vsel %vm3335, %v3282, 0
      %v3481 = vsel %vm3335, %v3283, 0
      %v3484 = vsel %vm3335, %v3284, 0
      %v3487 = vsel %vm3335, %v3285, 0
      %v3490 = vsel %vm3335, %v3286, 0
      %v3493 = vsel %vm3335, %v3287, 0
      %v3496 = vsel %vm3335, %v3288, 0
      %v3499 = vsel %vm3335, %v3289, 0
      %v3502 = vsel %vm3335, %v3290, 0
      %v3505 = vsel %vm3335, %v3291, 0
      %v3508 = vsel %vm3335, %v3292, 0
      %v3511 = vsel %vm3335, %v3293, 0
      %v3514 = vsel %vm3335, %v3294, 0
      %v3517 = vsel %vm3335, %v3295, 0
      %v3520 = vsel %vm3335, %v3296, 0
      %v3523 = vsel %vm3335, %v3297, 0
      %v3526 = vsel %vm3335, %v3298, 0
      %3528 = vmatpush.bf16.msra.mxu0 0
      %3529 = vmatpush.bf16.msra.mxu0 0
      %3530 = vmatpush.bf16.msra.mxu0 0
      %3531 = vmatpush.bf16.msra.mxu0 0
      %3532 = vmatpush.bf16.msra.mxu0 %v3330
      %3533 = vmatpush.bf16.msra.mxu0 %v3329
      %3534 = vmatpush.bf16.msra.mxu0 %v3328
      %3535 = vmatpush.bf16.msra.mxu0 %v3327
      %3536 = vmatmul.bf16.gmra.mxu0 %v3337
      %v3537 = vpop.f32.mrf.mxu0
      %v3538 = vadd.f32 %v3309, %v3537
      %v3539 = vpop.f32.mrf.mxu0
      %v3540 = vadd.f32 %v3309, %v3539
      %3541 = vmatmul.bf16.gmra.mxu0 %v3340
      %v3542 = vpop.f32.mrf.mxu0
      %v3543 = vadd.f32 %v3309, %v3542
      %v3544 = vpop.f32.mrf.mxu0
      %v3545 = vadd.f32 %v3309, %v3544
      %3546 = vmatmul.bf16.gmra.mxu0 %v3343
      %v3547 = vpop.f32.mrf.mxu0
      %v3548 = vadd.f32 %v3309, %v3547
      %v3549 = vpop.f32.mrf.mxu0
      %v3550 = vadd.f32 %v3309, %v3549
      %3551 = vmatmul.bf16.gmra.mxu0 %v3346
      %v3552 = vpop.f32.mrf.mxu0
      %v3553 = vadd.f32 %v3309, %v3552
      %v3554 = vpop.f32.mrf.mxu0
      %v3555 = vadd.f32 %v3309, %v3554
      %3556 = vmatmul.bf16.gmra.mxu0 %v3349
      %v3557 = vpop.f32.mrf.mxu0
      %v3558 = vadd.f32 %v3309, %v3557
      %v3559 = vpop.f32.mrf.mxu0
      %v3560 = vadd.f32 %v3309, %v3559
      %3561 = vmatmul.bf16.gmra.mxu0 %v3352
      %v3562 = vpop.f32.mrf.mxu0
      %v3563 = vadd.f32 %v3309, %v3562
      %v3564 = vpop.f32.mrf.mxu0
      %v3565 = vadd.f32 %v3309, %v3564
      %3566 = vmatmul.bf16.gmra.mxu0 %v3355
      %v3567 = vpop.f32.mrf.mxu0
      %v3568 = vadd.f32 %v3309, %v3567
      %v3569 = vpop.f32.mrf.mxu0
      %v3570 = vadd.f32 %v3309, %v3569
      %3571 = vmatmul.bf16.gmra.mxu0 %v3358
      %v3572 = vpop.f32.mrf.mxu0
      %v3573 = vadd.f32 %v3309, %v3572
      %v3574 = vpop.f32.mrf.mxu0
      %v3575 = vadd.f32 %v3309, %v3574
      %3576 = vmatmul.bf16.gmra.mxu0 %v3361
      %v3577 = vpop.f32.mrf.mxu0
      %v3578 = vadd.f32 %v3309, %v3577
      %v3579 = vpop.f32.mrf.mxu0
      %v3580 = vadd.f32 %v3309, %v3579
      %3581 = vmatmul.bf16.gmra.mxu0 %v3364
      %v3582 = vpop.f32.mrf.mxu0
      %v3583 = vadd.f32 %v3309, %v3582
      %v3584 = vpop.f32.mrf.mxu0
      %v3585 = vadd.f32 %v3309, %v3584
      %3586 = vmatmul.bf16.gmra.mxu0 %v3367
      %v3587 = vpop.f32.mrf.mxu0
      %v3588 = vadd.f32 %v3309, %v3587
      %v3589 = vpop.f32.mrf.mxu0
      %v3590 = vadd.f32 %v3309, %v3589
      %3591 = vmatmul.bf16.gmra.mxu0 %v3370
      %v3592 = vpop.f32.mrf.mxu0
      %v3593 = vadd.f32 %v3309, %v3592
      %v3594 = vpop.f32.mrf.mxu0
      %v3595 = vadd.f32 %v3309, %v3594
      %3596 = vmatmul.bf16.gmra.mxu0 %v3373
      %v3597 = vpop.f32.mrf.mxu0
      %v3598 = vadd.f32 %v3309, %v3597
      %v3599 = vpop.f32.mrf.mxu0
      %v3600 = vadd.f32 %v3309, %v3599
      %3601 = vmatmul.bf16.gmra.mxu0 %v3376
      %v3602 = vpop.f32.mrf.mxu0
      %v3603 = vadd.f32 %v3309, %v3602
      %v3604 = vpop.f32.mrf.mxu0
      %v3605 = vadd.f32 %v3309, %v3604
      %3606 = vmatmul.bf16.gmra.mxu0 %v3379
      %v3607 = vpop.f32.mrf.mxu0
      %v3608 = vadd.f32 %v3309, %v3607
      %v3609 = vpop.f32.mrf.mxu0
      %v3610 = vadd.f32 %v3309, %v3609
      %3611 = vmatmul.bf16.gmra.mxu0 %v3382
      %v3612 = vpop.f32.mrf.mxu0
      %v3613 = vadd.f32 %v3309, %v3612
      %v3614 = vpop.f32.mrf.mxu0
      %v3615 = vadd.f32 %v3309, %v3614
      %3616 = vmatmul.bf16.gmra.mxu0 %v3385
      %v3617 = vpop.f32.mrf.mxu0
      %v3618 = vadd.f32 %v3309, %v3617
      %v3619 = vpop.f32.mrf.mxu0
      %v3620 = vadd.f32 %v3309, %v3619
      %3621 = vmatmul.bf16.gmra.mxu0 %v3388
      %v3622 = vpop.f32.mrf.mxu0
      %v3623 = vadd.f32 %v3309, %v3622
      %v3624 = vpop.f32.mrf.mxu0
      %v3625 = vadd.f32 %v3309, %v3624
      %3626 = vmatmul.bf16.gmra.mxu0 %v3391
      %v3627 = vpop.f32.mrf.mxu0
      %v3628 = vadd.f32 %v3309, %v3627
      %v3629 = vpop.f32.mrf.mxu0
      %v3630 = vadd.f32 %v3309, %v3629
      %3631 = vmatmul.bf16.gmra.mxu0 %v3394
      %v3632 = vpop.f32.mrf.mxu0
      %v3633 = vadd.f32 %v3309, %v3632
      %v3634 = vpop.f32.mrf.mxu0
      %v3635 = vadd.f32 %v3309, %v3634
      %3636 = vmatmul.bf16.gmra.mxu0 %v3397
      %v3637 = vpop.f32.mrf.mxu0
      %v3638 = vadd.f32 %v3309, %v3637
      %v3639 = vpop.f32.mrf.mxu0
      %v3640 = vadd.f32 %v3309, %v3639
      %3641 = vmatmul.bf16.gmra.mxu0 %v3400
      %v3642 = vpop.f32.mrf.mxu0
      %v3643 = vadd.f32 %v3309, %v3642
      %v3644 = vpop.f32.mrf.mxu0
      %v3645 = vadd.f32 %v3309, %v3644
      %3646 = vmatmul.bf16.gmra.mxu0 %v3403
      %v3647 = vpop.f32.mrf.mxu0
      %v3648 = vadd.f32 %v3309, %v3647
      %v3649 = vpop.f32.mrf.mxu0
      %v3650 = vadd.f32 %v3309, %v3649
      %3651 = vmatmul.bf16.gmra.mxu0 %v3406
      %v3652 = vpop.f32.mrf.mxu0
      %v3653 = vadd.f32 %v3309, %v3652
      %v3654 = vpop.f32.mrf.mxu0
      %v3655 = vadd.f32 %v3309, %v3654
      %3656 = vmatmul.bf16.gmra.mxu0 %v3409
      %v3657 = vpop.f32.mrf.mxu0
      %v3658 = vadd.f32 %v3309, %v3657
      %v3659 = vpop.f32.mrf.mxu0
      %v3660 = vadd.f32 %v3309, %v3659
      %3661 = vmatmul.bf16.gmra.mxu0 %v3412
      %v3662 = vpop.f32.mrf.mxu0
      %v3663 = vadd.f32 %v3309, %v3662
      %v3664 = vpop.f32.mrf.mxu0
      %v3665 = vadd.f32 %v3309, %v3664
      %3666 = vmatmul.bf16.gmra.mxu0 %v3415
      %v3667 = vpop.f32.mrf.mxu0
      %v3668 = vadd.f32 %v3309, %v3667
      %v3669 = vpop.f32.mrf.mxu0
      %v3670 = vadd.f32 %v3309, %v3669
      %3671 = vmatmul.bf16.gmra.mxu0 %v3418
      %v3672 = vpop.f32.mrf.mxu0
      %v3673 = vadd.f32 %v3309, %v3672
      %v3674 = vpop.f32.mrf.mxu0
      %v3675 = vadd.f32 %v3309, %v3674
      %3676 = vmatmul.bf16.gmra.mxu0 %v3421
      %v3677 = vpop.f32.mrf.mxu0
      %v3678 = vadd.f32 %v3309, %v3677
      %v3679 = vpop.f32.mrf.mxu0
      %v3680 = vadd.f32 %v3309, %v3679
      %3681 = vmatmul.bf16.gmra.mxu0 %v3424
      %v3682 = vpop.f32.mrf.mxu0
      %v3683 = vadd.f32 %v3309, %v3682
      %v3684 = vpop.f32.mrf.mxu0
      %v3685 = vadd.f32 %v3309, %v3684
      %3686 = vmatmul.bf16.gmra.mxu0 %v3427
      %v3687 = vpop.f32.mrf.mxu0
      %v3688 = vadd.f32 %v3309, %v3687
      %v3689 = vpop.f32.mrf.mxu0
      %v3690 = vadd.f32 %v3309, %v3689
      %3691 = vmatmul.bf16.gmra.mxu0 %v3430
      %v3692 = vpop.f32.mrf.mxu0
      %v3693 = vadd.f32 %v3309, %v3692
      %v3694 = vpop.f32.mrf.mxu0
      %v3695 = vadd.f32 %v3309, %v3694
      %3696 = vmatmul.bf16.gmra.mxu0 %v3433
      %v3697 = vpop.f32.mrf.mxu0
      %v3698 = vadd.f32 %v3309, %v3697
      %v3699 = vpop.f32.mrf.mxu0
      %v3700 = vadd.f32 %v3309, %v3699
      %3701 = vmatmul.bf16.gmra.mxu0 %v3436
      %v3702 = vpop.f32.mrf.mxu0
      %v3703 = vadd.f32 %v3309, %v3702
      %v3704 = vpop.f32.mrf.mxu0
      %v3705 = vadd.f32 %v3309, %v3704
      %3706 = vmatmul.bf16.gmra.mxu0 %v3439
      %v3707 = vpop.f32.mrf.mxu0
      %v3708 = vadd.f32 %v3309, %v3707
      %v3709 = vpop.f32.mrf.mxu0
      %v3710 = vadd.f32 %v3309, %v3709
      %3711 = vmatmul.bf16.gmra.mxu0 %v3442
      %v3712 = vpop.f32.mrf.mxu0
      %v3713 = vadd.f32 %v3309, %v3712
      %v3714 = vpop.f32.mrf.mxu0
      %v3715 = vadd.f32 %v3309, %v3714
      %3716 = vmatmul.bf16.gmra.mxu0 %v3445
      %v3717 = vpop.f32.mrf.mxu0
      %v3718 = vadd.f32 %v3309, %v3717
      %v3719 = vpop.f32.mrf.mxu0
      %v3720 = vadd.f32 %v3309, %v3719
      %3721 = vmatmul.bf16.gmra.mxu0 %v3448
      %v3722 = vpop.f32.mrf.mxu0
      %v3723 = vadd.f32 %v3309, %v3722
      %v3724 = vpop.f32.mrf.mxu0
      %v3725 = vadd.f32 %v3309, %v3724
      %3726 = vmatmul.bf16.gmra.mxu0 %v3451
      %v3727 = vpop.f32.mrf.mxu0
      %v3728 = vadd.f32 %v3309, %v3727
      %v3729 = vpop.f32.mrf.mxu0
      %v3730 = vadd.f32 %v3309, %v3729
      %3731 = vmatmul.bf16.gmra.mxu0 %v3454
      %v3732 = vpop.f32.mrf.mxu0
      %v3733 = vadd.f32 %v3309, %v3732
      %v3734 = vpop.f32.mrf.mxu0
      %v3735 = vadd.f32 %v3309, %v3734
      %3736 = vmatmul.bf16.gmra.mxu0 %v3457
      %v3737 = vpop.f32.mrf.mxu0
      %v3738 = vadd.f32 %v3309, %v3737
      %v3739 = vpop.f32.mrf.mxu0
      %v3740 = vadd.f32 %v3309, %v3739
      %3741 = vmatmul.bf16.gmra.mxu0 %v3460
      %v3742 = vpop.f32.mrf.mxu0
      %v3743 = vadd.f32 %v3309, %v3742
      %v3744 = vpop.f32.mrf.mxu0
      %v3745 = vadd.f32 %v3309, %v3744
      %3746 = vmatmul.bf16.gmra.mxu0 %v3463
      %v3747 = vpop.f32.mrf.mxu0
      %v3748 = vadd.f32 %v3309, %v3747
      %v3749 = vpop.f32.mrf.mxu0
      %v3750 = vadd.f32 %v3309, %v3749
      %3751 = vmatmul.bf16.gmra.mxu0 %v3466
      %v3752 = vpop.f32.mrf.mxu0
      %v3753 = vadd.f32 %v3309, %v3752
      %v3754 = vpop.f32.mrf.mxu0
      %v3755 = vadd.f32 %v3309, %v3754
      %3756 = vmatmul.bf16.gmra.mxu0 %v3469
      %v3757 = vpop.f32.mrf.mxu0
      %v3758 = vadd.f32 %v3309, %v3757
      %v3759 = vpop.f32.mrf.mxu0
      %v3760 = vadd.f32 %v3309, %v3759
      %3761 = vmatmul.bf16.gmra.mxu0 %v3472
      %v3762 = vpop.f32.mrf.mxu0
      %v3763 = vadd.f32 %v3309, %v3762
      %v3764 = vpop.f32.mrf.mxu0
      %v3765 = vadd.f32 %v3309, %v3764
      %3766 = vmatmul.bf16.gmra.mxu0 %v3475
      %v3767 = vpop.f32.mrf.mxu0
      %v3768 = vadd.f32 %v3309, %v3767
      %v3769 = vpop.f32.mrf.mxu0
      %v3770 = vadd.f32 %v3309, %v3769
      %3771 = vmatmul.bf16.gmra.mxu0 %v3478
      %v3772 = vpop.f32.mrf.mxu0
      %v3773 = vadd.f32 %v3309, %v3772
      %v3774 = vpop.f32.mrf.mxu0
      %v3775 = vadd.f32 %v3309, %v3774
      %3776 = vmatmul.bf16.gmra.mxu0 %v3481
      %v3777 = vpop.f32.mrf.mxu0
      %v3778 = vadd.f32 %v3309, %v3777
      %v3779 = vpop.f32.mrf.mxu0
      %v3780 = vadd.f32 %v3309, %v3779
      %3781 = vmatmul.bf16.gmra.mxu0 %v3484
      %v3782 = vpop.f32.mrf.mxu0
      %v3783 = vadd.f32 %v3309, %v3782
      %v3784 = vpop.f32.mrf.mxu0
      %v3785 = vadd.f32 %v3309, %v3784
      %3786 = vmatmul.bf16.gmra.mxu0 %v3487
      %v3787 = vpop.f32.mrf.mxu0
      %v3788 = vadd.f32 %v3309, %v3787
      %v3789 = vpop.f32.mrf.mxu0
      %v3790 = vadd.f32 %v3309, %v3789
      %3791 = vmatmul.bf16.gmra.mxu0 %v3490
      %v3792 = vpop.f32.mrf.mxu0
      %v3793 = vadd.f32 %v3309, %v3792
      %v3794 = vpop.f32.mrf.mxu0
      %v3795 = vadd.f32 %v3309, %v3794
      %3796 = vmatmul.bf16.gmra.mxu0 %v3493
      %v3797 = vpop.f32.mrf.mxu0
      %v3798 = vadd.f32 %v3309, %v3797
      %v3799 = vpop.f32.mrf.mxu0
      %v3800 = vadd.f32 %v3309, %v3799
      %3801 = vmatmul.bf16.gmra.mxu0 %v3496
      %v3802 = vpop.f32.mrf.mxu0
      %v3803 = vadd.f32 %v3309, %v3802
      %v3804 = vpop.f32.mrf.mxu0
      %v3805 = vadd.f32 %v3309, %v3804
      %3806 = vmatmul.bf16.gmra.mxu0 %v3499
      %v3807 = vpop.f32.mrf.mxu0
      %v3808 = vadd.f32 %v3309, %v3807
      %v3809 = vpop.f32.mrf.mxu0
      %v3810 = vadd.f32 %v3309, %v3809
      %3811 = vmatmul.bf16.gmra.mxu0 %v3502
      %v3812 = vpop.f32.mrf.mxu0
      %v3813 = vadd.f32 %v3309, %v3812
      %v3814 = vpop.f32.mrf.mxu0
      %v3815 = vadd.f32 %v3309, %v3814
      %3816 = vmatmul.bf16.gmra.mxu0 %v3505
      %v3817 = vpop.f32.mrf.mxu0
      %v3818 = vadd.f32 %v3309, %v3817
      %v3819 = vpop.f32.mrf.mxu0
      %v3820 = vadd.f32 %v3309, %v3819
      %3821 = vmatmul.bf16.gmra.mxu0 %v3508
      %v3822 = vpop.f32.mrf.mxu0
      %v3823 = vadd.f32 %v3309, %v3822
      %v3824 = vpop.f32.mrf.mxu0
      %v3825 = vadd.f32 %v3309, %v3824
      %3826 = vmatmul.bf16.gmra.mxu0 %v3511
      %v3827 = vpop.f32.mrf.mxu0
      %v3828 = vadd.f32 %v3309, %v3827
      %v3829 = vpop.f32.mrf.mxu0
      %v3830 = vadd.f32 %v3309, %v3829
      %3831 = vmatmul.bf16.gmra.mxu0 %v3514
      %v3832 = vpop.f32.mrf.mxu0
      %v3833 = vadd.f32 %v3309, %v3832
      %v3834 = vpop.f32.mrf.mxu0
      %v3835 = vadd.f32 %v3309, %v3834
      %3836 = vmatmul.bf16.gmra.mxu0 %v3517
      %v3837 = vpop.f32.mrf.mxu0
      %v3838 = vadd.f32 %v3309, %v3837
      %v3839 = vpop.f32.mrf.mxu0
      %v3840 = vadd.f32 %v3309, %v3839
      %3841 = vmatmul.bf16.gmra.mxu0 %v3520
      %v3842 = vpop.f32.mrf.mxu0
      %v3843 = vadd.f32 %v3309, %v3842
      %v3844 = vpop.f32.mrf.mxu0
      %v3845 = vadd.f32 %v3309, %v3844
      %3846 = vmatmul.bf16.gmra.mxu0 %v3523
      %v3847 = vpop.f32.mrf.mxu0
      %v3848 = vadd.f32 %v3309, %v3847
      %v3849 = vpop.f32.mrf.mxu0
      %v3850 = vadd.f32 %v3309, %v3849
      %3851 = vmatmul.bf16.gmra.mxu0 %v3526
      %v3852 = vpop.f32.mrf.mxu0
      %v3853 = vadd.f32 %v3309, %v3852
      %v3854 = vpop.f32.mrf.mxu0
      %v3855 = vadd.f32 %v3309, %v3854
      %3856 = vdwg.mxu0
      %v3857 = vmax.f32 %v3538, 0.0
      %v3858 = vmax.f32 %v3540, 0.0
      %v3859 = vmax.f32 %v3543, 0.0
      %v3860 = vmax.f32 %v3545, 0.0
      %v3861 = vmax.f32 %v3548, 0.0
      %v3862 = vmax.f32 %v3550, 0.0
      %v3863 = vmax.f32 %v3553, 0.0
      %v3864 = vmax.f32 %v3555, 0.0
      %v3865 = vmax.f32 %v3558, 0.0
      %v3866 = vmax.f32 %v3560, 0.0
      %v3867 = vmax.f32 %v3563, 0.0
      %v3868 = vmax.f32 %v3565, 0.0
      %v3869 = vmax.f32 %v3568, 0.0
      %v3870 = vmax.f32 %v3570, 0.0
      %v3871 = vmax.f32 %v3573, 0.0
      %v3872 = vmax.f32 %v3575, 0.0
      %v3873 = vmax.f32 %v3578, 0.0
      %v3874 = vmax.f32 %v3580, 0.0
      %v3875 = vmax.f32 %v3583, 0.0
      %v3876 = vmax.f32 %v3585, 0.0
      %v3877 = vmax.f32 %v3588, 0.0
      %v3878 = vmax.f32 %v3590, 0.0
      %v3879 = vmax.f32 %v3593, 0.0
      %v3880 = vmax.f32 %v3595, 0.0
      %v3881 = vmax.f32 %v3598, 0.0
      %v3882 = vmax.f32 %v3600, 0.0
      %v3883 = vmax.f32 %v3603, 0.0
      %v3884 = vmax.f32 %v3605, 0.0
      %v3885 = vmax.f32 %v3608, 0.0
      %v3886 = vmax.f32 %v3610, 0.0
      %v3887 = vmax.f32 %v3613, 0.0
      %v3888 = vmax.f32 %v3615, 0.0
      %v3889 = vmax.f32 %v3618, 0.0
      %v3890 = vmax.f32 %v3620, 0.0
      %v3891 = vmax.f32 %v3623, 0.0
      %v3892 = vmax.f32 %v3625, 0.0
      %v3893 = vmax.f32 %v3628, 0.0
      %v3894 = vmax.f32 %v3630, 0.0
      %v3895 = vmax.f32 %v3633, 0.0
      %v3896 = vmax.f32 %v3635, 0.0
      %v3897 = vmax.f32 %v3638, 0.0
      %v3898 = vmax.f32 %v3640, 0.0
      %v3899 = vmax.f32 %v3643, 0.0
      %v3900 = vmax.f32 %v3645, 0.0
      %v3901 = vmax.f32 %v3648, 0.0
      %v3902 = vmax.f32 %v3650, 0.0
      %v3903 = vmax.f32 %v3653, 0.0
      %v3904 = vmax.f32 %v3655, 0.0
      %v3905 = vmax.f32 %v3658, 0.0
      %v3906 = vmax.f32 %v3660, 0.0
      %v3907 = vmax.f32 %v3663, 0.0
      %v3908 = vmax.f32 %v3665, 0.0
      %v3909 = vmax.f32 %v3668, 0.0
      %v3910 = vmax.f32 %v3670, 0.0
      %v3911 = vmax.f32 %v3673, 0.0
      %v3912 = vmax.f32 %v3675, 0.0
      %v3913 = vmax.f32 %v3678, 0.0
      %v3914 = vmax.f32 %v3680, 0.0
      %v3915 = vmax.f32 %v3683, 0.0
      %v3916 = vmax.f32 %v3685, 0.0
      %v3917 = vmax.f32 %v3688, 0.0
      %v3918 = vmax.f32 %v3690, 0.0
      %v3919 = vmax.f32 %v3693, 0.0
      %v3920 = vmax.f32 %v3695, 0.0
      %v3921 = vmax.f32 %v3698, 0.0
      %v3922 = vmax.f32 %v3700, 0.0
      %v3923 = vmax.f32 %v3703, 0.0
      %v3924 = vmax.f32 %v3705, 0.0
      %v3925 = vmax.f32 %v3708, 0.0
      %v3926 = vmax.f32 %v3710, 0.0
      %v3927 = vmax.f32 %v3713, 0.0
      %v3928 = vmax.f32 %v3715, 0.0
      %v3929 = vmax.f32 %v3718, 0.0
      %v3930 = vmax.f32 %v3720, 0.0
      %v3931 = vmax.f32 %v3723, 0.0
      %v3932 = vmax.f32 %v3725, 0.0
      %v3933 = vmax.f32 %v3728, 0.0
      %v3934 = vmax.f32 %v3730, 0.0
      %v3935 = vmax.f32 %v3733, 0.0
      %v3936 = vmax.f32 %v3735, 0.0
      %v3937 = vmax.f32 %v3738, 0.0
      %v3938 = vmax.f32 %v3740, 0.0
      %v3939 = vmax.f32 %v3743, 0.0
      %v3940 = vmax.f32 %v3745, 0.0
      %v3941 = vmax.f32 %v3748, 0.0
      %v3942 = vmax.f32 %v3750, 0.0
      %v3943 = vmax.f32 %v3753, 0.0
      %v3944 = vmax.f32 %v3755, 0.0
      %v3945 = vmax.f32 %v3758, 0.0
      %v3946 = vmax.f32 %v3760, 0.0
      %v3947 = vmax.f32 %v3763, 0.0
      %v3948 = vmax.f32 %v3765, 0.0
      %v3949 = vmax.f32 %v3768, 0.0
      %v3950 = vmax.f32 %v3770, 0.0
      %v3951 = vmax.f32 %v3773, 0.0
      %v3952 = vmax.f32 %v3775, 0.0
      %v3953 = vmax.f32 %v3778, 0.0
      %v3954 = vmax.f32 %v3780, 0.0
      %v3955 = vmax.f32 %v3783, 0.0
      %v3956 = vmax.f32 %v3785, 0.0
      %v3957 = vmax.f32 %v3788, 0.0
      %v3958 = vmax.f32 %v3790, 0.0
      %v3959 = vmax.f32 %v3793, 0.0
      %v3960 = vmax.f32 %v3795, 0.0
      %v3961 = vmax.f32 %v3798, 0.0
      %v3962 = vmax.f32 %v3800, 0.0
      %v3963 = vmax.f32 %v3803, 0.0
      %v3964 = vmax.f32 %v3805, 0.0
      %v3965 = vmax.f32 %v3808, 0.0
      %v3966 = vmax.f32 %v3810, 0.0
      %v3967 = vmax.f32 %v3813, 0.0
      %v3968 = vmax.f32 %v3815, 0.0
      %v3969 = vmax.f32 %v3818, 0.0
      %v3970 = vmax.f32 %v3820, 0.0
      %v3971 = vmax.f32 %v3823, 0.0
      %v3972 = vmax.f32 %v3825, 0.0
      %v3973 = vmax.f32 %v3828, 0.0
      %v3974 = vmax.f32 %v3830, 0.0
      %v3975 = vmax.f32 %v3833, 0.0
      %v3976 = vmax.f32 %v3835, 0.0
      %v3977 = vmax.f32 %v3838, 0.0
      %v3978 = vmax.f32 %v3840, 0.0
      %v3979 = vmax.f32 %v3843, 0.0
      %v3980 = vmax.f32 %v3845, 0.0
      %v3981 = vmax.f32 %v3848, 0.0
      %v3982 = vmax.f32 %v3850, 0.0
      %v3983 = vmax.f32 %v3853, 0.0
      %v3984 = vmax.f32 %v3855, 0.0
      %v3985 = vld [vmem:[%s10] sm:$0x1]
      %v3986 = vpack.c.bf16 %v3858, %v3857
      %v3987 = vpack.c.bf16 %v3860, %v3859
      %v3988 = vpack.c.bf16 %v3862, %v3861
      %v3989 = vpack.c.bf16 %v3864, %v3863
      %v3990 = vpack.c.bf16 %v3866, %v3865
      %v3991 = vpack.c.bf16 %v3868, %v3867
      %v3992 = vpack.c.bf16 %v3870, %v3869
      %v3993 = vpack.c.bf16 %v3872, %v3871
      %v3994 = vpack.c.bf16 %v3874, %v3873
      %v3995 = vpack.c.bf16 %v3876, %v3875
      %v3996 = vpack.c.bf16 %v3878, %v3877
      %v3997 = vpack.c.bf16 %v3880, %v3879
      %v3998 = vpack.c.bf16 %v3882, %v3881
      %v3999 = vpack.c.bf16 %v3884, %v3883
      %v4000 = vpack.c.bf16 %v3886, %v3885
      %v4001 = vpack.c.bf16 %v3888, %v3887
      %v4002 = vpack.c.bf16 %v3890, %v3889
      %v4003 = vpack.c.bf16 %v3892, %v3891
      %v4004 = vpack.c.bf16 %v3894, %v3893
      %v4005 = vpack.c.bf16 %v3896, %v3895
      %v4006 = vpack.c.bf16 %v3898, %v3897
      %v4007 = vpack.c.bf16 %v3900, %v3899
      %v4008 = vpack.c.bf16 %v3902, %v3901
      %v4009 = vpack.c.bf16 %v3904, %v3903
      %v4010 = vpack.c.bf16 %v3906, %v3905
      %v4011 = vpack.c.bf16 %v3908, %v3907
      %v4012 = vpack.c.bf16 %v3910, %v3909
      %v4013 = vpack.c.bf16 %v3912, %v3911
      %v4014 = vpack.c.bf16 %v3914, %v3913
      %v4015 = vpack.c.bf16 %v3916, %v3915
      %v4016 = vpack.c.bf16 %v3918, %v3917
      %v4017 = vpack.c.bf16 %v3920, %v3919
      %v4018 = vpack.c.bf16 %v3922, %v3921
      %v4019 = vpack.c.bf16 %v3924, %v3923
      %v4020 = vpack.c.bf16 %v3926, %v3925
      %v4021 = vpack.c.bf16 %v3928, %v3927
      %v4022 = vpack.c.bf16 %v3930, %v3929
      %v4023 = vpack.c.bf16 %v3932, %v3931
      %v4024 = vpack.c.bf16 %v3934, %v3933
      %v4025 = vpack.c.bf16 %v3936, %v3935
      %v4026 = vpack.c.bf16 %v3938, %v3937
      %v4027 = vpack.c.bf16 %v3940, %v3939
      %v4028 = vpack.c.bf16 %v3942, %v3941
      %v4029 = vpack.c.bf16 %v3944, %v3943
      %v4030 = vpack.c.bf16 %v3946, %v3945
      %v4031 = vpack.c.bf16 %v3948, %v3947
      %v4032 = vpack.c.bf16 %v3950, %v3949
      %v4033 = vpack.c.bf16 %v3952, %v3951
      %v4034 = vpack.c.bf16 %v3954, %v3953
      %v4035 = vpack.c.bf16 %v3956, %v3955
      %v4036 = vpack.c.bf16 %v3958, %v3957
      %v4037 = vpack.c.bf16 %v3960, %v3959
      %v4038 = vpack.c.bf16 %v3962, %v3961
      %v4039 = vpack.c.bf16 %v3964, %v3963
      %v4040 = vpack.c.bf16 %v3966, %v3965
      %v4041 = vpack.c.bf16 %v3968, %v3967
      %v4042 = vpack.c.bf16 %v3970, %v3969
      %v4043 = vpack.c.bf16 %v3972, %v3971
      %v4044 = vpack.c.bf16 %v3974, %v3973
      %v4045 = vpack.c.bf16 %v3976, %v3975
      %v4046 = vpack.c.bf16 %v3978, %v3977
      %v4047 = vpack.c.bf16 %v3980, %v3979
      %v4048 = vpack.c.bf16 %v3982, %v3981
      %v4049 = vpack.c.bf16 %v3984, %v3983
      %v4050 = vld [vmem:[#allocation2] sm:$0x1]
      %4052 = vset.pattern.permute.xlu0 0
      %4053 = vperm.xlu0 %4052, %v4050
      %v4054 = vpop.permute.xlu0 %4053
      %v4056 = vperm.slane %v4054, 0
      %vm4057 = vcmask 261120
      %v4059 = vsel %vm4057, %v3985, 0
      %v4062 = vsel %vm4057, %v3986, 0
      %v4065 = vsel %vm4057, %v3987, 0
      %v4068 = vsel %vm4057, %v3988, 0
      %v4071 = vsel %vm4057, %v3989, 0
      %v4074 = vsel %vm4057, %v3990, 0
      %v4077 = vsel %vm4057, %v3991, 0
      %v4080 = vsel %vm4057, %v3992, 0
      %v4083 = vsel %vm4057, %v3993, 0
      %v4086 = vsel %vm4057, %v3994, 0
      %v4089 = vsel %vm4057, %v3995, 0
      %v4092 = vsel %vm4057, %v3996, 0
      %v4095 = vsel %vm4057, %v3997, 0
      %v4098 = vsel %vm4057, %v3998, 0
      %v4101 = vsel %vm4057, %v3999, 0
      %v4104 = vsel %vm4057, %v4000, 0
      %v4107 = vsel %vm4057, %v4001, 0
      %v4110 = vsel %vm4057, %v4002, 0
      %v4113 = vsel %vm4057, %v4003, 0
      %v4116 = vsel %vm4057, %v4004, 0
      %v4119 = vsel %vm4057, %v4005, 0
      %v4122 = vsel %vm4057, %v4006, 0
      %v4125 = vsel %vm4057, %v4007, 0
      %v4128 = vsel %vm4057, %v4008, 0
      %v4131 = vsel %vm4057, %v4009, 0
      %v4134 = vsel %vm4057, %v4010, 0
      %v4137 = vsel %vm4057, %v4011, 0
      %v4140 = vsel %vm4057, %v4012, 0
      %v4143 = vsel %vm4057, %v4013, 0
      %v4146 = vsel %vm4057, %v4014, 0
      %v4149 = vsel %vm4057, %v4015, 0
      %v4152 = vsel %vm4057, %v4016, 0
      %v4155 = vsel %vm4057, %v4017, 0
      %v4158 = vsel %vm4057, %v4018, 0
      %v4161 = vsel %vm4057, %v4019, 0
      %v4164 = vsel %vm4057, %v4020, 0
      %v4167 = vsel %vm4057, %v4021, 0
      %v4170 = vsel %vm4057, %v4022, 0
      %v4173 = vsel %vm4057, %v4023, 0
      %v4176 = vsel %vm4057, %v4024, 0
      %v4179 = vsel %vm4057, %v4025, 0
      %v4182 = vsel %vm4057, %v4026, 0
      %v4185 = vsel %vm4057, %v4027, 0
      %v4188 = vsel %vm4057, %v4028, 0
      %v4191 = vsel %vm4057, %v4029, 0
      %v4194 = vsel %vm4057, %v4030, 0
      %v4197 = vsel %vm4057, %v4031, 0
      %v4200 = vsel %vm4057, %v4032, 0
      %v4203 = vsel %vm4057, %v4033, 0
      %v4206 = vsel %vm4057, %v4034, 0
      %v4209 = vsel %vm4057, %v4035, 0
      %v4212 = vsel %vm4057, %v4036, 0
      %v4215 = vsel %vm4057, %v4037, 0
      %v4218 = vsel %vm4057, %v4038, 0
      %v4221 = vsel %vm4057, %v4039, 0
      %v4224 = vsel %vm4057, %v4040, 0
      %v4227 = vsel %vm4057, %v4041, 0
      %v4230 = vsel %vm4057, %v4042, 0
      %v4233 = vsel %vm4057, %v4043, 0
      %v4236 = vsel %vm4057, %v4044, 0
      %v4239 = vsel %vm4057, %v4045, 0
      %v4242 = vsel %vm4057, %v4046, 0
      %v4245 = vsel %vm4057, %v4047, 0
      %v4248 = vsel %vm4057, %v4048, 0
      %v4251 = vsel %vm4057, %v4049, 0
      %4253 = vmatpush.bf16.xpose.msra.mxu0 %v4083
      %4254 = vmatpush.bf16.xpose.msra.mxu0 %v4080
      %4255 = vmatpush.bf16.xpose.msra.mxu0 %v4077
      %4256 = vmatpush.bf16.xpose.msra.mxu0 %v4074
      %4257 = vmatpush.bf16.xpose.msra.mxu0 %v4071
      %4258 = vmatpush.bf16.xpose.msra.mxu0 %v4068
      %4259 = vmatpush.bf16.xpose.msra.mxu0 %v4065
      %4260 = vmatpush.bf16.xpose.msra.mxu0 %v4062
      %4261 = vmatmul.bf16.gmra.mxu0 %v4059
      %v4262 = vpop.f32.mrf.mxu0
      %v4263 = vadd.f32 %v4056, %v4262
      %v4264 = vpop.f32.mrf.mxu0
      %4265 = vdwg.mxu0
      %4266 = vmatpush.bf16.xpose.msra.mxu0 %v4107
      %4267 = vmatpush.bf16.xpose.msra.mxu0 %v4104
      %4268 = vmatpush.bf16.xpose.msra.mxu0 %v4101
      %4269 = vmatpush.bf16.xpose.msra.mxu0 %v4098
      %4270 = vmatpush.bf16.xpose.msra.mxu0 %v4095
      %4271 = vmatpush.bf16.xpose.msra.mxu0 %v4092
      %4272 = vmatpush.bf16.xpose.msra.mxu0 %v4089
      %4273 = vmatpush.bf16.xpose.msra.mxu0 %v4086
      %4274 = vmatmul.bf16.gmra.mxu0 %v4059
      %v4275 = vpop.f32.mrf.mxu0
      %v4276 = vadd.f32 %v4056, %v4275
      %v4277 = vpop.f32.mrf.mxu0
      %4278 = vdwg.mxu0
      %4279 = vmatpush.bf16.xpose.msra.mxu0 %v4131
      %4280 = vmatpush.bf16.xpose.msra.mxu0 %v4128
      %4281 = vmatpush.bf16.xpose.msra.mxu0 %v4125
      %4282 = vmatpush.bf16.xpose.msra.mxu0 %v4122
      %4283 = vmatpush.bf16.xpose.msra.mxu0 %v4119
      %4284 = vmatpush.bf16.xpose.msra.mxu0 %v4116
      %4285 = vmatpush.bf16.xpose.msra.mxu0 %v4113
      %4286 = vmatpush.bf16.xpose.msra.mxu0 %v4110
      %4287 = vmatmul.bf16.gmra.mxu0 %v4059
      %v4288 = vpop.f32.mrf.mxu0
      %v4289 = vadd.f32 %v4056, %v4288
      %v4290 = vpop.f32.mrf.mxu0
      %4291 = vdwg.mxu0
      %4292 = vmatpush.bf16.xpose.msra.mxu0 %v4155
      %4293 = vmatpush.bf16.xpose.msra.mxu0 %v4152
      %4294 = vmatpush.bf16.xpose.msra.mxu0 %v4149
      %4295 = vmatpush.bf16.xpose.msra.mxu0 %v4146
      %4296 = vmatpush.bf16.xpose.msra.mxu0 %v4143
      %4297 = vmatpush.bf16.xpose.msra.mxu0 %v4140
      %4298 = vmatpush.bf16.xpose.msra.mxu0 %v4137
      %4299 = vmatpush.bf16.xpose.msra.mxu0 %v4134
      %4300 = vmatmul.bf16.gmra.mxu0 %v4059
      %v4301 = vpop.f32.mrf.mxu0
      %v4302 = vadd.f32 %v4056, %v4301
      %v4303 = vpop.f32.mrf.mxu0
      %4304 = vdwg.mxu0
      %4305 = vmatpush.bf16.xpose.msra.mxu0 %v4179
      %4306 = vmatpush.bf16.xpose.msra.mxu0 %v4176
      %4307 = vmatpush.bf16.xpose.msra.mxu0 %v4173
      %4308 = vmatpush.bf16.xpose.msra.mxu0 %v4170
      %4309 = vmatpush.bf16.xpose.msra.mxu0 %v4167
      %4310 = vmatpush.bf16.xpose.msra.mxu0 %v4164
      %4311 = vmatpush.bf16.xpose.msra.mxu0 %v4161
      %4312 = vmatpush.bf16.xpose.msra.mxu0 %v4158
      %4313 = vmatmul.bf16.gmra.mxu0 %v4059
      %v4314 = vpop.f32.mrf.mxu0
      %v4315 = vadd.f32 %v4056, %v4314
      %v4316 = vpop.f32.mrf.mxu0
      %4317 = vdwg.mxu0
      %4318 = vmatpush.bf16.xpose.msra.mxu0 %v4203
      %4319 = vmatpush.bf16.xpose.msra.mxu0 %v4200
      %4320 = vmatpush.bf16.xpose.msra.mxu0 %v4197
      %4321 = vmatpush.bf16.xpose.msra.mxu0 %v4194
      %4322 = vmatpush.bf16.xpose.msra.mxu0 %v4191
      %4323 = vmatpush.bf16.xpose.msra.mxu0 %v4188
      %4324 = vmatpush.bf16.xpose.msra.mxu0 %v4185
      %4325 = vmatpush.bf16.xpose.msra.mxu0 %v4182
      %4326 = vmatmul.bf16.gmra.mxu0 %v4059
      %v4327 = vpop.f32.mrf.mxu0
      %v4328 = vadd.f32 %v4056, %v4327
      %v4329 = vpop.f32.mrf.mxu0
      %4330 = vdwg.mxu0
      %4331 = vmatpush.bf16.xpose.msra.mxu0 %v4227
      %4332 = vmatpush.bf16.xpose.msra.mxu0 %v4224
      %4333 = vmatpush.bf16.xpose.msra.mxu0 %v4221
      %4334 = vmatpush.bf16.xpose.msra.mxu0 %v4218
      %4335 = vmatpush.bf16.xpose.msra.mxu0 %v4215
      %4336 = vmatpush.bf16.xpose.msra.mxu0 %v4212
      %4337 = vmatpush.bf16.xpose.msra.mxu0 %v4209
      %4338 = vmatpush.bf16.xpose.msra.mxu0 %v4206
      %4339 = vmatmul.bf16.gmra.mxu0 %v4059
      %v4340 = vpop.f32.mrf.mxu0
      %v4341 = vadd.f32 %v4056, %v4340
      %v4342 = vpop.f32.mrf.mxu0
      %4343 = vdwg.mxu0
      %4344 = vmatpush.bf16.xpose.msra.mxu0 %v4251
      %4345 = vmatpush.bf16.xpose.msra.mxu0 %v4248
      %4346 = vmatpush.bf16.xpose.msra.mxu0 %v4245
      %4347 = vmatpush.bf16.xpose.msra.mxu0 %v4242
      %4348 = vmatpush.bf16.xpose.msra.mxu0 %v4239
      %4349 = vmatpush.bf16.xpose.msra.mxu0 %v4236
      %4350 = vmatpush.bf16.xpose.msra.mxu0 %v4233
      %4351 = vmatpush.bf16.xpose.msra.mxu0 %v4230
      %4352 = vmatmul.bf16.gmra.mxu0 %v4059
      %v4353 = vpop.f32.mrf.mxu0
      %v4354 = vadd.f32 %v4056, %v4353
      %v4355 = vpop.f32.mrf.mxu0
      %4356 = vdwg.mxu0
      %v4365 = vrot.slane %v4276, 7
      %v4366 = vrot.slane %v4289, 6
      %v4367 = vrot.slane %v4302, 5
      %v4368 = vrot.slane %v4315, 4
      %v4369 = vrot.slane %v4328, 3
      %v4370 = vrot.slane %v4341, 2
      %v4371 = vrot.slane %v4354, 1
      %v4372 = vsel %vm882, %v4263, %v4365
      %v4373 = vsel %vm891, %v4366, %v4367
      %vm4374 = vcmask 1041408
      %v4375 = vsel %vm4374, %v4372, %v4373
      %vm4376 = vcmask 1044484
      %v4377 = vsel %vm4376, %v4368, %v4369
      %vm4378 = vcmask 1046534
      %v4379 = vsel %vm4378, %v4370, %v4371
      %vm4380 = vcmask 1045508
      %v4381 = vsel %vm4380, %v4377, %v4379
      %vm4382 = vcmask 1043456
      %v4383 = vsel %vm4382, %v4375, %v4381
      %4385 = vst [vmem:[%s502] sm:$0xff] %v4383
      %v4386 = vld [vmem:[%s490] sm:$0xff]
      %v4387 = vmax.f32 %v4263, 0.0
      %v4388 = vmax.f32 %v4276, 0.0
      %v4389 = vmax.f32 %v4289, 0.0
      %v4390 = vmax.f32 %v4302, 0.0
      %v4391 = vmax.f32 %v4315, 0.0
      %v4392 = vmax.f32 %v4328, 0.0
      %v4393 = vmax.f32 %v4341, 0.0
      %v4394 = vmax.f32 %v4354, 0.0
      %v4396 = vperm.slane %v4386, 0
      %v4397 = vperm.slane %v4386, 1
      %v4398 = vperm.slane %v4386, 2
      %v4399 = vperm.slane %v4386, 3
      %v4400 = vperm.slane %v4386, 4
      %v4401 = vperm.slane %v4386, 5
      %v4402 = vperm.slane %v4386, 6
      %v4403 = vperm.slane %v4386, 7
      %v4412 = vmul.f32 %v4263, %v4396
      %v4413 = vmul.f32 %v4276, %v4397
      %v4414 = vmul.f32 %v4289, %v4398
      %v4415 = vmul.f32 %v4302, %v4399
      %v4416 = vmul.f32 %v4315, %v4400
      %v4417 = vmul.f32 %v4328, %v4401
      %v4418 = vmul.f32 %v4341, %v4402
      %v4419 = vmul.f32 %v4354, %v4403
      %v4420 = vsub.f32 %v4387, %v4412
      %v4421 = vsub.f32 %v4388, %v4413
      %v4422 = vsub.f32 %v4389, %v4414
      %v4423 = vsub.f32 %v4390, %v4415
      %v4424 = vsub.f32 %v4391, %v4416
      %v4425 = vsub.f32 %v4392, %v4417
      %v4426 = vsub.f32 %v4393, %v4418
      %v4427 = vsub.f32 %v4394, %v4419
      %v4428 = vand.u32 2147483647, %v4263
      %v4429 = vand.u32 2147483647, %v4276
      %v4430 = vand.u32 2147483647, %v4289
      %v4431 = vand.u32 2147483647, %v4302
      %v4432 = vand.u32 2147483647, %v4315
      %v4433 = vand.u32 2147483647, %v4328
      %v4434 = vand.u32 2147483647, %v4341
      %v4435 = vand.u32 2147483647, %v4354
      %v4436 = vsub.f32 0.0, %v4428
      %v4437 = vsub.f32 0.0, %v4429
      %v4438 = vsub.f32 0.0, %v4430
      %v4439 = vsub.f32 0.0, %v4431
      %v4440 = vsub.f32 0.0, %v4432
      %v4441 = vsub.f32 0.0, %v4433
      %v4442 = vsub.f32 0.0, %v4434
      %v4443 = vsub.f32 0.0, %v4435
      %v4444 = vmul.f32 %v4436, 1.442695
      %v4445 = vpow.pop %v4444
      %v4446 = vmul.f32 %v4437, 1.442695
      %v4447 = vpow.pop %v4446
      %v4448 = vmul.f32 %v4438, 1.442695
      %v4449 = vpow.pop %v4448
      %v4450 = vmul.f32 %v4439, 1.442695
      %v4451 = vpow.pop %v4450
      %v4452 = vmul.f32 %v4440, 1.442695
      %v4453 = vpow.pop %v4452
      %v4454 = vmul.f32 %v4441, 1.442695
      %v4455 = vpow.pop %v4454
      %v4456 = vmul.f32 %v4442, 1.442695
      %v4457 = vpow.pop %v4456
      %v4458 = vmul.f32 %v4443, 1.442695
      %v4459 = vpow.pop %v4458
      %v4460 = vadd.f32 %v4445, 1.0
      %v4461 = vlog2.pop %v4460
      %v4462 = vmul.f32 %v4461, 0.6931472
      %v4463 = vmul.f32 -0.5, %v4445
      %v4464 = vadd.f32 %v4463, 1.0
      %v4465 = vmul.f32 %v4464, %v4445
      %v4466 = vand.u32 2147483647, %v4445
      %vm4467 = vcmp.lt.f32.partialorder %v4466, 0.0004427343
      %v4468 = vsel %vm4467, %v4465, %v4462
      %v4469 = vadd.f32 %v4447, 1.0
      %v4470 = vlog2.pop %v4469
      %v4471 = vmul.f32 %v4470, 0.6931472
      %v4472 = vmul.f32 -0.5, %v4447
      %v4473 = vadd.f32 %v4472, 1.0
      %v4474 = vmul.f32 %v4473, %v4447
      %v4475 = vand.u32 2147483647, %v4447
      %vm4476 = vcmp.lt.f32.partialorder %v4475, 0.0004427343
      %v4477 = vsel %vm4476, %v4474, %v4471
      %v4478 = vadd.f32 %v4449, 1.0
      %v4479 = vlog2.pop %v4478
      %v4480 = vmul.f32 %v4479, 0.6931472
      %v4481 = vmul.f32 -0.5, %v4449
      %v4482 = vadd.f32 %v4481, 1.0
      %v4483 = vmul.f32 %v4482, %v4449
      %v4484 = vand.u32 2147483647, %v4449
      %vm4485 = vcmp.lt.f32.partialorder %v4484, 0.0004427343
      %v4486 = vsel %vm4485, %v4483, %v4480
      %v4487 = vadd.f32 %v4451, 1.0
      %v4488 = vlog2.pop %v4487
      %v4489 = vmul.f32 %v4488, 0.6931472
      %v4490 = vmul.f32 -0.5, %v4451
      %v4491 = vadd.f32 %v4490, 1.0
      %v4492 = vmul.f32 %v4491, %v4451
      %v4493 = vand.u32 2147483647, %v4451
      %vm4494 = vcmp.lt.f32.partialorder %v4493, 0.0004427343
      %v4495 = vsel %vm4494, %v4492, %v4489
      %v4496 = vadd.f32 %v4453, 1.0
      %v4497 = vlog2.pop %v4496
      %v4498 = vmul.f32 %v4497, 0.6931472
      %v4499 = vmul.f32 -0.5, %v4453
      %v4500 = vadd.f32 %v4499, 1.0
      %v4501 = vmul.f32 %v4500, %v4453
      %v4502 = vand.u32 2147483647, %v4453
      %vm4503 = vcmp.lt.f32.partialorder %v4502, 0.0004427343
      %v4504 = vsel %vm4503, %v4501, %v4498
      %v4505 = vadd.f32 %v4455, 1.0
      %v4506 = vlog2.pop %v4505
      %v4507 = vmul.f32 %v4506, 0.6931472
      %v4508 = vmul.f32 -0.5, %v4455
      %v4509 = vadd.f32 %v4508, 1.0
      %v4510 = vmul.f32 %v4509, %v4455
      %v4511 = vand.u32 2147483647, %v4455
      %vm4512 = vcmp.lt.f32.partialorder %v4511, 0.0004427343
      %v4513 = vsel %vm4512, %v4510, %v4507
      %v4514 = vadd.f32 %v4457, 1.0
      %v4515 = vlog2.pop %v4514
      %v4516 = vmul.f32 %v4515, 0.6931472
      %v4517 = vmul.f32 -0.5, %v4457
      %v4518 = vadd.f32 %v4517, 1.0
      %v4519 = vmul.f32 %v4518, %v4457
      %v4520 = vand.u32 2147483647, %v4457
      %vm4521 = vcmp.lt.f32.partialorder %v4520, 0.0004427343
      %v4522 = vsel %vm4521, %v4519, %v4516
      %v4523 = vadd.f32 %v4459, 1.0
      %v4524 = vlog2.pop %v4523
      %v4525 = vmul.f32 %v4524, 0.6931472
      %v4526 = vmul.f32 -0.5, %v4459
      %v4527 = vadd.f32 %v4526, 1.0
      %v4528 = vmul.f32 %v4527, %v4459
      %v4529 = vand.u32 2147483647, %v4459
      %vm4530 = vcmp.lt.f32.partialorder %v4529, 0.0004427343
      %v4531 = vsel %vm4530, %v4528, %v4525
      %v4532 = vadd.f32 %v4420, %v4468
      %v4533 = vadd.f32 %v4421, %v4477
      %v4534 = vadd.f32 %v4422, %v4486
      %v4535 = vadd.f32 %v4423, %v4495
      %v4536 = vadd.f32 %v4424, %v4504
      %v4537 = vadd.f32 %v4425, %v4513
      %v4538 = vadd.f32 %v4426, %v4522
      %v4539 = vadd.f32 %v4427, %v4531
      %v4540 = vld [vmem:[%s494] sm:$0xff]
      %v4542 = vperm.slane %v4540, 0
      %v4543 = vperm.slane %v4540, 1
      %v4544 = vperm.slane %v4540, 2
      %v4545 = vperm.slane %v4540, 3
      %v4546 = vperm.slane %v4540, 4
      %v4547 = vperm.slane %v4540, 5
      %v4548 = vperm.slane %v4540, 6
      %v4549 = vperm.slane %v4540, 7
      %v4558 = vmul.f32 %v4532, %v4542
      %v4559 = vmul.f32 %v4533, %v4543
      %v4560 = vmul.f32 %v4534, %v4544
      %v4561 = vmul.f32 %v4535, %v4545
      %v4562 = vmul.f32 %v4536, %v4546
      %v4563 = vmul.f32 %v4537, %v4547
      %v4564 = vmul.f32 %v4538, %v4548
      %v4565 = vmul.f32 %v4539, %v4549
      %v4566 = vld [vmem:[%s498] sm:$0xff]
      %v4568 = vperm.slane %v4566, 0
      %v4569 = vperm.slane %v4566, 1
      %v4570 = vperm.slane %v4566, 2
      %v4571 = vperm.slane %v4566, 3
      %v4572 = vperm.slane %v4566, 4
      %v4573 = vperm.slane %v4566, 5
      %v4574 = vperm.slane %v4566, 6
      %v4575 = vperm.slane %v4566, 7
      %v4584 = vmul.f32 %v4558, %v4568
      %v4585 = vmul.f32 %v4559, %v4569
      %v4586 = vmul.f32 %v4560, %v4570
      %v4587 = vmul.f32 %v4561, %v4571
      %v4588 = vmul.f32 %v4562, %v4572
      %v4589 = vmul.f32 %v4563, %v4573
      %v4590 = vmul.f32 %v4564, %v4574
      %v4591 = vmul.f32 %v4565, %v4575
      %v4592 = vsel %vm882, %v4584, 0.0
      %v4593 = vsel %vm882, %v4585, 0.0
      %v4594 = vadd.f32 %v4592, %v4593
      %v4595 = vsel %vm882, %v4586, 0.0
      %v4596 = vadd.f32 %v4594, %v4595
      %v4597 = vsel %vm882, %v4587, 0.0
      %v4598 = vadd.f32 %v4596, %v4597
      %v4599 = vsel %vm882, %v4588, 0.0
      %v4600 = vadd.f32 %v4598, %v4599
      %v4601 = vsel %vm882, %v4589, 0.0
      %v4602 = vadd.f32 %v4600, %v4601
      %v4603 = vsel %vm882, %v4590, 0.0
      %v4604 = vadd.f32 %v4602, %v4603
      %v4605 = vsel %vm882, %v4591, 0.0
      %v4606 = vadd.f32 %v4604, %v4605
      %4607 = vadd.xlane.f32.xlu0 %v4606
      %v4608 = vpop.xlane.xlu0 %4607
      %v4609 = vrot.slane %v4608, 4
      %v4610 = vadd.f32 %v4608, %v4609
      %v4611 = vrot.slane %v4610, 2
      %v4612 = vadd.f32 %v4610, %v4611
      %v4613 = vrot.slane %v4612, 1
      %v4614 = vadd.f32 %v4612, %v4613
      %s4615 = vtos %v4614
      %v4616 = vsel %vm882, %v4568, 0.0
      %v4617 = vsel %vm882, %v4569, 0.0
      %v4618 = vadd.f32 %v4616, %v4617
      %v4619 = vsel %vm882, %v4570, 0.0
      %v4620 = vadd.f32 %v4618, %v4619
      %v4621 = vsel %vm882, %v4571, 0.0
      %v4622 = vadd.f32 %v4620, %v4621
      %v4623 = vsel %vm882, %v4572, 0.0
      %v4624 = vadd.f32 %v4622, %v4623
      %v4625 = vsel %vm882, %v4573, 0.0
      %v4626 = vadd.f32 %v4624, %v4625
      %v4627 = vsel %vm882, %v4574, 0.0
      %v4628 = vadd.f32 %v4626, %v4627
      %v4629 = vsel %vm882, %v4575, 0.0
      %v4630 = vadd.f32 %v4628, %v4629
      %4631 = vadd.xlane.f32.xlu0 %v4630
      %v4632 = vpop.xlane.xlu0 %4631
      %v4633 = vrot.slane %v4632, 4
      %v4634 = vadd.f32 %v4632, %v4633
      %v4635 = vrot.slane %v4634, 2
      %v4636 = vadd.f32 %v4634, %v4635
      %v4637 = vrot.slane %v4636, 1
      %v4638 = vadd.f32 %v4636, %v4637
      %s4639 = vtos %v4638
      %v4640 = vlaneseq
      %v4641 = vand.u32 %v4640, 127
      %vm4642 = vcmp.eq.s32.totalorder %v4641, 0
      %v4643 = vstv %s4615
      %v4644 = vsel %vm4642, %v4643, 0.0
      %vm4645 = vcmp.eq.s32.totalorder %v4641, 1
      %v4646 = vstv %s4639
      %v4647 = vsel %vm4645, %v4646, 0.0
      %v4648 = vadd.f32 %v4644, %v4647
      %4649 = vst [vmem:[%s505] sm:$0x1] %v4648
      %p4650 = scmp.lt.s32.totalorder %s27, 1
      %s4651 = scalar_select %p4650, %s27, 1
      %s4652 = smul.addr %s4651, 8
      %s4653 = scalar_lea.vmem %s12, %s4652
      %p4654 = scmp.lt.s32.totalorder %s27, 1
      %s4655 = scalar_select %p4654, %s27, 1
      %s4656 = scalar_lea.vmem %s13, %s4655
      // Predicated region
      $region69: #{head_edge_forward.1} parent=67 // pred_check
        %p4657 = pneg %p317
      $region70: #{head_edge_forward.1} parent=67 // pred_check_branch
        %4659 = sbr.rel (%p4657) target = $region72
      $region71: #{head_edge_forward.1} parent=67 // pred_region
        _
      $region72: #{head_edge_forward.1} parent=67 // pred_fallthru
        _
      // Predicated region
      $region73: #{head_edge_forward.1} parent=67 // pred_check
        %p4660 = pneg %p343
      $region74: #{head_edge_forward.1} parent=67 // pred_check_branch
        %4662 = sbr.rel (%p4660) target = $region76
      $region75: #{head_edge_forward.1} parent=67 // pred_region
        _
      $region76: #{head_edge_forward.1} parent=67 // pred_fallthru
        _
    $region68: #{head_edge_forward.1} parent=5 // pred_fallthru
      _
    %p4663 = scmp.le.s32.totalorder 2, %s22
    // Predicated region
    $region77: #{head_edge_forward.1} parent=5 // pred_check
      %p4664 = pneg %p4663
    $region78: #{head_edge_forward.1} parent=5 // pred_check_branch
      %4666 = sbr.rel (%p4664) target = $region80
    $region79: #{head_edge_forward.1} parent=5 // pred_region
      %s4667 = ssub.s32 %s22, 2
      // Predicated region
      $region81: #{head_edge_forward.1} parent=79 // pred_check
        %p4668 = pneg %p323
      $region82: #{head_edge_forward.1} parent=79 // pred_check_branch
        %4670 = sbr.rel (%p4668) target = $region84
      $region83: #{head_edge_forward.1} parent=79 // pred_region
        %p4671 = scmp.lt.s32.totalorder %s28, 1
        %s4672 = scalar_select %p4671, %s28, 1
        %s4673 = smul.addr %s4672, 8
        %s4674 = scalar_lea.vmem %s12, %s4673
      $region84: #{head_edge_forward.1} parent=79 // pred_fallthru
        _
      // Predicated region
      $region85: #{head_edge_forward.1} parent=79 // pred_check
        %p4675 = pneg %p349
      $region86: #{head_edge_forward.1} parent=79 // pred_check_branch
        %4677 = sbr.rel (%p4675) target = $region88
      $region87: #{head_edge_forward.1} parent=79 // pred_region
        %p4678 = scmp.lt.s32.totalorder %s28, 1
        %s4679 = scalar_select %p4678, %s28, 1
        %s4680 = scalar_lea.vmem %s13, %s4679
      $region88: #{head_edge_forward.1} parent=79 // pred_fallthru
        _
    $region80: #{head_edge_forward.1} parent=5 // pred_fallthru
      _
  $region6: #{head_edge_forward.1} parent=0 // loop_footer
    %s26 = sadd.s32 1, %s22
  $region7: #{head_edge_forward.1} parent=0 // loop_footer_branch
    %21 = sbr.rel target = $region3
  $region8: #{head_edge_forward.1} parent=0 // loop_exit
    _

</llo_original>
